<compile_context>
chip_gen: v7x
topology: tpu7x:2x2x1
jax: 0.10.0
libtpu: 0.0.40
codegen_flags: <defaults>
</compile_context>

<pallas_src>
import functools

import numpy as np
import jax
import jax.numpy as jnp
from jax import lax
from jax.experimental import pallas as pl
from jax.experimental.pallas import tpu as pltpu

# ---- KAN hyper-parameters (PyTorch defaults) ----------------------------------------
GRID_SIZE = 5
SPLINE_ORDER = 3
GRID_RANGE = (-1.0, 1.0)
NUM_BASES = GRID_SIZE + SPLINE_ORDER              # 8 basis functions per input feature
GRID_PTS = GRID_SIZE + 2 * SPLINE_ORDER + 1       # 12 knots
LN_EPS = 1e-5                                     # nn.LayerNorm default
PRELU_INIT = 0.25                                 # nn.PReLU default
_INV_SQRT2 = float(1.0 / np.sqrt(2.0))


def _grid_values():
    h = (GRID_RANGE[1] - GRID_RANGE[0]) / GRID_SIZE
    g = np.linspace(GRID_RANGE[0] - h * SPLINE_ORDER,
                    GRID_RANGE[1] + h * SPLINE_ORDER,
                    GRID_PTS, dtype=np.float32)
    return tuple(float(v) for v in g)


GRID_VALS = _grid_values()


# ---- in-kernel math helpers -----------------------------------------------------------
def _erf_f32(z):
    """Abramowitz & Stegun 7.1.26 polynomial, |err| <= 1.5e-7.
    Uses only abs / exp / mul / add / where -> VPU + EUP, guaranteed Mosaic lowering."""
    a1, a2, a3, a4, a5 = (0.254829592, -0.284496736, 1.421413741,
                          -1.453152027, 1.061405429)
    p = 0.3275911
    za = jnp.abs(z)
    t = 1.0 / (1.0 + p * za)
    poly = ((((a5 * t + a4) * t + a3) * t + a2) * t + a1) * t
    ya = 1.0 - poly * jnp.exp(-za * za)
    return jnp.where(z >= 0.0, ya, -ya)


def _gelu_exact(x):
    """Exact (erf-based) GELU, matching nn.GELU() defaults."""
    return 0.5 * x * (1.0 + _erf_f32(x * _INV_SQRT2))


def _bspline_basis(x, j):
    """B_{j,SPLINE_ORDER}(x) via a LOCAL Cox-de Boor recursion over knots j..j+order+1.

    Computing each final basis independently (instead of the shared 11-wide recursion)
    bounds the number of live (TILE_B, In) temporaries to ~5, independent of TILE_B.
    The knots are static Python floats, so all coefficients fold at compile time.
    """
    t = GRID_VALS
    b = [jnp.logical_and(x >= t[j + m], x < t[j + m + 1]).astype(jnp.float32)
         for m in range(SPLINE_ORDER + 1)]
    for k in range(1, SPLINE_ORDER + 1):
        nb = []
        for m in range(SPLINE_ORDER + 1 - k):
            i = j + m
            d1 = t[i + k] - t[i]
            d2 = t[i + k + 1] - t[i + 1]
            r1 = (1.0 / d1) if d1 != 0.0 else 0.0   # uniform grid -> never zero
            r2 = (1.0 / d2) if d2 != 0.0 else 0.0
            nb.append((x - t[i]) * r1 * b[m] + (t[i + k + 1] - x) * r2 * b[m + 1])
        b = nb
    return b[0]


# ---- Pallas kernel: the full KAN network for one batch tile ---------------------------
def kan_net_kernel(num_layers, layer_in_dims, x_ref, *args):
    """args layout:
         [w_packed_0, ln_w_0, ln_b_0, ..., w_packed_{L-1}, ln_w_{L-1}, ln_b_{L-1},
          prelu_smem(L,), out_ref, feat_scratch(TILE_B, MAX_FEAT) f32]
    Per layer:
        feat = [GELU(h) | B_0(h) | ... | B_7(h)]      (written to VMEM scratch)
        y    = feat @ W_packed                        (single fused MXU contraction)
        h    = PReLU(LayerNorm(y))                    (f32 VPU/XLU)
    """
    nl = num_layers
    prelu_ref = args[3 * nl]           # SMEM (L,) f32
    o_ref = args[3 * nl + 1]           # VMEM (TILE_B, Out_last)
    feat = args[3 * nl + 2]            # VMEM scratch (TILE_B, MAX_FEAT) f32
    cdt = args[0].dtype                # matmul compute dtype (bf16 or f32)

    h = x_ref[...]                     # (TILE_B, In0) f32
    for li in range(nl):
        w_ref = args[3 * li]           # ((NB+1)*In, Out) in compute dtype
        lnw_ref = args[3 * li + 1]     # (1, Out) f32
        lnb_ref = args[3 * li + 2]     # (1, Out) f32
        in_f = layer_in_dims[li]
        kdim = (NUM_BASES + 1) * in_f

        # ---- build fused activation slab in VMEM scratch ----
        feat[:, 0:in_f] = _gelu_exact(h)
        for j in range(NUM_BASES):
            feat[:, (j + 1) * in_f:(j + 2) * in_f] = _bspline_basis(h, j)

        # ---- one MXU contraction replaces base matmul + 8 spline matmuls ----
        y = jnp.dot(feat[:, 0:kdim].astype(cdt), w_ref[...],
                    preferred_element_type=jnp.float32)       # (TILE_B, Out) f32

        # ---- LayerNorm over out_features (biased variance, eps=1e-5), f32 ----
        mean = jnp.mean(y, axis=-1, keepdims=True)
        var = jnp.mean(jnp.square(y - mean), axis=-1, keepdims=True)
        yn = (y - mean) * lax.rsqrt(var + LN_EPS)
        yn = yn * lnw_ref[...] + lnb_ref[...]

        # ---- PReLU (single shared slope per layer, read from SMEM) ----
        a = prelu_ref[li]
        h = jnp.where(yn >= 0.0, yn, a * yn)

    o_ref[...] = h.astype(o_ref.dtype)


# ---- wrapper ---------------------------------------------------------------------------
def kan_forward(x, packed, *, tile_b=None):
    """Run the whole KAN (all layers fused) with a single batch-tiled pallas_call."""
    layers = packed["layers"]
    prelu = packed["prelu"]
    nl = len(layers)
    layer_in = tuple(int(p["w"].shape[0]) // (NUM_BASES + 1) for p in layers)
    out_f = int(layers[-1]["w"].shape[1])
    batch, in0 = x.shape
    assert in0 == layer_in[0], (in0, layer_in)

    if tile_b is None:
        tile_b = batch
        for t in (128, 64, 32, 16, 8):   # cap tile at 128 rows to bound vreg pressure
            if batch % t == 0:
                tile_b = t
                break
    if batch % tile_b != 0:
        raise ValueError(f"batch={batch} must be divisible by tile_b={tile_b}")

    max_feat = max((NUM_BASES + 1) * f for f in layer_in)

    in_specs = [pl.BlockSpec((tile_b, in0), lambda i: (i, 0))]   # batch-tiled activation
    ops = [x]
    for p in layers:
        kf, of = p["w"].shape
        in_specs += [
            pl.BlockSpec((kf, of), lambda i: (0, 0)),   # packed weight: VMEM-resident
            pl.BlockSpec((1, of), lambda i: (0, 0)),    # LayerNorm gamma
            pl.BlockSpec((1, of), lambda i: (0, 0)),    # LayerNorm beta
        ]
        ops += [p["w"], p["ln_w"], p["ln_b"]]
    in_specs.append(pl.BlockSpec(memory_space=pltpu.MemorySpace.SMEM))  # PReLU slopes
    ops.append(prelu)

    # Explicit VMEM budget (resident weights + double-buffered act tiles + scratch),
    # capped at 64 MiB so the same config is valid on v7x.
    wbytes = sum(int(np.prod(p["w"].shape)) * p["w"].dtype.itemsize for p in layers)
    est = wbytes + 2 * tile_b * (in0 + out_f) * 4 + tile_b * max_feat * 4 + (4 << 20)
    vmem_limit = int(min(64 << 20, max(32 << 20, 2 * est)))

    kernel = functools.partial(kan_net_kernel, nl, layer_in)
    return pl.pallas_call(
        kernel,
        out_shape=jax.ShapeDtypeStruct((batch, out_f), jnp.float32),
        grid_spec=pltpu.PrefetchScalarGridSpec(
            num_scalar_prefetch=0,
            grid=(batch // tile_b,),
            in_specs=in_specs,
            out_specs=pl.BlockSpec((tile_b, out_f), lambda i: (i, 0)),
            scratch_shapes=[pltpu.VMEM((tile_b, max_feat), jnp.float32)],
        ),
        compiler_params=pltpu.CompilerParams(
            dimension_semantics=("parallel",),
            vmem_limit_bytes=vmem_limit),
    )(*ops)


# ---- deterministic parameter init (kaiming_uniform, nonlinearity='linear') ------------
def init_kan_params(key, layers_hidden):
    params = []
    for in_f, out_f in zip(layers_hidden[:-1], layers_hidden[1:]):
        key, k1, k2 = jax.random.split(key, 3)
        b1 = float(np.sqrt(3.0) / np.sqrt(in_f))
        base_w = jax.random.uniform(k1, (out_f, in_f), jnp.float32, -b1, b1)
        fan2 = in_f * NUM_BASES
        b2 = float(np.sqrt(3.0) / np.sqrt(fan2))
        spline_w = jax.random.uniform(k2, (out_f, fan2), jnp.float32, -b2, b2)
        params.append(dict(
            bw=base_w,                                   # (Out, In)
            sw_flat=spline_w,                            # (Out, In*8)
            ln_w=jnp.ones((1, out_f), jnp.float32),
            ln_b=jnp.zeros((1, out_f), jnp.float32),
            prelu=jnp.full((1,), PRELU_INIT, jnp.float32),
        ))
    return params


def pack_kan_params(params, compute_dtype=jnp.bfloat16):
    """Pack [W_base^T ; W_spline_basis0 ; ... ; W_spline_basis7] into a single
    ((NUM_BASES+1)*In, Out) matrix per layer so the kernel does ONE MXU contraction."""
    layers = []
    for p in params:
        out_f, in_f = p["bw"].shape
        # (Out, In*8) -> (Out, In, 8) -> (8, In, Out): sw_k[j, i, o] = W[o, i*8 + j]
        sw_k = jnp.transpose(p["sw_flat"].reshape(out_f, in_f, NUM_BASES), (2, 1, 0))
        w = jnp.concatenate([jnp.transpose(p["bw"])[None], sw_k], axis=0)  # (9, In, Out)
        w = w.reshape((NUM_BASES + 1) * in_f, out_f).astype(compute_dtype)
        layers.append(dict(w=w, ln_w=p["ln_w"], ln_b=p["ln_b"]))
    prelu = jnp.concatenate([p["prelu"] for p in params]).astype(jnp.float32)  # (L,)
    return dict(layers=layers, prelu=prelu)


# ---- pure-JAX reference (mirrors the PyTorch KANLayer forward) --------------------------
def kan_layer_ref(x, p):
    grid = jnp.asarray(GRID_VALS, jnp.float32)                     # (12,)
    gx = jax.nn.gelu(x, approximate=False)
    base_out = jnp.dot(gx, jnp.transpose(p["bw"]), precision=lax.Precision.HIGHEST)
    xu = x[:, :, None]
    bases = jnp.logical_and(xu >= grid[:-1], xu < grid[1:]).astype(jnp.float32)
    for k in range(1, SPLINE_ORDER + 1):
        left = grid[:-(k + 1)]
        right = grid[k:-1]
        delta = jnp.where(right == left, jnp.ones_like(right), right - left)
        bases = ((xu - left) / delta * bases[:, :, :-1]
                 + (grid[k + 1:] - xu) / (grid[k + 1:] - grid[1:-k]) * bases[:, :, 1:])
    bases_flat = bases.reshape(x.shape[0], -1)
    spline_out = jnp.dot(bases_flat, jnp.transpose(p["sw_flat"]),
                         precision=lax.Precision.HIGHEST)
    y = base_out + spline_out
    mean = jnp.mean(y, axis=-1, keepdims=True)
    var = jnp.mean(jnp.square(y - mean), axis=-1, keepdims=True)
    yn = (y - mean) / jnp.sqrt(var + LN_EPS)
    yn = yn * p["ln_w"] + p["ln_b"]
    a = p["prelu"][0]
    return jnp.where(yn >= 0.0, yn, a * yn)


def kan_ref(x, params):
    for p in params:
        x = kan_layer_ref(x, p)
    return x


if __name__ == "__main__":
    layers_hidden = [32, 64, 16]            # two KANLayers: 32->64 and 64->16
    batch = 64
    tile_b = 16                             # -> grid=(4,), exercises the batch pipeline

    key = jax.random.PRNGKey(0)
    kx, kp = jax.random.split(key)
    x = jax.random.normal(kx, (batch, layers_hidden[0]), dtype=jnp.float32)
    params = init_kan_params(kp, layers_hidden)

    ref = jax.block_until_ready(kan_ref(x, params))

    # f32 MXU path: tight tolerance vs the exact-GELU f32 reference.
    packed_f32 = pack_kan_params(params, jnp.float32)
    out_f32 = jax.block_until_ready(kan_forward(x, packed_f32, tile_b=tile_b))
    assert out_f32.shape == (batch, layers_hidden[-1]), out_f32.shape
    np.testing.assert_allclose(np.asarray(out_f32), np.asarray(ref), rtol=2e-3, atol=2e-3)

    # bf16 MXU path (default perf configuration): tolerance reflects bf16 operand rounding.
    packed_bf16 = pack_kan_params(params, jnp.bfloat16)
    out_bf16 = jax.block_until_ready(kan_forward(x, packed_bf16, tile_b=tile_b))
    np.testing.assert_allclose(np.asarray(out_bf16), np.asarray(ref), rtol=2e-2, atol=2e-2)

    print("KERNEL_OK")
</pallas_src>

<mosaic_0001>
module attributes {stable_mosaic.version = 11 : i64} {
  func.func @kan_net_kernel(%arg0: i32, %arg1: memref<16x32xf32, #tpu.memory_space<vmem>>, %arg2: memref<288x64xf32, #tpu.memory_space<vmem>>, %arg3: memref<1x64xf32, #tpu.memory_space<vmem>>, %arg4: memref<1x64xf32, #tpu.memory_space<vmem>>, %arg5: memref<576x16xf32, #tpu.memory_space<vmem>>, %arg6: memref<1x16xf32, #tpu.memory_space<vmem>>, %arg7: memref<1x16xf32, #tpu.memory_space<vmem>>, %arg8: memref<2xf32, #tpu.memory_space<smem>>, %arg9: memref<16x16xf32, #tpu.memory_space<vmem>>, %arg10: memref<16x576xf32, #tpu.memory_space<vmem>>) attributes {dimension_semantics = [#tpu.dimension_semantics<parallel>], iteration_bounds = array<i64: 4>, scalar_prefetch = 0 : i64, scratch_operands = 1 : i64, tpu.core_type = #tpu.core_type<tc>, window_params = [{transform_indices = @transform_0, window_bounds = array<i64: 16, 32>}, {pipeline_mode = #tpu.pipeline_mode<synchronous>, transform_indices = @transform_1, window_bounds = array<i64: 288, 64>}, {pipeline_mode = #tpu.pipeline_mode<synchronous>, transform_indices = @transform_2, window_bounds = array<i64: 1, 64>}, {pipeline_mode = #tpu.pipeline_mode<synchronous>, transform_indices = @transform_3, window_bounds = array<i64: 1, 64>}, {pipeline_mode = #tpu.pipeline_mode<synchronous>, transform_indices = @transform_4, window_bounds = array<i64: 576, 16>}, {pipeline_mode = #tpu.pipeline_mode<synchronous>, transform_indices = @transform_5, window_bounds = array<i64: 1, 16>}, {pipeline_mode = #tpu.pipeline_mode<synchronous>, transform_indices = @transform_6, window_bounds = array<i64: 1, 16>}, {transform_indices = @transform_7, window_bounds = array<i64: 2>}, {transform_indices = @transform_8, window_bounds = array<i64: 16, 16>}]} {
    %c0 = arith.constant 0 : index
    %c0_0 = arith.constant 0 : index
    %0 = vector.load %arg1[%c0, %c0_0] : memref<16x32xf32, #tpu.memory_space<vmem>>, vector<16x32xf32>
    %cst = arith.constant 5.000000e-01 : f32
    %1 = vector.broadcast %cst : f32 to vector<16x32xf32>
    %2 = arith.mulf %1, %0 : vector<16x32xf32>
    %cst_1 = arith.constant 0.707106769 : f32
    %3 = vector.broadcast %cst_1 : f32 to vector<16x32xf32>
    %4 = arith.mulf %0, %3 : vector<16x32xf32>
    %5 = math.absf %4 : vector<16x32xf32>
    %cst_2 = arith.constant 0.327591091 : f32
    %6 = vector.broadcast %cst_2 : f32 to vector<16x32xf32>
    %7 = arith.mulf %6, %5 : vector<16x32xf32>
    %cst_3 = arith.constant 1.000000e+00 : f32
    %8 = vector.broadcast %cst_3 : f32 to vector<16x32xf32>
    %9 = arith.addf %8, %7 : vector<16x32xf32>
    %cst_4 = arith.constant 1.000000e+00 : f32
    %10 = vector.broadcast %cst_4 : f32 to vector<16x32xf32>
    %11 = arith.divf %10, %9 : vector<16x32xf32>
    %cst_5 = arith.constant 1.06140542 : f32
    %12 = vector.broadcast %cst_5 : f32 to vector<16x32xf32>
    %13 = arith.mulf %12, %11 : vector<16x32xf32>
    %cst_6 = arith.constant -1.45315206 : f32
    %14 = vector.broadcast %cst_6 : f32 to vector<16x32xf32>
    %15 = arith.addf %13, %14 : vector<16x32xf32>
    %16 = arith.mulf %15, %11 : vector<16x32xf32>
    %cst_7 = arith.constant 1.42141378 : f32
    %17 = vector.broadcast %cst_7 : f32 to vector<16x32xf32>
    %18 = arith.addf %16, %17 : vector<16x32xf32>
    %19 = arith.mulf %18, %11 : vector<16x32xf32>
    %cst_8 = arith.constant -0.284496725 : f32
    %20 = vector.broadcast %cst_8 : f32 to vector<16x32xf32>
    %21 = arith.addf %19, %20 : vector<16x32xf32>
    %22 = arith.mulf %21, %11 : vector<16x32xf32>
    %cst_9 = arith.constant 0.254829586 : f32
    %23 = vector.broadcast %cst_9 : f32 to vector<16x32xf32>
    %24 = arith.addf %22, %23 : vector<16x32xf32>
    %25 = arith.mulf %24, %11 : vector<16x32xf32>
    %cst_10 = arith.constant 0.000000e+00 : f32
    %26 = vector.broadcast %cst_10 : f32 to vector<16x32xf32>
    %27 = arith.subf %26, %5 : vector<16x32xf32>
    %28 = arith.mulf %27, %5 : vector<16x32xf32>
    %29 = math.exp %28 : vector<16x32xf32>
    %30 = arith.mulf %25, %29 : vector<16x32xf32>
    %cst_11 = arith.constant 1.000000e+00 : f32
    %31 = vector.broadcast %cst_11 : f32 to vector<16x32xf32>
    %32 = arith.subf %31, %30 : vector<16x32xf32>
    %cst_12 = arith.constant 0.000000e+00 : f32
    %33 = vector.broadcast %cst_12 : f32 to vector<16x32xf32>
    %34 = arith.cmpf oge, %4, %33 : vector<16x32xf32>
    %cst_13 = arith.constant 0.000000e+00 : f32
    %35 = vector.broadcast %cst_13 : f32 to vector<16x32xf32>
    %36 = arith.subf %35, %32 : vector<16x32xf32>
    %37 = arith.select %34, %32, %36 : vector<16x32xi1>, vector<16x32xf32>
    %cst_14 = arith.constant 1.000000e+00 : f32
    %38 = vector.broadcast %cst_14 : f32 to vector<16x32xf32>
    %39 = arith.addf %38, %37 : vector<16x32xf32>
    %40 = arith.mulf %2, %39 : vector<16x32xf32>
    %c0_15 = arith.constant 0 : index
    %c0_16 = arith.constant 0 : index
    %41 = vector.load %arg10[%c0_15, %c0_16] : memref<16x576xf32, #tpu.memory_space<vmem>>, vector<16x32xf32>
    tpu.vector_store %arg10[%c0_15, %c0_16], %40 {strides = array<i32>} : memref<16x576xf32, #tpu.memory_space<vmem>>, vector<16x32xf32>,
    %cst_17 = arith.constant -2.200000e+00 : f32
    %42 = vector.broadcast %cst_17 : f32 to vector<16x32xf32>
    %43 = arith.cmpf oge, %0, %42 : vector<16x32xf32>
    %cst_18 = arith.constant -1.800000e+00 : f32
    %44 = vector.broadcast %cst_18 : f32 to vector<16x32xf32>
    %45 = arith.cmpf olt, %0, %44 : vector<16x32xf32>
    %46 = arith.andi %43, %45 : vector<16x32xi1>
    %47 = arith.extui %46 : vector<16x32xi1> to vector<16x32xi32>
    %48 = arith.sitofp %47 : vector<16x32xi32> to vector<16x32xf32>
    %cst_19 = arith.constant -1.800000e+00 : f32
    %49 = vector.broadcast %cst_19 : f32 to vector<16x32xf32>
    %50 = arith.cmpf oge, %0, %49 : vector<16x32xf32>
    %cst_20 = arith.constant -1.400000e+00 : f32
    %51 = vector.broadcast %cst_20 : f32 to vector<16x32xf32>
    %52 = arith.cmpf olt, %0, %51 : vector<16x32xf32>
    %53 = arith.andi %50, %52 : vector<16x32xi1>
    %54 = arith.extui %53 : vector<16x32xi1> to vector<16x32xi32>
    %55 = arith.sitofp %54 : vector<16x32xi32> to vector<16x32xf32>
    %cst_21 = arith.constant -1.400000e+00 : f32
    %56 = vector.broadcast %cst_21 : f32 to vector<16x32xf32>
    %57 = arith.cmpf oge, %0, %56 : vector<16x32xf32>
    %cst_22 = arith.constant -1.000000e+00 : f32
    %58 = vector.broadcast %cst_22 : f32 to vector<16x32xf32>
    %59 = arith.cmpf olt, %0, %58 : vector<16x32xf32>
    %60 = arith.andi %57, %59 : vector<16x32xi1>
    %61 = arith.extui %60 : vector<16x32xi1> to vector<16x32xi32>
    %62 = arith.sitofp %61 : vector<16x32xi32> to vector<16x32xf32>
    %cst_23 = arith.constant -1.000000e+00 : f32
    %63 = vector.broadcast %cst_23 : f32 to vector<16x32xf32>
    %64 = arith.cmpf oge, %0, %63 : vector<16x32xf32>
    %cst_24 = arith.constant -6.000000e-01 : f32
    %65 = vector.broadcast %cst_24 : f32 to vector<16x32xf32>
    %66 = arith.cmpf olt, %0, %65 : vector<16x32xf32>
    %67 = arith.andi %64, %66 : vector<16x32xi1>
    %68 = arith.extui %67 : vector<16x32xi1> to vector<16x32xi32>
    %69 = arith.sitofp %68 : vector<16x32xi32> to vector<16x32xf32>
    %cst_25 = arith.constant -2.200000e+00 : f32
    %70 = vector.broadcast %cst_25 : f32 to vector<16x32xf32>
    %71 = arith.subf %0, %70 : vector<16x32xf32>
    %cst_26 = arith.constant 2.49999952 : f32
    %72 = vector.broadcast %cst_26 : f32 to vector<16x32xf32>
    %73 = arith.mulf %71, %72 : vector<16x32xf32>
    %74 = arith.mulf %73, %48 : vector<16x32xf32>
    %cst_27 = arith.constant -1.400000e+00 : f32
    %75 = vector.broadcast %cst_27 : f32 to vector<16x32xf32>
    %76 = arith.subf %75, %0 : vector<16x32xf32>
    %cst_28 = arith.constant 2.50000024 : f32
    %77 = vector.broadcast %cst_28 : f32 to vector<16x32xf32>
    %78 = arith.mulf %76, %77 : vector<16x32xf32>
    %79 = arith.mulf %78, %55 : vector<16x32xf32>
    %80 = arith.addf %74, %79 : vector<16x32xf32>
    %cst_29 = arith.constant -1.800000e+00 : f32
    %81 = vector.broadcast %cst_29 : f32 to vector<16x32xf32>
    %82 = arith.subf %0, %81 : vector<16x32xf32>
    %cst_30 = arith.constant 2.50000024 : f32
    %83 = vector.broadcast %cst_30 : f32 to vector<16x32xf32>
    %84 = arith.mulf %82, %83 : vector<16x32xf32>
    %85 = arith.mulf %84, %55 : vector<16x32xf32>
    %cst_31 = arith.constant -1.000000e+00 : f32
    %86 = vector.broadcast %cst_31 : f32 to vector<16x32xf32>
    %87 = arith.subf %86, %0 : vector<16x32xf32>
    %cst_32 = arith.constant 2.50000024 : f32
    %88 = vector.broadcast %cst_32 : f32 to vector<16x32xf32>
    %89 = arith.mulf %87, %88 : vector<16x32xf32>
    %90 = arith.mulf %89, %62 : vector<16x32xf32>
    %91 = arith.addf %85, %90 : vector<16x32xf32>
    %cst_33 = arith.constant -1.400000e+00 : f32
    %92 = vector.broadcast %cst_33 : f32 to vector<16x32xf32>
    %93 = arith.subf %0, %92 : vector<16x32xf32>
    %cst_34 = arith.constant 2.50000024 : f32
    %94 = vector.broadcast %cst_34 : f32 to vector<16x32xf32>
    %95 = arith.mulf %93, %94 : vector<16x32xf32>
    %96 = arith.mulf %95, %62 : vector<16x32xf32>
    %cst_35 = arith.constant -6.000000e-01 : f32
    %97 = vector.broadcast %cst_35 : f32 to vector<16x32xf32>
    %98 = arith.subf %97, %0 : vector<16x32xf32>
    %cst_36 = arith.constant 2.50000024 : f32
    %99 = vector.broadcast %cst_36 : f32 to vector<16x32xf32>
    %100 = arith.mulf %98, %99 : vector<16x32xf32>
    %101 = arith.mulf %100, %69 : vector<16x32xf32>
    %102 = arith.addf %96, %101 : vector<16x32xf32>
    %cst_37 = arith.constant -2.200000e+00 : f32
    %103 = vector.broadcast %cst_37 : f32 to vector<16x32xf32>
    %104 = arith.subf %0, %103 : vector<16x32xf32>
    %cst_38 = arith.constant 1.24999988 : f32
    %105 = vector.broadcast %cst_38 : f32 to vector<16x32xf32>
    %106 = arith.mulf %104, %105 : vector<16x32xf32>
    %107 = arith.mulf %106, %80 : vector<16x32xf32>
    %cst_39 = arith.constant -1.000000e+00 : f32
    %108 = vector.broadcast %cst_39 : f32 to vector<16x32xf32>
    %109 = arith.subf %108, %0 : vector<16x32xf32>
    %cst_40 = arith.constant 1.25000012 : f32
    %110 = vector.broadcast %cst_40 : f32 to vector<16x32xf32>
    %111 = arith.mulf %109, %110 : vector<16x32xf32>
    %112 = arith.mulf %111, %91 : vector<16x32xf32>
    %113 = arith.addf %107, %112 : vector<16x32xf32>
    %cst_41 = arith.constant -1.800000e+00 : f32
    %114 = vector.broadcast %cst_41 : f32 to vector<16x32xf32>
    %115 = arith.subf %0, %114 : vector<16x32xf32>
    %cst_42 = arith.constant 1.25000012 : f32
    %116 = vector.broadcast %cst_42 : f32 to vector<16x32xf32>
    %117 = arith.mulf %115, %116 : vector<16x32xf32>
    %118 = arith.mulf %117, %91 : vector<16x32xf32>
    %cst_43 = arith.constant -6.000000e-01 : f32
    %119 = vector.broadcast %cst_43 : f32 to vector<16x32xf32>
    %120 = arith.subf %119, %0 : vector<16x32xf32>
    %cst_44 = arith.constant 1.25000012 : f32
    %121 = vector.broadcast %cst_44 : f32 to vector<16x32xf32>
    %122 = arith.mulf %120, %121 : vector<16x32xf32>
    %123 = arith.mulf %122, %102 : vector<16x32xf32>
    %124 = arith.addf %118, %123 : vector<16x32xf32>
    %cst_45 = arith.constant -2.200000e+00 : f32
    %125 = vector.broadcast %cst_45 : f32 to vector<16x32xf32>
    %126 = arith.subf %0, %125 : vector<16x32xf32>
    %cst_46 = arith.constant 0.833333313 : f32
    %127 = vector.broadcast %cst_46 : f32 to vector<16x32xf32>
    %128 = arith.mulf %126, %127 : vector<16x32xf32>
    %129 = arith.mulf %128, %113 : vector<16x32xf32>
    %cst_47 = arith.constant -6.000000e-01 : f32
    %130 = vector.broadcast %cst_47 : f32 to vector<16x32xf32>
    %131 = arith.subf %130, %0 : vector<16x32xf32>
    %cst_48 = arith.constant 0.833333373 : f32
    %132 = vector.broadcast %cst_48 : f32 to vector<16x32xf32>
    %133 = arith.mulf %131, %132 : vector<16x32xf32>
    %134 = arith.mulf %133, %124 : vector<16x32xf32>
    %135 = arith.addf %129, %134 : vector<16x32xf32>
    %c0_49 = arith.constant 0 : index
    %c32 = arith.constant 32 : index
    %136 = vector.load %arg10[%c0_49, %c32] : memref<16x576xf32, #tpu.memory_space<vmem>>, vector<16x32xf32>
    tpu.vector_store %arg10[%c0_49, %c32], %135 {strides = array<i32>} : memref<16x576xf32, #tpu.memory_space<vmem>>, vector<16x32xf32>,
    %cst_50 = arith.constant -1.800000e+00 : f32
    %137 = vector.broadcast %cst_50 : f32 to vector<16x32xf32>
    %138 = arith.cmpf oge, %0, %137 : vector<16x32xf32>
    %cst_51 = arith.constant -1.400000e+00 : f32
    %139 = vector.broadcast %cst_51 : f32 to vector<16x32xf32>
    %140 = arith.cmpf olt, %0, %139 : vector<16x32xf32>
    %141 = arith.andi %138, %140 : vector<16x32xi1>
    %142 = arith.extui %141 : vector<16x32xi1> to vector<16x32xi32>
    %143 = arith.sitofp %142 : vector<16x32xi32> to vector<16x32xf32>
    %cst_52 = arith.constant -1.400000e+00 : f32
    %144 = vector.broadcast %cst_52 : f32 to vector<16x32xf32>
    %145 = arith.cmpf oge, %0, %144 : vector<16x32xf32>
    %cst_53 = arith.constant -1.000000e+00 : f32
    %146 = vector.broadcast %cst_53 : f32 to vector<16x32xf32>
    %147 = arith.cmpf olt, %0, %146 : vector<16x32xf32>
    %148 = arith.andi %145, %147 : vector<16x32xi1>
    %149 = arith.extui %148 : vector<16x32xi1> to vector<16x32xi32>
    %150 = arith.sitofp %149 : vector<16x32xi32> to vector<16x32xf32>
    %cst_54 = arith.constant -1.000000e+00 : f32
    %151 = vector.broadcast %cst_54 : f32 to vector<16x32xf32>
    %152 = arith.cmpf oge, %0, %151 : vector<16x32xf32>
    %cst_55 = arith.constant -6.000000e-01 : f32
    %153 = vector.broadcast %cst_55 : f32 to vector<16x32xf32>
    %154 = arith.cmpf olt, %0, %153 : vector<16x32xf32>
    %155 = arith.andi %152, %154 : vector<16x32xi1>
    %156 = arith.extui %155 : vector<16x32xi1> to vector<16x32xi32>
    %157 = arith.sitofp %156 : vector<16x32xi32> to vector<16x32xf32>
    %cst_56 = arith.constant -6.000000e-01 : f32
    %158 = vector.broadcast %cst_56 : f32 to vector<16x32xf32>
    %159 = arith.cmpf oge, %0, %158 : vector<16x32xf32>
    %cst_57 = arith.constant -2.000000e-01 : f32
    %160 = vector.broadcast %cst_57 : f32 to vector<16x32xf32>
    %161 = arith.cmpf olt, %0, %160 : vector<16x32xf32>
    %162 = arith.andi %159, %161 : vector<16x32xi1>
    %163 = arith.extui %162 : vector<16x32xi1> to vector<16x32xi32>
    %164 = arith.sitofp %163 : vector<16x32xi32> to vector<16x32xf32>
    %cst_58 = arith.constant -1.800000e+00 : f32
    %165 = vector.broadcast %cst_58 : f32 to vector<16x32xf32>
    %166 = arith.subf %0, %165 : vector<16x32xf32>
    %cst_59 = arith.constant 2.50000024 : f32
    %167 = vector.broadcast %cst_59 : f32 to vector<16x32xf32>
    %168 = arith.mulf %166, %167 : vector<16x32xf32>
    %169 = arith.mulf %168, %143 : vector<16x32xf32>
    %cst_60 = arith.constant -1.000000e+00 : f32
    %170 = vector.broadcast %cst_60 : f32 to vector<16x32xf32>
    %171 = arith.subf %170, %0 : vector<16x32xf32>
    %cst_61 = arith.constant 2.50000024 : f32
    %172 = vector.broadcast %cst_61 : f32 to vector<16x32xf32>
    %173 = arith.mulf %171, %172 : vector<16x32xf32>
    %174 = arith.mulf %173, %150 : vector<16x32xf32>
    %175 = arith.addf %169, %174 : vector<16x32xf32>
    %cst_62 = arith.constant -1.400000e+00 : f32
    %176 = vector.broadcast %cst_62 : f32 to vector<16x32xf32>
    %177 = arith.subf %0, %176 : vector<16x32xf32>
    %cst_63 = arith.constant 2.50000024 : f32
    %178 = vector.broadcast %cst_63 : f32 to vector<16x32xf32>
    %179 = arith.mulf %177, %178 : vector<16x32xf32>
    %180 = arith.mulf %179, %150 : vector<16x32xf32>
    %cst_64 = arith.constant -6.000000e-01 : f32
    %181 = vector.broadcast %cst_64 : f32 to vector<16x32xf32>
    %182 = arith.subf %181, %0 : vector<16x32xf32>
    %cst_65 = arith.constant 2.50000024 : f32
    %183 = vector.broadcast %cst_65 : f32 to vector<16x32xf32>
    %184 = arith.mulf %182, %183 : vector<16x32xf32>
    %185 = arith.mulf %184, %157 : vector<16x32xf32>
    %186 = arith.addf %180, %185 : vector<16x32xf32>
    %cst_66 = arith.constant -1.000000e+00 : f32
    %187 = vector.broadcast %cst_66 : f32 to vector<16x32xf32>
    %188 = arith.subf %0, %187 : vector<16x32xf32>
    %cst_67 = arith.constant 2.50000024 : f32
    %189 = vector.broadcast %cst_67 : f32 to vector<16x32xf32>
    %190 = arith.mulf %188, %189 : vector<16x32xf32>
    %191 = arith.mulf %190, %157 : vector<16x32xf32>
    %cst_68 = arith.constant -2.000000e-01 : f32
    %192 = vector.broadcast %cst_68 : f32 to vector<16x32xf32>
    %193 = arith.subf %192, %0 : vector<16x32xf32>
    %cst_69 = arith.constant 2.49999976 : f32
    %194 = vector.broadcast %cst_69 : f32 to vector<16x32xf32>
    %195 = arith.mulf %193, %194 : vector<16x32xf32>
    %196 = arith.mulf %195, %164 : vector<16x32xf32>
    %197 = arith.addf %191, %196 : vector<16x32xf32>
    %cst_70 = arith.constant -1.800000e+00 : f32
    %198 = vector.broadcast %cst_70 : f32 to vector<16x32xf32>
    %199 = arith.subf %0, %198 : vector<16x32xf32>
    %cst_71 = arith.constant 1.25000012 : f32
    %200 = vector.broadcast %cst_71 : f32 to vector<16x32xf32>
    %201 = arith.mulf %199, %200 : vector<16x32xf32>
    %202 = arith.mulf %201, %175 : vector<16x32xf32>
    %cst_72 = arith.constant -6.000000e-01 : f32
    %203 = vector.broadcast %cst_72 : f32 to vector<16x32xf32>
    %204 = arith.subf %203, %0 : vector<16x32xf32>
    %cst_73 = arith.constant 1.25000012 : f32
    %205 = vector.broadcast %cst_73 : f32 to vector<16x32xf32>
    %206 = arith.mulf %204, %205 : vector<16x32xf32>
    %207 = arith.mulf %206, %186 : vector<16x32xf32>
    %208 = arith.addf %202, %207 : vector<16x32xf32>
    %cst_74 = arith.constant -1.400000e+00 : f32
    %209 = vector.broadcast %cst_74 : f32 to vector<16x32xf32>
    %210 = arith.subf %0, %209 : vector<16x32xf32>
    %cst_75 = arith.constant 1.25000012 : f32
    %211 = vector.broadcast %cst_75 : f32 to vector<16x32xf32>
    %212 = arith.mulf %210, %211 : vector<16x32xf32>
    %213 = arith.mulf %212, %186 : vector<16x32xf32>
    %cst_76 = arith.constant -2.000000e-01 : f32
    %214 = vector.broadcast %cst_76 : f32 to vector<16x32xf32>
    %215 = arith.subf %214, %0 : vector<16x32xf32>
    %cst_77 = arith.constant 1.250000e+00 : f32
    %216 = vector.broadcast %cst_77 : f32 to vector<16x32xf32>
    %217 = arith.mulf %215, %216 : vector<16x32xf32>
    %218 = arith.mulf %217, %197 : vector<16x32xf32>
    %219 = arith.addf %213, %218 : vector<16x32xf32>
    %cst_78 = arith.constant -1.800000e+00 : f32
    %220 = vector.broadcast %cst_78 : f32 to vector<16x32xf32>
    %221 = arith.subf %0, %220 : vector<16x32xf32>
    %cst_79 = arith.constant 0.833333373 : f32
    %222 = vector.broadcast %cst_79 : f32 to vector<16x32xf32>
    %223 = arith.mulf %221, %222 : vector<16x32xf32>
    %224 = arith.mulf %223, %208 : vector<16x32xf32>
    %cst_80 = arith.constant -2.000000e-01 : f32
    %225 = vector.broadcast %cst_80 : f32 to vector<16x32xf32>
    %226 = arith.subf %225, %0 : vector<16x32xf32>
    %cst_81 = arith.constant 0.833333373 : f32
    %227 = vector.broadcast %cst_81 : f32 to vector<16x32xf32>
    %228 = arith.mulf %226, %227 : vector<16x32xf32>
    %229 = arith.mulf %228, %219 : vector<16x32xf32>
    %230 = arith.addf %224, %229 : vector<16x32xf32>
    %c0_82 = arith.constant 0 : index
    %c64 = arith.constant 64 : index
    %231 = vector.load %arg10[%c0_82, %c64] : memref<16x576xf32, #tpu.memory_space<vmem>>, vector<16x32xf32>
    tpu.vector_store %arg10[%c0_82, %c64], %230 {strides = array<i32>} : memref<16x576xf32, #tpu.memory_space<vmem>>, vector<16x32xf32>,
    %cst_83 = arith.constant -1.400000e+00 : f32
    %232 = vector.broadcast %cst_83 : f32 to vector<16x32xf32>
    %233 = arith.cmpf oge, %0, %232 : vector<16x32xf32>
    %cst_84 = arith.constant -1.000000e+00 : f32
    %234 = vector.broadcast %cst_84 : f32 to vector<16x32xf32>
    %235 = arith.cmpf olt, %0, %234 : vector<16x32xf32>
    %236 = arith.andi %233, %235 : vector<16x32xi1>
    %237 = arith.extui %236 : vector<16x32xi1> to vector<16x32xi32>
    %238 = arith.sitofp %237 : vector<16x32xi32> to vector<16x32xf32>
    %cst_85 = arith.constant -1.000000e+00 : f32
    %239 = vector.broadcast %cst_85 : f32 to vector<16x32xf32>
    %240 = arith.cmpf oge, %0, %239 : vector<16x32xf32>
    %cst_86 = arith.constant -6.000000e-01 : f32
    %241 = vector.broadcast %cst_86 : f32 to vector<16x32xf32>
    %242 = arith.cmpf olt, %0, %241 : vector<16x32xf32>
    %243 = arith.andi %240, %242 : vector<16x32xi1>
    %244 = arith.extui %243 : vector<16x32xi1> to vector<16x32xi32>
    %245 = arith.sitofp %244 : vector<16x32xi32> to vector<16x32xf32>
    %cst_87 = arith.constant -6.000000e-01 : f32
    %246 = vector.broadcast %cst_87 : f32 to vector<16x32xf32>
    %247 = arith.cmpf oge, %0, %246 : vector<16x32xf32>
    %cst_88 = arith.constant -2.000000e-01 : f32
    %248 = vector.broadcast %cst_88 : f32 to vector<16x32xf32>
    %249 = arith.cmpf olt, %0, %248 : vector<16x32xf32>
    %250 = arith.andi %247, %249 : vector<16x32xi1>
    %251 = arith.extui %250 : vector<16x32xi1> to vector<16x32xi32>
    %252 = arith.sitofp %251 : vector<16x32xi32> to vector<16x32xf32>
    %cst_89 = arith.constant -2.000000e-01 : f32
    %253 = vector.broadcast %cst_89 : f32 to vector<16x32xf32>
    %254 = arith.cmpf oge, %0, %253 : vector<16x32xf32>
    %cst_90 = arith.constant 2.000000e-01 : f32
    %255 = vector.broadcast %cst_90 : f32 to vector<16x32xf32>
    %256 = arith.cmpf olt, %0, %255 : vector<16x32xf32>
    %257 = arith.andi %254, %256 : vector<16x32xi1>
    %258 = arith.extui %257 : vector<16x32xi1> to vector<16x32xi32>
    %259 = arith.sitofp %258 : vector<16x32xi32> to vector<16x32xf32>
    %cst_91 = arith.constant -1.400000e+00 : f32
    %260 = vector.broadcast %cst_91 : f32 to vector<16x32xf32>
    %261 = arith.subf %0, %260 : vector<16x32xf32>
    %cst_92 = arith.constant 2.50000024 : f32
    %262 = vector.broadcast %cst_92 : f32 to vector<16x32xf32>
    %263 = arith.mulf %261, %262 : vector<16x32xf32>
    %264 = arith.mulf %263, %238 : vector<16x32xf32>
    %cst_93 = arith.constant -6.000000e-01 : f32
    %265 = vector.broadcast %cst_93 : f32 to vector<16x32xf32>
    %266 = arith.subf %265, %0 : vector<16x32xf32>
    %cst_94 = arith.constant 2.50000024 : f32
    %267 = vector.broadcast %cst_94 : f32 to vector<16x32xf32>
    %268 = arith.mulf %266, %267 : vector<16x32xf32>
    %269 = arith.mulf %268, %245 : vector<16x32xf32>
    %270 = arith.addf %264, %269 : vector<16x32xf32>
    %cst_95 = arith.constant -1.000000e+00 : f32
    %271 = vector.broadcast %cst_95 : f32 to vector<16x32xf32>
    %272 = arith.subf %0, %271 : vector<16x32xf32>
    %cst_96 = arith.constant 2.50000024 : f32
    %273 = vector.broadcast %cst_96 : f32 to vector<16x32xf32>
    %274 = arith.mulf %272, %273 : vector<16x32xf32>
    %275 = arith.mulf %274, %245 : vector<16x32xf32>
    %cst_97 = arith.constant -2.000000e-01 : f32
    %276 = vector.broadcast %cst_97 : f32 to vector<16x32xf32>
    %277 = arith.subf %276, %0 : vector<16x32xf32>
    %cst_98 = arith.constant 2.49999976 : f32
    %278 = vector.broadcast %cst_98 : f32 to vector<16x32xf32>
    %279 = arith.mulf %277, %278 : vector<16x32xf32>
    %280 = arith.mulf %279, %252 : vector<16x32xf32>
    %281 = arith.addf %275, %280 : vector<16x32xf32>
    %cst_99 = arith.constant -6.000000e-01 : f32
    %282 = vector.broadcast %cst_99 : f32 to vector<16x32xf32>
    %283 = arith.subf %0, %282 : vector<16x32xf32>
    %cst_100 = arith.constant 2.49999976 : f32
    %284 = vector.broadcast %cst_100 : f32 to vector<16x32xf32>
    %285 = arith.mulf %283, %284 : vector<16x32xf32>
    %286 = arith.mulf %285, %252 : vector<16x32xf32>
    %cst_101 = arith.constant 2.000000e-01 : f32
    %287 = vector.broadcast %cst_101 : f32 to vector<16x32xf32>
    %288 = arith.subf %287, %0 : vector<16x32xf32>
    %cst_102 = arith.constant 2.500000e+00 : f32
    %289 = vector.broadcast %cst_102 : f32 to vector<16x32xf32>
    %290 = arith.mulf %288, %289 : vector<16x32xf32>
    %291 = arith.mulf %290, %259 : vector<16x32xf32>
    %292 = arith.addf %286, %291 : vector<16x32xf32>
    %cst_103 = arith.constant -1.400000e+00 : f32
    %293 = vector.broadcast %cst_103 : f32 to vector<16x32xf32>
    %294 = arith.subf %0, %293 : vector<16x32xf32>
    %cst_104 = arith.constant 1.25000012 : f32
    %295 = vector.broadcast %cst_104 : f32 to vector<16x32xf32>
    %296 = arith.mulf %294, %295 : vector<16x32xf32>
    %297 = arith.mulf %296, %270 : vector<16x32xf32>
    %cst_105 = arith.constant -2.000000e-01 : f32
    %298 = vector.broadcast %cst_105 : f32 to vector<16x32xf32>
    %299 = arith.subf %298, %0 : vector<16x32xf32>
    %cst_106 = arith.constant 1.250000e+00 : f32
    %300 = vector.broadcast %cst_106 : f32 to vector<16x32xf32>
    %301 = arith.mulf %299, %300 : vector<16x32xf32>
    %302 = arith.mulf %301, %281 : vector<16x32xf32>
    %303 = arith.addf %297, %302 : vector<16x32xf32>
    %cst_107 = arith.constant -1.000000e+00 : f32
    %304 = vector.broadcast %cst_107 : f32 to vector<16x32xf32>
    %305 = arith.subf %0, %304 : vector<16x32xf32>
    %cst_108 = arith.constant 1.250000e+00 : f32
    %306 = vector.broadcast %cst_108 : f32 to vector<16x32xf32>
    %307 = arith.mulf %305, %306 : vector<16x32xf32>
    %308 = arith.mulf %307, %281 : vector<16x32xf32>
    %cst_109 = arith.constant 2.000000e-01 : f32
    %309 = vector.broadcast %cst_109 : f32 to vector<16x32xf32>
    %310 = arith.subf %309, %0 : vector<16x32xf32>
    %cst_110 = arith.constant 1.250000e+00 : f32
    %311 = vector.broadcast %cst_110 : f32 to vector<16x32xf32>
    %312 = arith.mulf %310, %311 : vector<16x32xf32>
    %313 = arith.mulf %312, %292 : vector<16x32xf32>
    %314 = arith.addf %308, %313 : vector<16x32xf32>
    %cst_111 = arith.constant -1.400000e+00 : f32
    %315 = vector.broadcast %cst_111 : f32 to vector<16x32xf32>
    %316 = arith.subf %0, %315 : vector<16x32xf32>
    %cst_112 = arith.constant 0.833333373 : f32
    %317 = vector.broadcast %cst_112 : f32 to vector<16x32xf32>
    %318 = arith.mulf %316, %317 : vector<16x32xf32>
    %319 = arith.mulf %318, %303 : vector<16x32xf32>
    %cst_113 = arith.constant 2.000000e-01 : f32
    %320 = vector.broadcast %cst_113 : f32 to vector<16x32xf32>
    %321 = arith.subf %320, %0 : vector<16x32xf32>
    %cst_114 = arith.constant 0.833333313 : f32
    %322 = vector.broadcast %cst_114 : f32 to vector<16x32xf32>
    %323 = arith.mulf %321, %322 : vector<16x32xf32>
    %324 = arith.mulf %323, %314 : vector<16x32xf32>
    %325 = arith.addf %319, %324 : vector<16x32xf32>
    %c0_115 = arith.constant 0 : index
    %c96 = arith.constant 96 : index
    %326 = vector.load %arg10[%c0_115, %c96] : memref<16x576xf32, #tpu.memory_space<vmem>>, vector<16x32xf32>
    tpu.vector_store %arg10[%c0_115, %c96], %325 {strides = array<i32>} : memref<16x576xf32, #tpu.memory_space<vmem>>, vector<16x32xf32>,
    %cst_116 = arith.constant -1.000000e+00 : f32
    %327 = vector.broadcast %cst_116 : f32 to vector<16x32xf32>
    %328 = arith.cmpf oge, %0, %327 : vector<16x32xf32>
    %cst_117 = arith.constant -6.000000e-01 : f32
    %329 = vector.broadcast %cst_117 : f32 to vector<16x32xf32>
    %330 = arith.cmpf olt, %0, %329 : vector<16x32xf32>
    %331 = arith.andi %328, %330 : vector<16x32xi1>
    %332 = arith.extui %331 : vector<16x32xi1> to vector<16x32xi32>
    %333 = arith.sitofp %332 : vector<16x32xi32> to vector<16x32xf32>
    %cst_118 = arith.constant -6.000000e-01 : f32
    %334 = vector.broadcast %cst_118 : f32 to vector<16x32xf32>
    %335 = arith.cmpf oge, %0, %334 : vector<16x32xf32>
    %cst_119 = arith.constant -2.000000e-01 : f32
    %336 = vector.broadcast %cst_119 : f32 to vector<16x32xf32>
    %337 = arith.cmpf olt, %0, %336 : vector<16x32xf32>
    %338 = arith.andi %335, %337 : vector<16x32xi1>
    %339 = arith.extui %338 : vector<16x32xi1> to vector<16x32xi32>
    %340 = arith.sitofp %339 : vector<16x32xi32> to vector<16x32xf32>
    %cst_120 = arith.constant -2.000000e-01 : f32
    %341 = vector.broadcast %cst_120 : f32 to vector<16x32xf32>
    %342 = arith.cmpf oge, %0, %341 : vector<16x32xf32>
    %cst_121 = arith.constant 2.000000e-01 : f32
    %343 = vector.broadcast %cst_121 : f32 to vector<16x32xf32>
    %344 = arith.cmpf olt, %0, %343 : vector<16x32xf32>
    %345 = arith.andi %342, %344 : vector<16x32xi1>
    %346 = arith.extui %345 : vector<16x32xi1> to vector<16x32xi32>
    %347 = arith.sitofp %346 : vector<16x32xi32> to vector<16x32xf32>
    %cst_122 = arith.constant 2.000000e-01 : f32
    %348 = vector.broadcast %cst_122 : f32 to vector<16x32xf32>
    %349 = arith.cmpf oge, %0, %348 : vector<16x32xf32>
    %cst_123 = arith.constant 6.000000e-01 : f32
    %350 = vector.broadcast %cst_123 : f32 to vector<16x32xf32>
    %351 = arith.cmpf olt, %0, %350 : vector<16x32xf32>
    %352 = arith.andi %349, %351 : vector<16x32xi1>
    %353 = arith.extui %352 : vector<16x32xi1> to vector<16x32xi32>
    %354 = arith.sitofp %353 : vector<16x32xi32> to vector<16x32xf32>
    %cst_124 = arith.constant -1.000000e+00 : f32
    %355 = vector.broadcast %cst_124 : f32 to vector<16x32xf32>
    %356 = arith.subf %0, %355 : vector<16x32xf32>
    %cst_125 = arith.constant 2.50000024 : f32
    %357 = vector.broadcast %cst_125 : f32 to vector<16x32xf32>
    %358 = arith.mulf %356, %357 : vector<16x32xf32>
    %359 = arith.mulf %358, %333 : vector<16x32xf32>
    %cst_126 = arith.constant -2.000000e-01 : f32
    %360 = vector.broadcast %cst_126 : f32 to vector<16x32xf32>
    %361 = arith.subf %360, %0 : vector<16x32xf32>
    %cst_127 = arith.constant 2.49999976 : f32
    %362 = vector.broadcast %cst_127 : f32 to vector<16x32xf32>
    %363 = arith.mulf %361, %362 : vector<16x32xf32>
    %364 = arith.mulf %363, %340 : vector<16x32xf32>
    %365 = arith.addf %359, %364 : vector<16x32xf32>
    %cst_128 = arith.constant -6.000000e-01 : f32
    %366 = vector.broadcast %cst_128 : f32 to vector<16x32xf32>
    %367 = arith.subf %0, %366 : vector<16x32xf32>
    %cst_129 = arith.constant 2.49999976 : f32
    %368 = vector.broadcast %cst_129 : f32 to vector<16x32xf32>
    %369 = arith.mulf %367, %368 : vector<16x32xf32>
    %370 = arith.mulf %369, %340 : vector<16x32xf32>
    %cst_130 = arith.constant 2.000000e-01 : f32
    %371 = vector.broadcast %cst_130 : f32 to vector<16x32xf32>
    %372 = arith.subf %371, %0 : vector<16x32xf32>
    %cst_131 = arith.constant 2.500000e+00 : f32
    %373 = vector.broadcast %cst_131 : f32 to vector<16x32xf32>
    %374 = arith.mulf %372, %373 : vector<16x32xf32>
    %375 = arith.mulf %374, %347 : vector<16x32xf32>
    %376 = arith.addf %370, %375 : vector<16x32xf32>
    %cst_132 = arith.constant -2.000000e-01 : f32
    %377 = vector.broadcast %cst_132 : f32 to vector<16x32xf32>
    %378 = arith.subf %0, %377 : vector<16x32xf32>
    %cst_133 = arith.constant 2.500000e+00 : f32
    %379 = vector.broadcast %cst_133 : f32 to vector<16x32xf32>
    %380 = arith.mulf %378, %379 : vector<16x32xf32>
    %381 = arith.mulf %380, %347 : vector<16x32xf32>
    %cst_134 = arith.constant 6.000000e-01 : f32
    %382 = vector.broadcast %cst_134 : f32 to vector<16x32xf32>
    %383 = arith.subf %382, %0 : vector<16x32xf32>
    %cst_135 = arith.constant 2.49999976 : f32
    %384 = vector.broadcast %cst_135 : f32 to vector<16x32xf32>
    %385 = arith.mulf %383, %384 : vector<16x32xf32>
    %386 = arith.mulf %385, %354 : vector<16x32xf32>
    %387 = arith.addf %381, %386 : vector<16x32xf32>
    %cst_136 = arith.constant -1.000000e+00 : f32
    %388 = vector.broadcast %cst_136 : f32 to vector<16x32xf32>
    %389 = arith.subf %0, %388 : vector<16x32xf32>
    %cst_137 = arith.constant 1.250000e+00 : f32
    %390 = vector.broadcast %cst_137 : f32 to vector<16x32xf32>
    %391 = arith.mulf %389, %390 : vector<16x32xf32>
    %392 = arith.mulf %391, %365 : vector<16x32xf32>
    %cst_138 = arith.constant 2.000000e-01 : f32
    %393 = vector.broadcast %cst_138 : f32 to vector<16x32xf32>
    %394 = arith.subf %393, %0 : vector<16x32xf32>
    %cst_139 = arith.constant 1.250000e+00 : f32
    %395 = vector.broadcast %cst_139 : f32 to vector<16x32xf32>
    %396 = arith.mulf %394, %395 : vector<16x32xf32>
    %397 = arith.mulf %396, %376 : vector<16x32xf32>
    %398 = arith.addf %392, %397 : vector<16x32xf32>
    %cst_140 = arith.constant -6.000000e-01 : f32
    %399 = vector.broadcast %cst_140 : f32 to vector<16x32xf32>
    %400 = arith.subf %0, %399 : vector<16x32xf32>
    %cst_141 = arith.constant 1.250000e+00 : f32
    %401 = vector.broadcast %cst_141 : f32 to vector<16x32xf32>
    %402 = arith.mulf %400, %401 : vector<16x32xf32>
    %403 = arith.mulf %402, %376 : vector<16x32xf32>
    %cst_142 = arith.constant 6.000000e-01 : f32
    %404 = vector.broadcast %cst_142 : f32 to vector<16x32xf32>
    %405 = arith.subf %404, %0 : vector<16x32xf32>
    %cst_143 = arith.constant 1.250000e+00 : f32
    %406 = vector.broadcast %cst_143 : f32 to vector<16x32xf32>
    %407 = arith.mulf %405, %406 : vector<16x32xf32>
    %408 = arith.mulf %407, %387 : vector<16x32xf32>
    %409 = arith.addf %403, %408 : vector<16x32xf32>
    %cst_144 = arith.constant -1.000000e+00 : f32
    %410 = vector.broadcast %cst_144 : f32 to vector<16x32xf32>
    %411 = arith.subf %0, %410 : vector<16x32xf32>
    %cst_145 = arith.constant 0.833333313 : f32
    %412 = vector.broadcast %cst_145 : f32 to vector<16x32xf32>
    %413 = arith.mulf %411, %412 : vector<16x32xf32>
    %414 = arith.mulf %413, %398 : vector<16x32xf32>
    %cst_146 = arith.constant 6.000000e-01 : f32
    %415 = vector.broadcast %cst_146 : f32 to vector<16x32xf32>
    %416 = arith.subf %415, %0 : vector<16x32xf32>
    %cst_147 = arith.constant 0.833333313 : f32
    %417 = vector.broadcast %cst_147 : f32 to vector<16x32xf32>
    %418 = arith.mulf %416, %417 : vector<16x32xf32>
    %419 = arith.mulf %418, %409 : vector<16x32xf32>
    %420 = arith.addf %414, %419 : vector<16x32xf32>
    %c0_148 = arith.constant 0 : index
    %c128 = arith.constant 128 : index
    %421 = vector.load %arg10[%c0_148, %c128] : memref<16x576xf32, #tpu.memory_space<vmem>>, vector<16x32xf32>
    tpu.vector_store %arg10[%c0_148, %c128], %420 {strides = array<i32>} : memref<16x576xf32, #tpu.memory_space<vmem>>, vector<16x32xf32>,
    %cst_149 = arith.constant -6.000000e-01 : f32
    %422 = vector.broadcast %cst_149 : f32 to vector<16x32xf32>
    %423 = arith.cmpf oge, %0, %422 : vector<16x32xf32>
    %cst_150 = arith.constant -2.000000e-01 : f32
    %424 = vector.broadcast %cst_150 : f32 to vector<16x32xf32>
    %425 = arith.cmpf olt, %0, %424 : vector<16x32xf32>
    %426 = arith.andi %423, %425 : vector<16x32xi1>
    %427 = arith.extui %426 : vector<16x32xi1> to vector<16x32xi32>
    %428 = arith.sitofp %427 : vector<16x32xi32> to vector<16x32xf32>
    %cst_151 = arith.constant -2.000000e-01 : f32
    %429 = vector.broadcast %cst_151 : f32 to vector<16x32xf32>
    %430 = arith.cmpf oge, %0, %429 : vector<16x32xf32>
    %cst_152 = arith.constant 2.000000e-01 : f32
    %431 = vector.broadcast %cst_152 : f32 to vector<16x32xf32>
    %432 = arith.cmpf olt, %0, %431 : vector<16x32xf32>
    %433 = arith.andi %430, %432 : vector<16x32xi1>
    %434 = arith.extui %433 : vector<16x32xi1> to vector<16x32xi32>
    %435 = arith.sitofp %434 : vector<16x32xi32> to vector<16x32xf32>
    %cst_153 = arith.constant 2.000000e-01 : f32
    %436 = vector.broadcast %cst_153 : f32 to vector<16x32xf32>
    %437 = arith.cmpf oge, %0, %436 : vector<16x32xf32>
    %cst_154 = arith.constant 6.000000e-01 : f32
    %438 = vector.broadcast %cst_154 : f32 to vector<16x32xf32>
    %439 = arith.cmpf olt, %0, %438 : vector<16x32xf32>
    %440 = arith.andi %437, %439 : vector<16x32xi1>
    %441 = arith.extui %440 : vector<16x32xi1> to vector<16x32xi32>
    %442 = arith.sitofp %441 : vector<16x32xi32> to vector<16x32xf32>
    %cst_155 = arith.constant 6.000000e-01 : f32
    %443 = vector.broadcast %cst_155 : f32 to vector<16x32xf32>
    %444 = arith.cmpf oge, %0, %443 : vector<16x32xf32>
    %cst_156 = arith.constant 1.000000e+00 : f32
    %445 = vector.broadcast %cst_156 : f32 to vector<16x32xf32>
    %446 = arith.cmpf olt, %0, %445 : vector<16x32xf32>
    %447 = arith.andi %444, %446 : vector<16x32xi1>
    %448 = arith.extui %447 : vector<16x32xi1> to vector<16x32xi32>
    %449 = arith.sitofp %448 : vector<16x32xi32> to vector<16x32xf32>
    %cst_157 = arith.constant -6.000000e-01 : f32
    %450 = vector.broadcast %cst_157 : f32 to vector<16x32xf32>
    %451 = arith.subf %0, %450 : vector<16x32xf32>
    %cst_158 = arith.constant 2.49999976 : f32
    %452 = vector.broadcast %cst_158 : f32 to vector<16x32xf32>
    %453 = arith.mulf %451, %452 : vector<16x32xf32>
    %454 = arith.mulf %453, %428 : vector<16x32xf32>
    %cst_159 = arith.constant 2.000000e-01 : f32
    %455 = vector.broadcast %cst_159 : f32 to vector<16x32xf32>
    %456 = arith.subf %455, %0 : vector<16x32xf32>
    %cst_160 = arith.constant 2.500000e+00 : f32
    %457 = vector.broadcast %cst_160 : f32 to vector<16x32xf32>
    %458 = arith.mulf %456, %457 : vector<16x32xf32>
    %459 = arith.mulf %458, %435 : vector<16x32xf32>
    %460 = arith.addf %454, %459 : vector<16x32xf32>
    %cst_161 = arith.constant -2.000000e-01 : f32
    %461 = vector.broadcast %cst_161 : f32 to vector<16x32xf32>
    %462 = arith.subf %0, %461 : vector<16x32xf32>
    %cst_162 = arith.constant 2.500000e+00 : f32
    %463 = vector.broadcast %cst_162 : f32 to vector<16x32xf32>
    %464 = arith.mulf %462, %463 : vector<16x32xf32>
    %465 = arith.mulf %464, %435 : vector<16x32xf32>
    %cst_163 = arith.constant 6.000000e-01 : f32
    %466 = vector.broadcast %cst_163 : f32 to vector<16x32xf32>
    %467 = arith.subf %466, %0 : vector<16x32xf32>
    %cst_164 = arith.constant 2.49999976 : f32
    %468 = vector.broadcast %cst_164 : f32 to vector<16x32xf32>
    %469 = arith.mulf %467, %468 : vector<16x32xf32>
    %470 = arith.mulf %469, %442 : vector<16x32xf32>
    %471 = arith.addf %465, %470 : vector<16x32xf32>
    %cst_165 = arith.constant 2.000000e-01 : f32
    %472 = vector.broadcast %cst_165 : f32 to vector<16x32xf32>
    %473 = arith.subf %0, %472 : vector<16x32xf32>
    %cst_166 = arith.constant 2.49999976 : f32
    %474 = vector.broadcast %cst_166 : f32 to vector<16x32xf32>
    %475 = arith.mulf %473, %474 : vector<16x32xf32>
    %476 = arith.mulf %475, %442 : vector<16x32xf32>
    %cst_167 = arith.constant 1.000000e+00 : f32
    %477 = vector.broadcast %cst_167 : f32 to vector<16x32xf32>
    %478 = arith.subf %477, %0 : vector<16x32xf32>
    %cst_168 = arith.constant 2.50000024 : f32
    %479 = vector.broadcast %cst_168 : f32 to vector<16x32xf32>
    %480 = arith.mulf %478, %479 : vector<16x32xf32>
    %481 = arith.mulf %480, %449 : vector<16x32xf32>
    %482 = arith.addf %476, %481 : vector<16x32xf32>
    %cst_169 = arith.constant -6.000000e-01 : f32
    %483 = vector.broadcast %cst_169 : f32 to vector<16x32xf32>
    %484 = arith.subf %0, %483 : vector<16x32xf32>
    %cst_170 = arith.constant 1.250000e+00 : f32
    %485 = vector.broadcast %cst_170 : f32 to vector<16x32xf32>
    %486 = arith.mulf %484, %485 : vector<16x32xf32>
    %487 = arith.mulf %486, %460 : vector<16x32xf32>
    %cst_171 = arith.constant 6.000000e-01 : f32
    %488 = vector.broadcast %cst_171 : f32 to vector<16x32xf32>
    %489 = arith.subf %488, %0 : vector<16x32xf32>
    %cst_172 = arith.constant 1.250000e+00 : f32
    %490 = vector.broadcast %cst_172 : f32 to vector<16x32xf32>
    %491 = arith.mulf %489, %490 : vector<16x32xf32>
    %492 = arith.mulf %491, %471 : vector<16x32xf32>
    %493 = arith.addf %487, %492 : vector<16x32xf32>
    %cst_173 = arith.constant -2.000000e-01 : f32
    %494 = vector.broadcast %cst_173 : f32 to vector<16x32xf32>
    %495 = arith.subf %0, %494 : vector<16x32xf32>
    %cst_174 = arith.constant 1.250000e+00 : f32
    %496 = vector.broadcast %cst_174 : f32 to vector<16x32xf32>
    %497 = arith.mulf %495, %496 : vector<16x32xf32>
    %498 = arith.mulf %497, %471 : vector<16x32xf32>
    %cst_175 = arith.constant 1.000000e+00 : f32
    %499 = vector.broadcast %cst_175 : f32 to vector<16x32xf32>
    %500 = arith.subf %499, %0 : vector<16x32xf32>
    %cst_176 = arith.constant 1.250000e+00 : f32
    %501 = vector.broadcast %cst_176 : f32 to vector<16x32xf32>
    %502 = arith.mulf %500, %501 : vector<16x32xf32>
    %503 = arith.mulf %502, %482 : vector<16x32xf32>
    %504 = arith.addf %498, %503 : vector<16x32xf32>
    %cst_177 = arith.constant -6.000000e-01 : f32
    %505 = vector.broadcast %cst_177 : f32 to vector<16x32xf32>
    %506 = arith.subf %0, %505 : vector<16x32xf32>
    %cst_178 = arith.constant 0.833333313 : f32
    %507 = vector.broadcast %cst_178 : f32 to vector<16x32xf32>
    %508 = arith.mulf %506, %507 : vector<16x32xf32>
    %509 = arith.mulf %508, %493 : vector<16x32xf32>
    %cst_179 = arith.constant 1.000000e+00 : f32
    %510 = vector.broadcast %cst_179 : f32 to vector<16x32xf32>
    %511 = arith.subf %510, %0 : vector<16x32xf32>
    %cst_180 = arith.constant 0.833333313 : f32
    %512 = vector.broadcast %cst_180 : f32 to vector<16x32xf32>
    %513 = arith.mulf %511, %512 : vector<16x32xf32>
    %514 = arith.mulf %513, %504 : vector<16x32xf32>
    %515 = arith.addf %509, %514 : vector<16x32xf32>
    %c0_181 = arith.constant 0 : index
    %c160 = arith.constant 160 : index
    %516 = vector.load %arg10[%c0_181, %c160] : memref<16x576xf32, #tpu.memory_space<vmem>>, vector<16x32xf32>
    tpu.vector_store %arg10[%c0_181, %c160], %515 {strides = array<i32>} : memref<16x576xf32, #tpu.memory_space<vmem>>, vector<16x32xf32>,
    %cst_182 = arith.constant -2.000000e-01 : f32
    %517 = vector.broadcast %cst_182 : f32 to vector<16x32xf32>
    %518 = arith.cmpf oge, %0, %517 : vector<16x32xf32>
    %cst_183 = arith.constant 2.000000e-01 : f32
    %519 = vector.broadcast %cst_183 : f32 to vector<16x32xf32>
    %520 = arith.cmpf olt, %0, %519 : vector<16x32xf32>
    %521 = arith.andi %518, %520 : vector<16x32xi1>
    %522 = arith.extui %521 : vector<16x32xi1> to vector<16x32xi32>
    %523 = arith.sitofp %522 : vector<16x32xi32> to vector<16x32xf32>
    %cst_184 = arith.constant 2.000000e-01 : f32
    %524 = vector.broadcast %cst_184 : f32 to vector<16x32xf32>
    %525 = arith.cmpf oge, %0, %524 : vector<16x32xf32>
    %cst_185 = arith.constant 6.000000e-01 : f32
    %526 = vector.broadcast %cst_185 : f32 to vector<16x32xf32>
    %527 = arith.cmpf olt, %0, %526 : vector<16x32xf32>
    %528 = arith.andi %525, %527 : vector<16x32xi1>
    %529 = arith.extui %528 : vector<16x32xi1> to vector<16x32xi32>
    %530 = arith.sitofp %529 : vector<16x32xi32> to vector<16x32xf32>
    %cst_186 = arith.constant 6.000000e-01 : f32
    %531 = vector.broadcast %cst_186 : f32 to vector<16x32xf32>
    %532 = arith.cmpf oge, %0, %531 : vector<16x32xf32>
    %cst_187 = arith.constant 1.000000e+00 : f32
    %533 = vector.broadcast %cst_187 : f32 to vector<16x32xf32>
    %534 = arith.cmpf olt, %0, %533 : vector<16x32xf32>
    %535 = arith.andi %532, %534 : vector<16x32xi1>
    %536 = arith.extui %535 : vector<16x32xi1> to vector<16x32xi32>
    %537 = arith.sitofp %536 : vector<16x32xi32> to vector<16x32xf32>
    %cst_188 = arith.constant 1.000000e+00 : f32
    %538 = vector.broadcast %cst_188 : f32 to vector<16x32xf32>
    %539 = arith.cmpf oge, %0, %538 : vector<16x32xf32>
    %cst_189 = arith.constant 1.400000e+00 : f32
    %540 = vector.broadcast %cst_189 : f32 to vector<16x32xf32>
    %541 = arith.cmpf olt, %0, %540 : vector<16x32xf32>
    %542 = arith.andi %539, %541 : vector<16x32xi1>
    %543 = arith.extui %542 : vector<16x32xi1> to vector<16x32xi32>
    %544 = arith.sitofp %543 : vector<16x32xi32> to vector<16x32xf32>
    %cst_190 = arith.constant -2.000000e-01 : f32
    %545 = vector.broadcast %cst_190 : f32 to vector<16x32xf32>
    %546 = arith.subf %0, %545 : vector<16x32xf32>
    %cst_191 = arith.constant 2.500000e+00 : f32
    %547 = vector.broadcast %cst_191 : f32 to vector<16x32xf32>
    %548 = arith.mulf %546, %547 : vector<16x32xf32>
    %549 = arith.mulf %548, %523 : vector<16x32xf32>
    %cst_192 = arith.constant 6.000000e-01 : f32
    %550 = vector.broadcast %cst_192 : f32 to vector<16x32xf32>
    %551 = arith.subf %550, %0 : vector<16x32xf32>
    %cst_193 = arith.constant 2.49999976 : f32
    %552 = vector.broadcast %cst_193 : f32 to vector<16x32xf32>
    %553 = arith.mulf %551, %552 : vector<16x32xf32>
    %554 = arith.mulf %553, %530 : vector<16x32xf32>
    %555 = arith.addf %549, %554 : vector<16x32xf32>
    %cst_194 = arith.constant 2.000000e-01 : f32
    %556 = vector.broadcast %cst_194 : f32 to vector<16x32xf32>
    %557 = arith.subf %0, %556 : vector<16x32xf32>
    %cst_195 = arith.constant 2.49999976 : f32
    %558 = vector.broadcast %cst_195 : f32 to vector<16x32xf32>
    %559 = arith.mulf %557, %558 : vector<16x32xf32>
    %560 = arith.mulf %559, %530 : vector<16x32xf32>
    %cst_196 = arith.constant 1.000000e+00 : f32
    %561 = vector.broadcast %cst_196 : f32 to vector<16x32xf32>
    %562 = arith.subf %561, %0 : vector<16x32xf32>
    %cst_197 = arith.constant 2.50000024 : f32
    %563 = vector.broadcast %cst_197 : f32 to vector<16x32xf32>
    %564 = arith.mulf %562, %563 : vector<16x32xf32>
    %565 = arith.mulf %564, %537 : vector<16x32xf32>
    %566 = arith.addf %560, %565 : vector<16x32xf32>
    %cst_198 = arith.constant 6.000000e-01 : f32
    %567 = vector.broadcast %cst_198 : f32 to vector<16x32xf32>
    %568 = arith.subf %0, %567 : vector<16x32xf32>
    %cst_199 = arith.constant 2.50000024 : f32
    %569 = vector.broadcast %cst_199 : f32 to vector<16x32xf32>
    %570 = arith.mulf %568, %569 : vector<16x32xf32>
    %571 = arith.mulf %570, %537 : vector<16x32xf32>
    %cst_200 = arith.constant 1.400000e+00 : f32
    %572 = vector.broadcast %cst_200 : f32 to vector<16x32xf32>
    %573 = arith.subf %572, %0 : vector<16x32xf32>
    %cst_201 = arith.constant 2.50000024 : f32
    %574 = vector.broadcast %cst_201 : f32 to vector<16x32xf32>
    %575 = arith.mulf %573, %574 : vector<16x32xf32>
    %576 = arith.mulf %575, %544 : vector<16x32xf32>
    %577 = arith.addf %571, %576 : vector<16x32xf32>
    %cst_202 = arith.constant -2.000000e-01 : f32
    %578 = vector.broadcast %cst_202 : f32 to vector<16x32xf32>
    %579 = arith.subf %0, %578 : vector<16x32xf32>
    %cst_203 = arith.constant 1.250000e+00 : f32
    %580 = vector.broadcast %cst_203 : f32 to vector<16x32xf32>
    %581 = arith.mulf %579, %580 : vector<16x32xf32>
    %582 = arith.mulf %581, %555 : vector<16x32xf32>
    %cst_204 = arith.constant 1.000000e+00 : f32
    %583 = vector.broadcast %cst_204 : f32 to vector<16x32xf32>
    %584 = arith.subf %583, %0 : vector<16x32xf32>
    %cst_205 = arith.constant 1.250000e+00 : f32
    %585 = vector.broadcast %cst_205 : f32 to vector<16x32xf32>
    %586 = arith.mulf %584, %585 : vector<16x32xf32>
    %587 = arith.mulf %586, %566 : vector<16x32xf32>
    %588 = arith.addf %582, %587 : vector<16x32xf32>
    %cst_206 = arith.constant 2.000000e-01 : f32
    %589 = vector.broadcast %cst_206 : f32 to vector<16x32xf32>
    %590 = arith.subf %0, %589 : vector<16x32xf32>
    %cst_207 = arith.constant 1.250000e+00 : f32
    %591 = vector.broadcast %cst_207 : f32 to vector<16x32xf32>
    %592 = arith.mulf %590, %591 : vector<16x32xf32>
    %593 = arith.mulf %592, %566 : vector<16x32xf32>
    %cst_208 = arith.constant 1.400000e+00 : f32
    %594 = vector.broadcast %cst_208 : f32 to vector<16x32xf32>
    %595 = arith.subf %594, %0 : vector<16x32xf32>
    %cst_209 = arith.constant 1.25000012 : f32
    %596 = vector.broadcast %cst_209 : f32 to vector<16x32xf32>
    %597 = arith.mulf %595, %596 : vector<16x32xf32>
    %598 = arith.mulf %597, %577 : vector<16x32xf32>
    %599 = arith.addf %593, %598 : vector<16x32xf32>
    %cst_210 = arith.constant -2.000000e-01 : f32
    %600 = vector.broadcast %cst_210 : f32 to vector<16x32xf32>
    %601 = arith.subf %0, %600 : vector<16x32xf32>
    %cst_211 = arith.constant 0.833333313 : f32
    %602 = vector.broadcast %cst_211 : f32 to vector<16x32xf32>
    %603 = arith.mulf %601, %602 : vector<16x32xf32>
    %604 = arith.mulf %603, %588 : vector<16x32xf32>
    %cst_212 = arith.constant 1.400000e+00 : f32
    %605 = vector.broadcast %cst_212 : f32 to vector<16x32xf32>
    %606 = arith.subf %605, %0 : vector<16x32xf32>
    %cst_213 = arith.constant 0.833333373 : f32
    %607 = vector.broadcast %cst_213 : f32 to vector<16x32xf32>
    %608 = arith.mulf %606, %607 : vector<16x32xf32>
    %609 = arith.mulf %608, %599 : vector<16x32xf32>
    %610 = arith.addf %604, %609 : vector<16x32xf32>
    %c0_214 = arith.constant 0 : index
    %c192 = arith.constant 192 : index
    %611 = vector.load %arg10[%c0_214, %c192] : memref<16x576xf32, #tpu.memory_space<vmem>>, vector<16x32xf32>
    tpu.vector_store %arg10[%c0_214, %c192], %610 {strides = array<i32>} : memref<16x576xf32, #tpu.memory_space<vmem>>, vector<16x32xf32>,
    %cst_215 = arith.constant 2.000000e-01 : f32
    %612 = vector.broadcast %cst_215 : f32 to vector<16x32xf32>
    %613 = arith.cmpf oge, %0, %612 : vector<16x32xf32>
    %cst_216 = arith.constant 6.000000e-01 : f32
    %614 = vector.broadcast %cst_216 : f32 to vector<16x32xf32>
    %615 = arith.cmpf olt, %0, %614 : vector<16x32xf32>
    %616 = arith.andi %613, %615 : vector<16x32xi1>
    %617 = arith.extui %616 : vector<16x32xi1> to vector<16x32xi32>
    %618 = arith.sitofp %617 : vector<16x32xi32> to vector<16x32xf32>
    %cst_217 = arith.constant 6.000000e-01 : f32
    %619 = vector.broadcast %cst_217 : f32 to vector<16x32xf32>
    %620 = arith.cmpf oge, %0, %619 : vector<16x32xf32>
    %cst_218 = arith.constant 1.000000e+00 : f32
    %621 = vector.broadcast %cst_218 : f32 to vector<16x32xf32>
    %622 = arith.cmpf olt, %0, %621 : vector<16x32xf32>
    %623 = arith.andi %620, %622 : vector<16x32xi1>
    %624 = arith.extui %623 : vector<16x32xi1> to vector<16x32xi32>
    %625 = arith.sitofp %624 : vector<16x32xi32> to vector<16x32xf32>
    %cst_219 = arith.constant 1.000000e+00 : f32
    %626 = vector.broadcast %cst_219 : f32 to vector<16x32xf32>
    %627 = arith.cmpf oge, %0, %626 : vector<16x32xf32>
    %cst_220 = arith.constant 1.400000e+00 : f32
    %628 = vector.broadcast %cst_220 : f32 to vector<16x32xf32>
    %629 = arith.cmpf olt, %0, %628 : vector<16x32xf32>
    %630 = arith.andi %627, %629 : vector<16x32xi1>
    %631 = arith.extui %630 : vector<16x32xi1> to vector<16x32xi32>
    %632 = arith.sitofp %631 : vector<16x32xi32> to vector<16x32xf32>
    %cst_221 = arith.constant 1.400000e+00 : f32
    %633 = vector.broadcast %cst_221 : f32 to vector<16x32xf32>
    %634 = arith.cmpf oge, %0, %633 : vector<16x32xf32>
    %cst_222 = arith.constant 1.800000e+00 : f32
    %635 = vector.broadcast %cst_222 : f32 to vector<16x32xf32>
    %636 = arith.cmpf olt, %0, %635 : vector<16x32xf32>
    %637 = arith.andi %634, %636 : vector<16x32xi1>
    %638 = arith.extui %637 : vector<16x32xi1> to vector<16x32xi32>
    %639 = arith.sitofp %638 : vector<16x32xi32> to vector<16x32xf32>
    %cst_223 = arith.constant 2.000000e-01 : f32
    %640 = vector.broadcast %cst_223 : f32 to vector<16x32xf32>
    %641 = arith.subf %0, %640 : vector<16x32xf32>
    %cst_224 = arith.constant 2.49999976 : f32
    %642 = vector.broadcast %cst_224 : f32 to vector<16x32xf32>
    %643 = arith.mulf %641, %642 : vector<16x32xf32>
    %644 = arith.mulf %643, %618 : vector<16x32xf32>
    %cst_225 = arith.constant 1.000000e+00 : f32
    %645 = vector.broadcast %cst_225 : f32 to vector<16x32xf32>
    %646 = arith.subf %645, %0 : vector<16x32xf32>
    %cst_226 = arith.constant 2.50000024 : f32
    %647 = vector.broadcast %cst_226 : f32 to vector<16x32xf32>
    %648 = arith.mulf %646, %647 : vector<16x32xf32>
    %649 = arith.mulf %648, %625 : vector<16x32xf32>
    %650 = arith.addf %644, %649 : vector<16x32xf32>
    %cst_227 = arith.constant 6.000000e-01 : f32
    %651 = vector.broadcast %cst_227 : f32 to vector<16x32xf32>
    %652 = arith.subf %0, %651 : vector<16x32xf32>
    %cst_228 = arith.constant 2.50000024 : f32
    %653 = vector.broadcast %cst_228 : f32 to vector<16x32xf32>
    %654 = arith.mulf %652, %653 : vector<16x32xf32>
    %655 = arith.mulf %654, %625 : vector<16x32xf32>
    %cst_229 = arith.constant 1.400000e+00 : f32
    %656 = vector.broadcast %cst_229 : f32 to vector<16x32xf32>
    %657 = arith.subf %656, %0 : vector<16x32xf32>
    %cst_230 = arith.constant 2.50000024 : f32
    %658 = vector.broadcast %cst_230 : f32 to vector<16x32xf32>
    %659 = arith.mulf %657, %658 : vector<16x32xf32>
    %660 = arith.mulf %659, %632 : vector<16x32xf32>
    %661 = arith.addf %655, %660 : vector<16x32xf32>
    %cst_231 = arith.constant 1.000000e+00 : f32
    %662 = vector.broadcast %cst_231 : f32 to vector<16x32xf32>
    %663 = arith.subf %0, %662 : vector<16x32xf32>
    %cst_232 = arith.constant 2.50000024 : f32
    %664 = vector.broadcast %cst_232 : f32 to vector<16x32xf32>
    %665 = arith.mulf %663, %664 : vector<16x32xf32>
    %666 = arith.mulf %665, %632 : vector<16x32xf32>
    %cst_233 = arith.constant 1.800000e+00 : f32
    %667 = vector.broadcast %cst_233 : f32 to vector<16x32xf32>
    %668 = arith.subf %667, %0 : vector<16x32xf32>
    %cst_234 = arith.constant 2.50000024 : f32
    %669 = vector.broadcast %cst_234 : f32 to vector<16x32xf32>
    %670 = arith.mulf %668, %669 : vector<16x32xf32>
    %671 = arith.mulf %670, %639 : vector<16x32xf32>
    %672 = arith.addf %666, %671 : vector<16x32xf32>
    %cst_235 = arith.constant 2.000000e-01 : f32
    %673 = vector.broadcast %cst_235 : f32 to vector<16x32xf32>
    %674 = arith.subf %0, %673 : vector<16x32xf32>
    %cst_236 = arith.constant 1.250000e+00 : f32
    %675 = vector.broadcast %cst_236 : f32 to vector<16x32xf32>
    %676 = arith.mulf %674, %675 : vector<16x32xf32>
    %677 = arith.mulf %676, %650 : vector<16x32xf32>
    %cst_237 = arith.constant 1.400000e+00 : f32
    %678 = vector.broadcast %cst_237 : f32 to vector<16x32xf32>
    %679 = arith.subf %678, %0 : vector<16x32xf32>
    %cst_238 = arith.constant 1.25000012 : f32
    %680 = vector.broadcast %cst_238 : f32 to vector<16x32xf32>
    %681 = arith.mulf %679, %680 : vector<16x32xf32>
    %682 = arith.mulf %681, %661 : vector<16x32xf32>
    %683 = arith.addf %677, %682 : vector<16x32xf32>
    %cst_239 = arith.constant 6.000000e-01 : f32
    %684 = vector.broadcast %cst_239 : f32 to vector<16x32xf32>
    %685 = arith.subf %0, %684 : vector<16x32xf32>
    %cst_240 = arith.constant 1.25000012 : f32
    %686 = vector.broadcast %cst_240 : f32 to vector<16x32xf32>
    %687 = arith.mulf %685, %686 : vector<16x32xf32>
    %688 = arith.mulf %687, %661 : vector<16x32xf32>
    %cst_241 = arith.constant 1.800000e+00 : f32
    %689 = vector.broadcast %cst_241 : f32 to vector<16x32xf32>
    %690 = arith.subf %689, %0 : vector<16x32xf32>
    %cst_242 = arith.constant 1.25000012 : f32
    %691 = vector.broadcast %cst_242 : f32 to vector<16x32xf32>
    %692 = arith.mulf %690, %691 : vector<16x32xf32>
    %693 = arith.mulf %692, %672 : vector<16x32xf32>
    %694 = arith.addf %688, %693 : vector<16x32xf32>
    %cst_243 = arith.constant 2.000000e-01 : f32
    %695 = vector.broadcast %cst_243 : f32 to vector<16x32xf32>
    %696 = arith.subf %0, %695 : vector<16x32xf32>
    %cst_244 = arith.constant 0.833333373 : f32
    %697 = vector.broadcast %cst_244 : f32 to vector<16x32xf32>
    %698 = arith.mulf %696, %697 : vector<16x32xf32>
    %699 = arith.mulf %698, %683 : vector<16x32xf32>
    %cst_245 = arith.constant 1.800000e+00 : f32
    %700 = vector.broadcast %cst_245 : f32 to vector<16x32xf32>
    %701 = arith.subf %700, %0 : vector<16x32xf32>
    %cst_246 = arith.constant 0.833333373 : f32
    %702 = vector.broadcast %cst_246 : f32 to vector<16x32xf32>
    %703 = arith.mulf %701, %702 : vector<16x32xf32>
    %704 = arith.mulf %703, %694 : vector<16x32xf32>
    %705 = arith.addf %699, %704 : vector<16x32xf32>
    %c0_247 = arith.constant 0 : index
    %c224 = arith.constant 224 : index
    %706 = vector.load %arg10[%c0_247, %c224] : memref<16x576xf32, #tpu.memory_space<vmem>>, vector<16x32xf32>
    tpu.vector_store %arg10[%c0_247, %c224], %705 {strides = array<i32>} : memref<16x576xf32, #tpu.memory_space<vmem>>, vector<16x32xf32>,
    %cst_248 = arith.constant 6.000000e-01 : f32
    %707 = vector.broadcast %cst_248 : f32 to vector<16x32xf32>
    %708 = arith.cmpf oge, %0, %707 : vector<16x32xf32>
    %cst_249 = arith.constant 1.000000e+00 : f32
    %709 = vector.broadcast %cst_249 : f32 to vector<16x32xf32>
    %710 = arith.cmpf olt, %0, %709 : vector<16x32xf32>
    %711 = arith.andi %708, %710 : vector<16x32xi1>
    %712 = arith.extui %711 : vector<16x32xi1> to vector<16x32xi32>
    %713 = arith.sitofp %712 : vector<16x32xi32> to vector<16x32xf32>
    %cst_250 = arith.constant 1.000000e+00 : f32
    %714 = vector.broadcast %cst_250 : f32 to vector<16x32xf32>
    %715 = arith.cmpf oge, %0, %714 : vector<16x32xf32>
    %cst_251 = arith.constant 1.400000e+00 : f32
    %716 = vector.broadcast %cst_251 : f32 to vector<16x32xf32>
    %717 = arith.cmpf olt, %0, %716 : vector<16x32xf32>
    %718 = arith.andi %715, %717 : vector<16x32xi1>
    %719 = arith.extui %718 : vector<16x32xi1> to vector<16x32xi32>
    %720 = arith.sitofp %719 : vector<16x32xi32> to vector<16x32xf32>
    %cst_252 = arith.constant 1.400000e+00 : f32
    %721 = vector.broadcast %cst_252 : f32 to vector<16x32xf32>
    %722 = arith.cmpf oge, %0, %721 : vector<16x32xf32>
    %cst_253 = arith.constant 1.800000e+00 : f32
    %723 = vector.broadcast %cst_253 : f32 to vector<16x32xf32>
    %724 = arith.cmpf olt, %0, %723 : vector<16x32xf32>
    %725 = arith.andi %722, %724 : vector<16x32xi1>
    %726 = arith.extui %725 : vector<16x32xi1> to vector<16x32xi32>
    %727 = arith.sitofp %726 : vector<16x32xi32> to vector<16x32xf32>
    %cst_254 = arith.constant 1.800000e+00 : f32
    %728 = vector.broadcast %cst_254 : f32 to vector<16x32xf32>
    %729 = arith.cmpf oge, %0, %728 : vector<16x32xf32>
    %cst_255 = arith.constant 2.200000e+00 : f32
    %730 = vector.broadcast %cst_255 : f32 to vector<16x32xf32>
    %731 = arith.cmpf olt, %0, %730 : vector<16x32xf32>
    %732 = arith.andi %729, %731 : vector<16x32xi1>
    %733 = arith.extui %732 : vector<16x32xi1> to vector<16x32xi32>
    %734 = arith.sitofp %733 : vector<16x32xi32> to vector<16x32xf32>
    %cst_256 = arith.constant 6.000000e-01 : f32
    %735 = vector.broadcast %cst_256 : f32 to vector<16x32xf32>
    %736 = arith.subf %0, %735 : vector<16x32xf32>
    %cst_257 = arith.constant 2.50000024 : f32
    %737 = vector.broadcast %cst_257 : f32 to vector<16x32xf32>
    %738 = arith.mulf %736, %737 : vector<16x32xf32>
    %739 = arith.mulf %738, %713 : vector<16x32xf32>
    %cst_258 = arith.constant 1.400000e+00 : f32
    %740 = vector.broadcast %cst_258 : f32 to vector<16x32xf32>
    %741 = arith.subf %740, %0 : vector<16x32xf32>
    %cst_259 = arith.constant 2.50000024 : f32
    %742 = vector.broadcast %cst_259 : f32 to vector<16x32xf32>
    %743 = arith.mulf %741, %742 : vector<16x32xf32>
    %744 = arith.mulf %743, %720 : vector<16x32xf32>
    %745 = arith.addf %739, %744 : vector<16x32xf32>
    %cst_260 = arith.constant 1.000000e+00 : f32
    %746 = vector.broadcast %cst_260 : f32 to vector<16x32xf32>
    %747 = arith.subf %0, %746 : vector<16x32xf32>
    %cst_261 = arith.constant 2.50000024 : f32
    %748 = vector.broadcast %cst_261 : f32 to vector<16x32xf32>
    %749 = arith.mulf %747, %748 : vector<16x32xf32>
    %750 = arith.mulf %749, %720 : vector<16x32xf32>
    %cst_262 = arith.constant 1.800000e+00 : f32
    %751 = vector.broadcast %cst_262 : f32 to vector<16x32xf32>
    %752 = arith.subf %751, %0 : vector<16x32xf32>
    %cst_263 = arith.constant 2.50000024 : f32
    %753 = vector.broadcast %cst_263 : f32 to vector<16x32xf32>
    %754 = arith.mulf %752, %753 : vector<16x32xf32>
    %755 = arith.mulf %754, %727 : vector<16x32xf32>
    %756 = arith.addf %750, %755 : vector<16x32xf32>
    %cst_264 = arith.constant 1.400000e+00 : f32
    %757 = vector.broadcast %cst_264 : f32 to vector<16x32xf32>
    %758 = arith.subf %0, %757 : vector<16x32xf32>
    %cst_265 = arith.constant 2.50000024 : f32
    %759 = vector.broadcast %cst_265 : f32 to vector<16x32xf32>
    %760 = arith.mulf %758, %759 : vector<16x32xf32>
    %761 = arith.mulf %760, %727 : vector<16x32xf32>
    %cst_266 = arith.constant 2.200000e+00 : f32
    %762 = vector.broadcast %cst_266 : f32 to vector<16x32xf32>
    %763 = arith.subf %762, %0 : vector<16x32xf32>
    %cst_267 = arith.constant 2.49999952 : f32
    %764 = vector.broadcast %cst_267 : f32 to vector<16x32xf32>
    %765 = arith.mulf %763, %764 : vector<16x32xf32>
    %766 = arith.mulf %765, %734 : vector<16x32xf32>
    %767 = arith.addf %761, %766 : vector<16x32xf32>
    %cst_268 = arith.constant 6.000000e-01 : f32
    %768 = vector.broadcast %cst_268 : f32 to vector<16x32xf32>
    %769 = arith.subf %0, %768 : vector<16x32xf32>
    %cst_269 = arith.constant 1.25000012 : f32
    %770 = vector.broadcast %cst_269 : f32 to vector<16x32xf32>
    %771 = arith.mulf %769, %770 : vector<16x32xf32>
    %772 = arith.mulf %771, %745 : vector<16x32xf32>
    %cst_270 = arith.constant 1.800000e+00 : f32
    %773 = vector.broadcast %cst_270 : f32 to vector<16x32xf32>
    %774 = arith.subf %773, %0 : vector<16x32xf32>
    %cst_271 = arith.constant 1.25000012 : f32
    %775 = vector.broadcast %cst_271 : f32 to vector<16x32xf32>
    %776 = arith.mulf %774, %775 : vector<16x32xf32>
    %777 = arith.mulf %776, %756 : vector<16x32xf32>
    %778 = arith.addf %772, %777 : vector<16x32xf32>
    %cst_272 = arith.constant 1.000000e+00 : f32
    %779 = vector.broadcast %cst_272 : f32 to vector<16x32xf32>
    %780 = arith.subf %0, %779 : vector<16x32xf32>
    %cst_273 = arith.constant 1.25000012 : f32
    %781 = vector.broadcast %cst_273 : f32 to vector<16x32xf32>
    %782 = arith.mulf %780, %781 : vector<16x32xf32>
    %783 = arith.mulf %782, %756 : vector<16x32xf32>
    %cst_274 = arith.constant 2.200000e+00 : f32
    %784 = vector.broadcast %cst_274 : f32 to vector<16x32xf32>
    %785 = arith.subf %784, %0 : vector<16x32xf32>
    %cst_275 = arith.constant 1.24999988 : f32
    %786 = vector.broadcast %cst_275 : f32 to vector<16x32xf32>
    %787 = arith.mulf %785, %786 : vector<16x32xf32>
    %788 = arith.mulf %787, %767 : vector<16x32xf32>
    %789 = arith.addf %783, %788 : vector<16x32xf32>
    %cst_276 = arith.constant 6.000000e-01 : f32
    %790 = vector.broadcast %cst_276 : f32 to vector<16x32xf32>
    %791 = arith.subf %0, %790 : vector<16x32xf32>
    %cst_277 = arith.constant 0.833333373 : f32
    %792 = vector.broadcast %cst_277 : f32 to vector<16x32xf32>
    %793 = arith.mulf %791, %792 : vector<16x32xf32>
    %794 = arith.mulf %793, %778 : vector<16x32xf32>
    %cst_278 = arith.constant 2.200000e+00 : f32
    %795 = vector.broadcast %cst_278 : f32 to vector<16x32xf32>
    %796 = arith.subf %795, %0 : vector<16x32xf32>
    %cst_279 = arith.constant 0.833333313 : f32
    %797 = vector.broadcast %cst_279 : f32 to vector<16x32xf32>
    %798 = arith.mulf %796, %797 : vector<16x32xf32>
    %799 = arith.mulf %798, %789 : vector<16x32xf32>
    %800 = arith.addf %794, %799 : vector<16x32xf32>
    %c0_280 = arith.constant 0 : index
    %c256 = arith.constant 256 : index
    %801 = vector.load %arg10[%c0_280, %c256] : memref<16x576xf32, #tpu.memory_space<vmem>>, vector<16x32xf32>
    tpu.vector_store %arg10[%c0_280, %c256], %800 {strides = array<i32>} : memref<16x576xf32, #tpu.memory_space<vmem>>, vector<16x32xf32>,
    %c0_281 = arith.constant 0 : index
    %c0_282 = arith.constant 0 : index
    %802 = vector.load %arg10[%c0_281, %c0_282] : memref<16x576xf32, #tpu.memory_space<vmem>>, vector<16x288xf32>
    %c0_283 = arith.constant 0 : index
    %c0_284 = arith.constant 0 : index
    %803 = vector.load %arg2[%c0_283, %c0_284] : memref<288x64xf32, #tpu.memory_space<vmem>>, vector<288x64xf32>
    %cst_285 = arith.constant dense<0.000000e+00> : vector<16x64xf32>
    %804 = tpu.matmul %802, %803, %cst_285 {dimension_numbers = #tpu.dot_dimension_numbers<[1], [0], [0], [1], [0, 0, 1, 1], [], []>} : vector<16x288xf32>, vector<288x64xf32>, vector<16x64xf32> -> vector<16x64xf32>
    %cst_286 = arith.constant dense<0.000000e+00> : vector<16xf32>
    %805 = vector.multi_reduction <add>, %804, %cst_286 [1] : vector<16x64xf32> to vector<16xf32>
    %806 = vector.shape_cast %805 : vector<16xf32> to vector<16x1xf32>
    %cst_287 = arith.constant 6.400000e+01 : f32
    %807 = vector.broadcast %cst_287 : f32 to vector<16x1xf32>
    %808 = arith.divf %806, %807 : vector<16x1xf32>
    %809 = vector.broadcast %808 : vector<16x1xf32> to vector<16x64xf32>
    %810 = arith.subf %804, %809 : vector<16x64xf32>
    %811 = arith.mulf %810, %810 : vector<16x64xf32>
    %cst_288 = arith.constant dense<0.000000e+00> : vector<16xf32>
    %812 = vector.multi_reduction <add>, %811, %cst_288 [1] : vector<16x64xf32> to vector<16xf32>
    %813 = vector.shape_cast %812 : vector<16xf32> to vector<16x1xf32>
    %cst_289 = arith.constant 6.400000e+01 : f32
    %814 = vector.broadcast %cst_289 : f32 to vector<16x1xf32>
    %815 = arith.divf %813, %814 : vector<16x1xf32>
    %816 = vector.broadcast %808 : vector<16x1xf32> to vector<16x64xf32>
    %817 = arith.subf %804, %816 : vector<16x64xf32>
    %cst_290 = arith.constant 9.99999974E-6 : f32
    %818 = vector.broadcast %cst_290 : f32 to vector<16x1xf32>
    %819 = arith.addf %815, %818 : vector<16x1xf32>
    %820 = math.rsqrt %819 : vector<16x1xf32>
    %821 = vector.broadcast %820 : vector<16x1xf32> to vector<16x64xf32>
    %822 = arith.mulf %817, %821 : vector<16x64xf32>
    %c0_291 = arith.constant 0 : index
    %c0_292 = arith.constant 0 : index
    %823 = vector.load %arg3[%c0_291, %c0_292] : memref<1x64xf32, #tpu.memory_space<vmem>>, vector<1x64xf32>
    %824 = vector.broadcast %823 : vector<1x64xf32> to vector<16x64xf32>
    %825 = arith.mulf %822, %824 : vector<16x64xf32>
    %c0_293 = arith.constant 0 : index
    %c0_294 = arith.constant 0 : index
    %826 = vector.load %arg4[%c0_293, %c0_294] : memref<1x64xf32, #tpu.memory_space<vmem>>, vector<1x64xf32>
    %827 = vector.broadcast %826 : vector<1x64xf32> to vector<16x64xf32>
    %828 = arith.addf %825, %827 : vector<16x64xf32>
    %c0_295 = arith.constant 0 : index
    %829 = memref.load %arg8[%c0_295] : memref<2xf32, #tpu.memory_space<smem>>
    %cst_296 = arith.constant 0.000000e+00 : f32
    %830 = vector.broadcast %cst_296 : f32 to vector<16x64xf32>
    %831 = arith.cmpf oge, %828, %830 : vector<16x64xf32>
    %832 = vector.broadcast %829 : f32 to vector<16x64xf32>
    %833 = arith.mulf %832, %828 : vector<16x64xf32>
    %834 = arith.select %831, %828, %833 : vector<16x64xi1>, vector<16x64xf32>
    %cst_297 = arith.constant 5.000000e-01 : f32
    %835 = vector.broadcast %cst_297 : f32 to vector<16x64xf32>
    %836 = arith.mulf %835, %834 : vector<16x64xf32>
    %cst_298 = arith.constant 0.707106769 : f32
    %837 = vector.broadcast %cst_298 : f32 to vector<16x64xf32>
    %838 = arith.mulf %834, %837 : vector<16x64xf32>
    %839 = math.absf %838 : vector<16x64xf32>
    %cst_299 = arith.constant 0.327591091 : f32
    %840 = vector.broadcast %cst_299 : f32 to vector<16x64xf32>
    %841 = arith.mulf %840, %839 : vector<16x64xf32>
    %cst_300 = arith.constant 1.000000e+00 : f32
    %842 = vector.broadcast %cst_300 : f32 to vector<16x64xf32>
    %843 = arith.addf %842, %841 : vector<16x64xf32>
    %cst_301 = arith.constant 1.000000e+00 : f32
    %844 = vector.broadcast %cst_301 : f32 to vector<16x64xf32>
    %845 = arith.divf %844, %843 : vector<16x64xf32>
    %cst_302 = arith.constant 1.06140542 : f32
    %846 = vector.broadcast %cst_302 : f32 to vector<16x64xf32>
    %847 = arith.mulf %846, %845 : vector<16x64xf32>
    %cst_303 = arith.constant -1.45315206 : f32
    %848 = vector.broadcast %cst_303 : f32 to vector<16x64xf32>
    %849 = arith.addf %847, %848 : vector<16x64xf32>
    %850 = arith.mulf %849, %845 : vector<16x64xf32>
    %cst_304 = arith.constant 1.42141378 : f32
    %851 = vector.broadcast %cst_304 : f32 to vector<16x64xf32>
    %852 = arith.addf %850, %851 : vector<16x64xf32>
    %853 = arith.mulf %852, %845 : vector<16x64xf32>
    %cst_305 = arith.constant -0.284496725 : f32
    %854 = vector.broadcast %cst_305 : f32 to vector<16x64xf32>
    %855 = arith.addf %853, %854 : vector<16x64xf32>
    %856 = arith.mulf %855, %845 : vector<16x64xf32>
    %cst_306 = arith.constant 0.254829586 : f32
    %857 = vector.broadcast %cst_306 : f32 to vector<16x64xf32>
    %858 = arith.addf %856, %857 : vector<16x64xf32>
    %859 = arith.mulf %858, %845 : vector<16x64xf32>
    %cst_307 = arith.constant 0.000000e+00 : f32
    %860 = vector.broadcast %cst_307 : f32 to vector<16x64xf32>
    %861 = arith.subf %860, %839 : vector<16x64xf32>
    %862 = arith.mulf %861, %839 : vector<16x64xf32>
    %863 = math.exp %862 : vector<16x64xf32>
    %864 = arith.mulf %859, %863 : vector<16x64xf32>
    %cst_308 = arith.constant 1.000000e+00 : f32
    %865 = vector.broadcast %cst_308 : f32 to vector<16x64xf32>
    %866 = arith.subf %865, %864 : vector<16x64xf32>
    %cst_309 = arith.constant 0.000000e+00 : f32
    %867 = vector.broadcast %cst_309 : f32 to vector<16x64xf32>
    %868 = arith.cmpf oge, %838, %867 : vector<16x64xf32>
    %cst_310 = arith.constant 0.000000e+00 : f32
    %869 = vector.broadcast %cst_310 : f32 to vector<16x64xf32>
    %870 = arith.subf %869, %866 : vector<16x64xf32>
    %871 = arith.select %868, %866, %870 : vector<16x64xi1>, vector<16x64xf32>
    %cst_311 = arith.constant 1.000000e+00 : f32
    %872 = vector.broadcast %cst_311 : f32 to vector<16x64xf32>
    %873 = arith.addf %872, %871 : vector<16x64xf32>
    %874 = arith.mulf %836, %873 : vector<16x64xf32>
    %c0_312 = arith.constant 0 : index
    %c0_313 = arith.constant 0 : index
    %875 = vector.load %arg10[%c0_312, %c0_313] : memref<16x576xf32, #tpu.memory_space<vmem>>, vector<16x64xf32>
    tpu.vector_store %arg10[%c0_312, %c0_313], %874 {strides = array<i32>} : memref<16x576xf32, #tpu.memory_space<vmem>>, vector<16x64xf32>,
    %cst_314 = arith.constant -2.200000e+00 : f32
    %876 = vector.broadcast %cst_314 : f32 to vector<16x64xf32>
    %877 = arith.cmpf oge, %834, %876 : vector<16x64xf32>
    %cst_315 = arith.constant -1.800000e+00 : f32
    %878 = vector.broadcast %cst_315 : f32 to vector<16x64xf32>
    %879 = arith.cmpf olt, %834, %878 : vector<16x64xf32>
    %880 = arith.andi %877, %879 : vector<16x64xi1>
    %881 = arith.extui %880 : vector<16x64xi1> to vector<16x64xi32>
    %882 = arith.sitofp %881 : vector<16x64xi32> to vector<16x64xf32>
    %cst_316 = arith.constant -1.800000e+00 : f32
    %883 = vector.broadcast %cst_316 : f32 to vector<16x64xf32>
    %884 = arith.cmpf oge, %834, %883 : vector<16x64xf32>
    %cst_317 = arith.constant -1.400000e+00 : f32
    %885 = vector.broadcast %cst_317 : f32 to vector<16x64xf32>
    %886 = arith.cmpf olt, %834, %885 : vector<16x64xf32>
    %887 = arith.andi %884, %886 : vector<16x64xi1>
    %888 = arith.extui %887 : vector<16x64xi1> to vector<16x64xi32>
    %889 = arith.sitofp %888 : vector<16x64xi32> to vector<16x64xf32>
    %cst_318 = arith.constant -1.400000e+00 : f32
    %890 = vector.broadcast %cst_318 : f32 to vector<16x64xf32>
    %891 = arith.cmpf oge, %834, %890 : vector<16x64xf32>
    %cst_319 = arith.constant -1.000000e+00 : f32
    %892 = vector.broadcast %cst_319 : f32 to vector<16x64xf32>
    %893 = arith.cmpf olt, %834, %892 : vector<16x64xf32>
    %894 = arith.andi %891, %893 : vector<16x64xi1>
    %895 = arith.extui %894 : vector<16x64xi1> to vector<16x64xi32>
    %896 = arith.sitofp %895 : vector<16x64xi32> to vector<16x64xf32>
    %cst_320 = arith.constant -1.000000e+00 : f32
    %897 = vector.broadcast %cst_320 : f32 to vector<16x64xf32>
    %898 = arith.cmpf oge, %834, %897 : vector<16x64xf32>
    %cst_321 = arith.constant -6.000000e-01 : f32
    %899 = vector.broadcast %cst_321 : f32 to vector<16x64xf32>
    %900 = arith.cmpf olt, %834, %899 : vector<16x64xf32>
    %901 = arith.andi %898, %900 : vector<16x64xi1>
    %902 = arith.extui %901 : vector<16x64xi1> to vector<16x64xi32>
    %903 = arith.sitofp %902 : vector<16x64xi32> to vector<16x64xf32>
    %cst_322 = arith.constant -2.200000e+00 : f32
    %904 = vector.broadcast %cst_322 : f32 to vector<16x64xf32>
    %905 = arith.subf %834, %904 : vector<16x64xf32>
    %cst_323 = arith.constant 2.49999952 : f32
    %906 = vector.broadcast %cst_323 : f32 to vector<16x64xf32>
    %907 = arith.mulf %905, %906 : vector<16x64xf32>
    %908 = arith.mulf %907, %882 : vector<16x64xf32>
    %cst_324 = arith.constant -1.400000e+00 : f32
    %909 = vector.broadcast %cst_324 : f32 to vector<16x64xf32>
    %910 = arith.subf %909, %834 : vector<16x64xf32>
    %cst_325 = arith.constant 2.50000024 : f32
    %911 = vector.broadcast %cst_325 : f32 to vector<16x64xf32>
    %912 = arith.mulf %910, %911 : vector<16x64xf32>
    %913 = arith.mulf %912, %889 : vector<16x64xf32>
    %914 = arith.addf %908, %913 : vector<16x64xf32>
    %cst_326 = arith.constant -1.800000e+00 : f32
    %915 = vector.broadcast %cst_326 : f32 to vector<16x64xf32>
    %916 = arith.subf %834, %915 : vector<16x64xf32>
    %cst_327 = arith.constant 2.50000024 : f32
    %917 = vector.broadcast %cst_327 : f32 to vector<16x64xf32>
    %918 = arith.mulf %916, %917 : vector<16x64xf32>
    %919 = arith.mulf %918, %889 : vector<16x64xf32>
    %cst_328 = arith.constant -1.000000e+00 : f32
    %920 = vector.broadcast %cst_328 : f32 to vector<16x64xf32>
    %921 = arith.subf %920, %834 : vector<16x64xf32>
    %cst_329 = arith.constant 2.50000024 : f32
    %922 = vector.broadcast %cst_329 : f32 to vector<16x64xf32>
    %923 = arith.mulf %921, %922 : vector<16x64xf32>
    %924 = arith.mulf %923, %896 : vector<16x64xf32>
    %925 = arith.addf %919, %924 : vector<16x64xf32>
    %cst_330 = arith.constant -1.400000e+00 : f32
    %926 = vector.broadcast %cst_330 : f32 to vector<16x64xf32>
    %927 = arith.subf %834, %926 : vector<16x64xf32>
    %cst_331 = arith.constant 2.50000024 : f32
    %928 = vector.broadcast %cst_331 : f32 to vector<16x64xf32>
    %929 = arith.mulf %927, %928 : vector<16x64xf32>
    %930 = arith.mulf %929, %896 : vector<16x64xf32>
    %cst_332 = arith.constant -6.000000e-01 : f32
    %931 = vector.broadcast %cst_332 : f32 to vector<16x64xf32>
    %932 = arith.subf %931, %834 : vector<16x64xf32>
    %cst_333 = arith.constant 2.50000024 : f32
    %933 = vector.broadcast %cst_333 : f32 to vector<16x64xf32>
    %934 = arith.mulf %932, %933 : vector<16x64xf32>
    %935 = arith.mulf %934, %903 : vector<16x64xf32>
    %936 = arith.addf %930, %935 : vector<16x64xf32>
    %cst_334 = arith.constant -2.200000e+00 : f32
    %937 = vector.broadcast %cst_334 : f32 to vector<16x64xf32>
    %938 = arith.subf %834, %937 : vector<16x64xf32>
    %cst_335 = arith.constant 1.24999988 : f32
    %939 = vector.broadcast %cst_335 : f32 to vector<16x64xf32>
    %940 = arith.mulf %938, %939 : vector<16x64xf32>
    %941 = arith.mulf %940, %914 : vector<16x64xf32>
    %cst_336 = arith.constant -1.000000e+00 : f32
    %942 = vector.broadcast %cst_336 : f32 to vector<16x64xf32>
    %943 = arith.subf %942, %834 : vector<16x64xf32>
    %cst_337 = arith.constant 1.25000012 : f32
    %944 = vector.broadcast %cst_337 : f32 to vector<16x64xf32>
    %945 = arith.mulf %943, %944 : vector<16x64xf32>
    %946 = arith.mulf %945, %925 : vector<16x64xf32>
    %947 = arith.addf %941, %946 : vector<16x64xf32>
    %cst_338 = arith.constant -1.800000e+00 : f32
    %948 = vector.broadcast %cst_338 : f32 to vector<16x64xf32>
    %949 = arith.subf %834, %948 : vector<16x64xf32>
    %cst_339 = arith.constant 1.25000012 : f32
    %950 = vector.broadcast %cst_339 : f32 to vector<16x64xf32>
    %951 = arith.mulf %949, %950 : vector<16x64xf32>
    %952 = arith.mulf %951, %925 : vector<16x64xf32>
    %cst_340 = arith.constant -6.000000e-01 : f32
    %953 = vector.broadcast %cst_340 : f32 to vector<16x64xf32>
    %954 = arith.subf %953, %834 : vector<16x64xf32>
    %cst_341 = arith.constant 1.25000012 : f32
    %955 = vector.broadcast %cst_341 : f32 to vector<16x64xf32>
    %956 = arith.mulf %954, %955 : vector<16x64xf32>
    %957 = arith.mulf %956, %936 : vector<16x64xf32>
    %958 = arith.addf %952, %957 : vector<16x64xf32>
    %cst_342 = arith.constant -2.200000e+00 : f32
    %959 = vector.broadcast %cst_342 : f32 to vector<16x64xf32>
    %960 = arith.subf %834, %959 : vector<16x64xf32>
    %cst_343 = arith.constant 0.833333313 : f32
    %961 = vector.broadcast %cst_343 : f32 to vector<16x64xf32>
    %962 = arith.mulf %960, %961 : vector<16x64xf32>
    %963 = arith.mulf %962, %947 : vector<16x64xf32>
    %cst_344 = arith.constant -6.000000e-01 : f32
    %964 = vector.broadcast %cst_344 : f32 to vector<16x64xf32>
    %965 = arith.subf %964, %834 : vector<16x64xf32>
    %cst_345 = arith.constant 0.833333373 : f32
    %966 = vector.broadcast %cst_345 : f32 to vector<16x64xf32>
    %967 = arith.mulf %965, %966 : vector<16x64xf32>
    %968 = arith.mulf %967, %958 : vector<16x64xf32>
    %969 = arith.addf %963, %968 : vector<16x64xf32>
    %c0_346 = arith.constant 0 : index
    %c64_347 = arith.constant 64 : index
    %970 = vector.load %arg10[%c0_346, %c64_347] : memref<16x576xf32, #tpu.memory_space<vmem>>, vector<16x64xf32>
    tpu.vector_store %arg10[%c0_346, %c64_347], %969 {strides = array<i32>} : memref<16x576xf32, #tpu.memory_space<vmem>>, vector<16x64xf32>,
    %cst_348 = arith.constant -1.800000e+00 : f32
    %971 = vector.broadcast %cst_348 : f32 to vector<16x64xf32>
    %972 = arith.cmpf oge, %834, %971 : vector<16x64xf32>
    %cst_349 = arith.constant -1.400000e+00 : f32
    %973 = vector.broadcast %cst_349 : f32 to vector<16x64xf32>
    %974 = arith.cmpf olt, %834, %973 : vector<16x64xf32>
    %975 = arith.andi %972, %974 : vector<16x64xi1>
    %976 = arith.extui %975 : vector<16x64xi1> to vector<16x64xi32>
    %977 = arith.sitofp %976 : vector<16x64xi32> to vector<16x64xf32>
    %cst_350 = arith.constant -1.400000e+00 : f32
    %978 = vector.broadcast %cst_350 : f32 to vector<16x64xf32>
    %979 = arith.cmpf oge, %834, %978 : vector<16x64xf32>
    %cst_351 = arith.constant -1.000000e+00 : f32
    %980 = vector.broadcast %cst_351 : f32 to vector<16x64xf32>
    %981 = arith.cmpf olt, %834, %980 : vector<16x64xf32>
    %982 = arith.andi %979, %981 : vector<16x64xi1>
    %983 = arith.extui %982 : vector<16x64xi1> to vector<16x64xi32>
    %984 = arith.sitofp %983 : vector<16x64xi32> to vector<16x64xf32>
    %cst_352 = arith.constant -1.000000e+00 : f32
    %985 = vector.broadcast %cst_352 : f32 to vector<16x64xf32>
    %986 = arith.cmpf oge, %834, %985 : vector<16x64xf32>
    %cst_353 = arith.constant -6.000000e-01 : f32
    %987 = vector.broadcast %cst_353 : f32 to vector<16x64xf32>
    %988 = arith.cmpf olt, %834, %987 : vector<16x64xf32>
    %989 = arith.andi %986, %988 : vector<16x64xi1>
    %990 = arith.extui %989 : vector<16x64xi1> to vector<16x64xi32>
    %991 = arith.sitofp %990 : vector<16x64xi32> to vector<16x64xf32>
    %cst_354 = arith.constant -6.000000e-01 : f32
    %992 = vector.broadcast %cst_354 : f32 to vector<16x64xf32>
    %993 = arith.cmpf oge, %834, %992 : vector<16x64xf32>
    %cst_355 = arith.constant -2.000000e-01 : f32
    %994 = vector.broadcast %cst_355 : f32 to vector<16x64xf32>
    %995 = arith.cmpf olt, %834, %994 : vector<16x64xf32>
    %996 = arith.andi %993, %995 : vector<16x64xi1>
    %997 = arith.extui %996 : vector<16x64xi1> to vector<16x64xi32>
    %998 = arith.sitofp %997 : vector<16x64xi32> to vector<16x64xf32>
    %cst_356 = arith.constant -1.800000e+00 : f32
    %999 = vector.broadcast %cst_356 : f32 to vector<16x64xf32>
    %1000 = arith.subf %834, %999 : vector<16x64xf32>
    %cst_357 = arith.constant 2.50000024 : f32
    %1001 = vector.broadcast %cst_357 : f32 to vector<16x64xf32>
    %1002 = arith.mulf %1000, %1001 : vector<16x64xf32>
    %1003 = arith.mulf %1002, %977 : vector<16x64xf32>
    %cst_358 = arith.constant -1.000000e+00 : f32
    %1004 = vector.broadcast %cst_358 : f32 to vector<16x64xf32>
    %1005 = arith.subf %1004, %834 : vector<16x64xf32>
    %cst_359 = arith.constant 2.50000024 : f32
    %1006 = vector.broadcast %cst_359 : f32 to vector<16x64xf32>
    %1007 = arith.mulf %1005, %1006 : vector<16x64xf32>
    %1008 = arith.mulf %1007, %984 : vector<16x64xf32>
    %1009 = arith.addf %1003, %1008 : vector<16x64xf32>
    %cst_360 = arith.constant -1.400000e+00 : f32
    %1010 = vector.broadcast %cst_360 : f32 to vector<16x64xf32>
    %1011 = arith.subf %834, %1010 : vector<16x64xf32>
    %cst_361 = arith.constant 2.50000024 : f32
    %1012 = vector.broadcast %cst_361 : f32 to vector<16x64xf32>
    %1013 = arith.mulf %1011, %1012 : vector<16x64xf32>
    %1014 = arith.mulf %1013, %984 : vector<16x64xf32>
    %cst_362 = arith.constant -6.000000e-01 : f32
    %1015 = vector.broadcast %cst_362 : f32 to vector<16x64xf32>
    %1016 = arith.subf %1015, %834 : vector<16x64xf32>
    %cst_363 = arith.constant 2.50000024 : f32
    %1017 = vector.broadcast %cst_363 : f32 to vector<16x64xf32>
    %1018 = arith.mulf %1016, %1017 : vector<16x64xf32>
    %1019 = arith.mulf %1018, %991 : vector<16x64xf32>
    %1020 = arith.addf %1014, %1019 : vector<16x64xf32>
    %cst_364 = arith.constant -1.000000e+00 : f32
    %1021 = vector.broadcast %cst_364 : f32 to vector<16x64xf32>
    %1022 = arith.subf %834, %1021 : vector<16x64xf32>
    %cst_365 = arith.constant 2.50000024 : f32
    %1023 = vector.broadcast %cst_365 : f32 to vector<16x64xf32>
    %1024 = arith.mulf %1022, %1023 : vector<16x64xf32>
    %1025 = arith.mulf %1024, %991 : vector<16x64xf32>
    %cst_366 = arith.constant -2.000000e-01 : f32
    %1026 = vector.broadcast %cst_366 : f32 to vector<16x64xf32>
    %1027 = arith.subf %1026, %834 : vector<16x64xf32>
    %cst_367 = arith.constant 2.49999976 : f32
    %1028 = vector.broadcast %cst_367 : f32 to vector<16x64xf32>
    %1029 = arith.mulf %1027, %1028 : vector<16x64xf32>
    %1030 = arith.mulf %1029, %998 : vector<16x64xf32>
    %1031 = arith.addf %1025, %1030 : vector<16x64xf32>
    %cst_368 = arith.constant -1.800000e+00 : f32
    %1032 = vector.broadcast %cst_368 : f32 to vector<16x64xf32>
    %1033 = arith.subf %834, %1032 : vector<16x64xf32>
    %cst_369 = arith.constant 1.25000012 : f32
    %1034 = vector.broadcast %cst_369 : f32 to vector<16x64xf32>
    %1035 = arith.mulf %1033, %1034 : vector<16x64xf32>
    %1036 = arith.mulf %1035, %1009 : vector<16x64xf32>
    %cst_370 = arith.constant -6.000000e-01 : f32
    %1037 = vector.broadcast %cst_370 : f32 to vector<16x64xf32>
    %1038 = arith.subf %1037, %834 : vector<16x64xf32>
    %cst_371 = arith.constant 1.25000012 : f32
    %1039 = vector.broadcast %cst_371 : f32 to vector<16x64xf32>
    %1040 = arith.mulf %1038, %1039 : vector<16x64xf32>
    %1041 = arith.mulf %1040, %1020 : vector<16x64xf32>
    %1042 = arith.addf %1036, %1041 : vector<16x64xf32>
    %cst_372 = arith.constant -1.400000e+00 : f32
    %1043 = vector.broadcast %cst_372 : f32 to vector<16x64xf32>
    %1044 = arith.subf %834, %1043 : vector<16x64xf32>
    %cst_373 = arith.constant 1.25000012 : f32
    %1045 = vector.broadcast %cst_373 : f32 to vector<16x64xf32>
    %1046 = arith.mulf %1044, %1045 : vector<16x64xf32>
    %1047 = arith.mulf %1046, %1020 : vector<16x64xf32>
    %cst_374 = arith.constant -2.000000e-01 : f32
    %1048 = vector.broadcast %cst_374 : f32 to vector<16x64xf32>
    %1049 = arith.subf %1048, %834 : vector<16x64xf32>
    %cst_375 = arith.constant 1.250000e+00 : f32
    %1050 = vector.broadcast %cst_375 : f32 to vector<16x64xf32>
    %1051 = arith.mulf %1049, %1050 : vector<16x64xf32>
    %1052 = arith.mulf %1051, %1031 : vector<16x64xf32>
    %1053 = arith.addf %1047, %1052 : vector<16x64xf32>
    %cst_376 = arith.constant -1.800000e+00 : f32
    %1054 = vector.broadcast %cst_376 : f32 to vector<16x64xf32>
    %1055 = arith.subf %834, %1054 : vector<16x64xf32>
    %cst_377 = arith.constant 0.833333373 : f32
    %1056 = vector.broadcast %cst_377 : f32 to vector<16x64xf32>
    %1057 = arith.mulf %1055, %1056 : vector<16x64xf32>
    %1058 = arith.mulf %1057, %1042 : vector<16x64xf32>
    %cst_378 = arith.constant -2.000000e-01 : f32
    %1059 = vector.broadcast %cst_378 : f32 to vector<16x64xf32>
    %1060 = arith.subf %1059, %834 : vector<16x64xf32>
    %cst_379 = arith.constant 0.833333373 : f32
    %1061 = vector.broadcast %cst_379 : f32 to vector<16x64xf32>
    %1062 = arith.mulf %1060, %1061 : vector<16x64xf32>
    %1063 = arith.mulf %1062, %1053 : vector<16x64xf32>
    %1064 = arith.addf %1058, %1063 : vector<16x64xf32>
    %c0_380 = arith.constant 0 : index
    %c128_381 = arith.constant 128 : index
    %1065 = vector.load %arg10[%c0_380, %c128_381] : memref<16x576xf32, #tpu.memory_space<vmem>>, vector<16x64xf32>
    tpu.vector_store %arg10[%c0_380, %c128_381], %1064 {strides = array<i32>} : memref<16x576xf32, #tpu.memory_space<vmem>>, vector<16x64xf32>,
    %cst_382 = arith.constant -1.400000e+00 : f32
    %1066 = vector.broadcast %cst_382 : f32 to vector<16x64xf32>
    %1067 = arith.cmpf oge, %834, %1066 : vector<16x64xf32>
    %cst_383 = arith.constant -1.000000e+00 : f32
    %1068 = vector.broadcast %cst_383 : f32 to vector<16x64xf32>
    %1069 = arith.cmpf olt, %834, %1068 : vector<16x64xf32>
    %1070 = arith.andi %1067, %1069 : vector<16x64xi1>
    %1071 = arith.extui %1070 : vector<16x64xi1> to vector<16x64xi32>
    %1072 = arith.sitofp %1071 : vector<16x64xi32> to vector<16x64xf32>
    %cst_384 = arith.constant -1.000000e+00 : f32
    %1073 = vector.broadcast %cst_384 : f32 to vector<16x64xf32>
    %1074 = arith.cmpf oge, %834, %1073 : vector<16x64xf32>
    %cst_385 = arith.constant -6.000000e-01 : f32
    %1075 = vector.broadcast %cst_385 : f32 to vector<16x64xf32>
    %1076 = arith.cmpf olt, %834, %1075 : vector<16x64xf32>
    %1077 = arith.andi %1074, %1076 : vector<16x64xi1>
    %1078 = arith.extui %1077 : vector<16x64xi1> to vector<16x64xi32>
    %1079 = arith.sitofp %1078 : vector<16x64xi32> to vector<16x64xf32>
    %cst_386 = arith.constant -6.000000e-01 : f32
    %1080 = vector.broadcast %cst_386 : f32 to vector<16x64xf32>
    %1081 = arith.cmpf oge, %834, %1080 : vector<16x64xf32>
    %cst_387 = arith.constant -2.000000e-01 : f32
    %1082 = vector.broadcast %cst_387 : f32 to vector<16x64xf32>
    %1083 = arith.cmpf olt, %834, %1082 : vector<16x64xf32>
    %1084 = arith.andi %1081, %1083 : vector<16x64xi1>
    %1085 = arith.extui %1084 : vector<16x64xi1> to vector<16x64xi32>
    %1086 = arith.sitofp %1085 : vector<16x64xi32> to vector<16x64xf32>
    %cst_388 = arith.constant -2.000000e-01 : f32
    %1087 = vector.broadcast %cst_388 : f32 to vector<16x64xf32>
    %1088 = arith.cmpf oge, %834, %1087 : vector<16x64xf32>
    %cst_389 = arith.constant 2.000000e-01 : f32
    %1089 = vector.broadcast %cst_389 : f32 to vector<16x64xf32>
    %1090 = arith.cmpf olt, %834, %1089 : vector<16x64xf32>
    %1091 = arith.andi %1088, %1090 : vector<16x64xi1>
    %1092 = arith.extui %1091 : vector<16x64xi1> to vector<16x64xi32>
    %1093 = arith.sitofp %1092 : vector<16x64xi32> to vector<16x64xf32>
    %cst_390 = arith.constant -1.400000e+00 : f32
    %1094 = vector.broadcast %cst_390 : f32 to vector<16x64xf32>
    %1095 = arith.subf %834, %1094 : vector<16x64xf32>
    %cst_391 = arith.constant 2.50000024 : f32
    %1096 = vector.broadcast %cst_391 : f32 to vector<16x64xf32>
    %1097 = arith.mulf %1095, %1096 : vector<16x64xf32>
    %1098 = arith.mulf %1097, %1072 : vector<16x64xf32>
    %cst_392 = arith.constant -6.000000e-01 : f32
    %1099 = vector.broadcast %cst_392 : f32 to vector<16x64xf32>
    %1100 = arith.subf %1099, %834 : vector<16x64xf32>
    %cst_393 = arith.constant 2.50000024 : f32
    %1101 = vector.broadcast %cst_393 : f32 to vector<16x64xf32>
    %1102 = arith.mulf %1100, %1101 : vector<16x64xf32>
    %1103 = arith.mulf %1102, %1079 : vector<16x64xf32>
    %1104 = arith.addf %1098, %1103 : vector<16x64xf32>
    %cst_394 = arith.constant -1.000000e+00 : f32
    %1105 = vector.broadcast %cst_394 : f32 to vector<16x64xf32>
    %1106 = arith.subf %834, %1105 : vector<16x64xf32>
    %cst_395 = arith.constant 2.50000024 : f32
    %1107 = vector.broadcast %cst_395 : f32 to vector<16x64xf32>
    %1108 = arith.mulf %1106, %1107 : vector<16x64xf32>
    %1109 = arith.mulf %1108, %1079 : vector<16x64xf32>
    %cst_396 = arith.constant -2.000000e-01 : f32
    %1110 = vector.broadcast %cst_396 : f32 to vector<16x64xf32>
    %1111 = arith.subf %1110, %834 : vector<16x64xf32>
    %cst_397 = arith.constant 2.49999976 : f32
    %1112 = vector.broadcast %cst_397 : f32 to vector<16x64xf32>
    %1113 = arith.mulf %1111, %1112 : vector<16x64xf32>
    %1114 = arith.mulf %1113, %1086 : vector<16x64xf32>
    %1115 = arith.addf %1109, %1114 : vector<16x64xf32>
    %cst_398 = arith.constant -6.000000e-01 : f32
    %1116 = vector.broadcast %cst_398 : f32 to vector<16x64xf32>
    %1117 = arith.subf %834, %1116 : vector<16x64xf32>
    %cst_399 = arith.constant 2.49999976 : f32
    %1118 = vector.broadcast %cst_399 : f32 to vector<16x64xf32>
    %1119 = arith.mulf %1117, %1118 : vector<16x64xf32>
    %1120 = arith.mulf %1119, %1086 : vector<16x64xf32>
    %cst_400 = arith.constant 2.000000e-01 : f32
    %1121 = vector.broadcast %cst_400 : f32 to vector<16x64xf32>
    %1122 = arith.subf %1121, %834 : vector<16x64xf32>
    %cst_401 = arith.constant 2.500000e+00 : f32
    %1123 = vector.broadcast %cst_401 : f32 to vector<16x64xf32>
    %1124 = arith.mulf %1122, %1123 : vector<16x64xf32>
    %1125 = arith.mulf %1124, %1093 : vector<16x64xf32>
    %1126 = arith.addf %1120, %1125 : vector<16x64xf32>
    %cst_402 = arith.constant -1.400000e+00 : f32
    %1127 = vector.broadcast %cst_402 : f32 to vector<16x64xf32>
    %1128 = arith.subf %834, %1127 : vector<16x64xf32>
    %cst_403 = arith.constant 1.25000012 : f32
    %1129 = vector.broadcast %cst_403 : f32 to vector<16x64xf32>
    %1130 = arith.mulf %1128, %1129 : vector<16x64xf32>
    %1131 = arith.mulf %1130, %1104 : vector<16x64xf32>
    %cst_404 = arith.constant -2.000000e-01 : f32
    %1132 = vector.broadcast %cst_404 : f32 to vector<16x64xf32>
    %1133 = arith.subf %1132, %834 : vector<16x64xf32>
    %cst_405 = arith.constant 1.250000e+00 : f32
    %1134 = vector.broadcast %cst_405 : f32 to vector<16x64xf32>
    %1135 = arith.mulf %1133, %1134 : vector<16x64xf32>
    %1136 = arith.mulf %1135, %1115 : vector<16x64xf32>
    %1137 = arith.addf %1131, %1136 : vector<16x64xf32>
    %cst_406 = arith.constant -1.000000e+00 : f32
    %1138 = vector.broadcast %cst_406 : f32 to vector<16x64xf32>
    %1139 = arith.subf %834, %1138 : vector<16x64xf32>
    %cst_407 = arith.constant 1.250000e+00 : f32
    %1140 = vector.broadcast %cst_407 : f32 to vector<16x64xf32>
    %1141 = arith.mulf %1139, %1140 : vector<16x64xf32>
    %1142 = arith.mulf %1141, %1115 : vector<16x64xf32>
    %cst_408 = arith.constant 2.000000e-01 : f32
    %1143 = vector.broadcast %cst_408 : f32 to vector<16x64xf32>
    %1144 = arith.subf %1143, %834 : vector<16x64xf32>
    %cst_409 = arith.constant 1.250000e+00 : f32
    %1145 = vector.broadcast %cst_409 : f32 to vector<16x64xf32>
    %1146 = arith.mulf %1144, %1145 : vector<16x64xf32>
    %1147 = arith.mulf %1146, %1126 : vector<16x64xf32>
    %1148 = arith.addf %1142, %1147 : vector<16x64xf32>
    %cst_410 = arith.constant -1.400000e+00 : f32
    %1149 = vector.broadcast %cst_410 : f32 to vector<16x64xf32>
    %1150 = arith.subf %834, %1149 : vector<16x64xf32>
    %cst_411 = arith.constant 0.833333373 : f32
    %1151 = vector.broadcast %cst_411 : f32 to vector<16x64xf32>
    %1152 = arith.mulf %1150, %1151 : vector<16x64xf32>
    %1153 = arith.mulf %1152, %1137 : vector<16x64xf32>
    %cst_412 = arith.constant 2.000000e-01 : f32
    %1154 = vector.broadcast %cst_412 : f32 to vector<16x64xf32>
    %1155 = arith.subf %1154, %834 : vector<16x64xf32>
    %cst_413 = arith.constant 0.833333313 : f32
    %1156 = vector.broadcast %cst_413 : f32 to vector<16x64xf32>
    %1157 = arith.mulf %1155, %1156 : vector<16x64xf32>
    %1158 = arith.mulf %1157, %1148 : vector<16x64xf32>
    %1159 = arith.addf %1153, %1158 : vector<16x64xf32>
    %c0_414 = arith.constant 0 : index
    %c192_415 = arith.constant 192 : index
    %1160 = vector.load %arg10[%c0_414, %c192_415] : memref<16x576xf32, #tpu.memory_space<vmem>>, vector<16x64xf32>
    tpu.vector_store %arg10[%c0_414, %c192_415], %1159 {strides = array<i32>} : memref<16x576xf32, #tpu.memory_space<vmem>>, vector<16x64xf32>,
    %cst_416 = arith.constant -1.000000e+00 : f32
    %1161 = vector.broadcast %cst_416 : f32 to vector<16x64xf32>
    %1162 = arith.cmpf oge, %834, %1161 : vector<16x64xf32>
    %cst_417 = arith.constant -6.000000e-01 : f32
    %1163 = vector.broadcast %cst_417 : f32 to vector<16x64xf32>
    %1164 = arith.cmpf olt, %834, %1163 : vector<16x64xf32>
    %1165 = arith.andi %1162, %1164 : vector<16x64xi1>
    %1166 = arith.extui %1165 : vector<16x64xi1> to vector<16x64xi32>
    %1167 = arith.sitofp %1166 : vector<16x64xi32> to vector<16x64xf32>
    %cst_418 = arith.constant -6.000000e-01 : f32
    %1168 = vector.broadcast %cst_418 : f32 to vector<16x64xf32>
    %1169 = arith.cmpf oge, %834, %1168 : vector<16x64xf32>
    %cst_419 = arith.constant -2.000000e-01 : f32
    %1170 = vector.broadcast %cst_419 : f32 to vector<16x64xf32>
    %1171 = arith.cmpf olt, %834, %1170 : vector<16x64xf32>
    %1172 = arith.andi %1169, %1171 : vector<16x64xi1>
    %1173 = arith.extui %1172 : vector<16x64xi1> to vector<16x64xi32>
    %1174 = arith.sitofp %1173 : vector<16x64xi32> to vector<16x64xf32>
    %cst_420 = arith.constant -2.000000e-01 : f32
    %1175 = vector.broadcast %cst_420 : f32 to vector<16x64xf32>
    %1176 = arith.cmpf oge, %834, %1175 : vector<16x64xf32>
    %cst_421 = arith.constant 2.000000e-01 : f32
    %1177 = vector.broadcast %cst_421 : f32 to vector<16x64xf32>
    %1178 = arith.cmpf olt, %834, %1177 : vector<16x64xf32>
    %1179 = arith.andi %1176, %1178 : vector<16x64xi1>
    %1180 = arith.extui %1179 : vector<16x64xi1> to vector<16x64xi32>
    %1181 = arith.sitofp %1180 : vector<16x64xi32> to vector<16x64xf32>
    %cst_422 = arith.constant 2.000000e-01 : f32
    %1182 = vector.broadcast %cst_422 : f32 to vector<16x64xf32>
    %1183 = arith.cmpf oge, %834, %1182 : vector<16x64xf32>
    %cst_423 = arith.constant 6.000000e-01 : f32
    %1184 = vector.broadcast %cst_423 : f32 to vector<16x64xf32>
    %1185 = arith.cmpf olt, %834, %1184 : vector<16x64xf32>
    %1186 = arith.andi %1183, %1185 : vector<16x64xi1>
    %1187 = arith.extui %1186 : vector<16x64xi1> to vector<16x64xi32>
    %1188 = arith.sitofp %1187 : vector<16x64xi32> to vector<16x64xf32>
    %cst_424 = arith.constant -1.000000e+00 : f32
    %1189 = vector.broadcast %cst_424 : f32 to vector<16x64xf32>
    %1190 = arith.subf %834, %1189 : vector<16x64xf32>
    %cst_425 = arith.constant 2.50000024 : f32
    %1191 = vector.broadcast %cst_425 : f32 to vector<16x64xf32>
    %1192 = arith.mulf %1190, %1191 : vector<16x64xf32>
    %1193 = arith.mulf %1192, %1167 : vector<16x64xf32>
    %cst_426 = arith.constant -2.000000e-01 : f32
    %1194 = vector.broadcast %cst_426 : f32 to vector<16x64xf32>
    %1195 = arith.subf %1194, %834 : vector<16x64xf32>
    %cst_427 = arith.constant 2.49999976 : f32
    %1196 = vector.broadcast %cst_427 : f32 to vector<16x64xf32>
    %1197 = arith.mulf %1195, %1196 : vector<16x64xf32>
    %1198 = arith.mulf %1197, %1174 : vector<16x64xf32>
    %1199 = arith.addf %1193, %1198 : vector<16x64xf32>
    %cst_428 = arith.constant -6.000000e-01 : f32
    %1200 = vector.broadcast %cst_428 : f32 to vector<16x64xf32>
    %1201 = arith.subf %834, %1200 : vector<16x64xf32>
    %cst_429 = arith.constant 2.49999976 : f32
    %1202 = vector.broadcast %cst_429 : f32 to vector<16x64xf32>
    %1203 = arith.mulf %1201, %1202 : vector<16x64xf32>
    %1204 = arith.mulf %1203, %1174 : vector<16x64xf32>
    %cst_430 = arith.constant 2.000000e-01 : f32
    %1205 = vector.broadcast %cst_430 : f32 to vector<16x64xf32>
    %1206 = arith.subf %1205, %834 : vector<16x64xf32>
    %cst_431 = arith.constant 2.500000e+00 : f32
    %1207 = vector.broadcast %cst_431 : f32 to vector<16x64xf32>
    %1208 = arith.mulf %1206, %1207 : vector<16x64xf32>
    %1209 = arith.mulf %1208, %1181 : vector<16x64xf32>
    %1210 = arith.addf %1204, %1209 : vector<16x64xf32>
    %cst_432 = arith.constant -2.000000e-01 : f32
    %1211 = vector.broadcast %cst_432 : f32 to vector<16x64xf32>
    %1212 = arith.subf %834, %1211 : vector<16x64xf32>
    %cst_433 = arith.constant 2.500000e+00 : f32
    %1213 = vector.broadcast %cst_433 : f32 to vector<16x64xf32>
    %1214 = arith.mulf %1212, %1213 : vector<16x64xf32>
    %1215 = arith.mulf %1214, %1181 : vector<16x64xf32>
    %cst_434 = arith.constant 6.000000e-01 : f32
    %1216 = vector.broadcast %cst_434 : f32 to vector<16x64xf32>
    %1217 = arith.subf %1216, %834 : vector<16x64xf32>
    %cst_435 = arith.constant 2.49999976 : f32
    %1218 = vector.broadcast %cst_435 : f32 to vector<16x64xf32>
    %1219 = arith.mulf %1217, %1218 : vector<16x64xf32>
    %1220 = arith.mulf %1219, %1188 : vector<16x64xf32>
    %1221 = arith.addf %1215, %1220 : vector<16x64xf32>
    %cst_436 = arith.constant -1.000000e+00 : f32
    %1222 = vector.broadcast %cst_436 : f32 to vector<16x64xf32>
    %1223 = arith.subf %834, %1222 : vector<16x64xf32>
    %cst_437 = arith.constant 1.250000e+00 : f32
    %1224 = vector.broadcast %cst_437 : f32 to vector<16x64xf32>
    %1225 = arith.mulf %1223, %1224 : vector<16x64xf32>
    %1226 = arith.mulf %1225, %1199 : vector<16x64xf32>
    %cst_438 = arith.constant 2.000000e-01 : f32
    %1227 = vector.broadcast %cst_438 : f32 to vector<16x64xf32>
    %1228 = arith.subf %1227, %834 : vector<16x64xf32>
    %cst_439 = arith.constant 1.250000e+00 : f32
    %1229 = vector.broadcast %cst_439 : f32 to vector<16x64xf32>
    %1230 = arith.mulf %1228, %1229 : vector<16x64xf32>
    %1231 = arith.mulf %1230, %1210 : vector<16x64xf32>
    %1232 = arith.addf %1226, %1231 : vector<16x64xf32>
    %cst_440 = arith.constant -6.000000e-01 : f32
    %1233 = vector.broadcast %cst_440 : f32 to vector<16x64xf32>
    %1234 = arith.subf %834, %1233 : vector<16x64xf32>
    %cst_441 = arith.constant 1.250000e+00 : f32
    %1235 = vector.broadcast %cst_441 : f32 to vector<16x64xf32>
    %1236 = arith.mulf %1234, %1235 : vector<16x64xf32>
    %1237 = arith.mulf %1236, %1210 : vector<16x64xf32>
    %cst_442 = arith.constant 6.000000e-01 : f32
    %1238 = vector.broadcast %cst_442 : f32 to vector<16x64xf32>
    %1239 = arith.subf %1238, %834 : vector<16x64xf32>
    %cst_443 = arith.constant 1.250000e+00 : f32
    %1240 = vector.broadcast %cst_443 : f32 to vector<16x64xf32>
    %1241 = arith.mulf %1239, %1240 : vector<16x64xf32>
    %1242 = arith.mulf %1241, %1221 : vector<16x64xf32>
    %1243 = arith.addf %1237, %1242 : vector<16x64xf32>
    %cst_444 = arith.constant -1.000000e+00 : f32
    %1244 = vector.broadcast %cst_444 : f32 to vector<16x64xf32>
    %1245 = arith.subf %834, %1244 : vector<16x64xf32>
    %cst_445 = arith.constant 0.833333313 : f32
    %1246 = vector.broadcast %cst_445 : f32 to vector<16x64xf32>
    %1247 = arith.mulf %1245, %1246 : vector<16x64xf32>
    %1248 = arith.mulf %1247, %1232 : vector<16x64xf32>
    %cst_446 = arith.constant 6.000000e-01 : f32
    %1249 = vector.broadcast %cst_446 : f32 to vector<16x64xf32>
    %1250 = arith.subf %1249, %834 : vector<16x64xf32>
    %cst_447 = arith.constant 0.833333313 : f32
    %1251 = vector.broadcast %cst_447 : f32 to vector<16x64xf32>
    %1252 = arith.mulf %1250, %1251 : vector<16x64xf32>
    %1253 = arith.mulf %1252, %1243 : vector<16x64xf32>
    %1254 = arith.addf %1248, %1253 : vector<16x64xf32>
    %c0_448 = arith.constant 0 : index
    %c256_449 = arith.constant 256 : index
    %1255 = vector.load %arg10[%c0_448, %c256_449] : memref<16x576xf32, #tpu.memory_space<vmem>>, vector<16x64xf32>
    tpu.vector_store %arg10[%c0_448, %c256_449], %1254 {strides = array<i32>} : memref<16x576xf32, #tpu.memory_space<vmem>>, vector<16x64xf32>,
    %cst_450 = arith.constant -6.000000e-01 : f32
    %1256 = vector.broadcast %cst_450 : f32 to vector<16x64xf32>
    %1257 = arith.cmpf oge, %834, %1256 : vector<16x64xf32>
    %cst_451 = arith.constant -2.000000e-01 : f32
    %1258 = vector.broadcast %cst_451 : f32 to vector<16x64xf32>
    %1259 = arith.cmpf olt, %834, %1258 : vector<16x64xf32>
    %1260 = arith.andi %1257, %1259 : vector<16x64xi1>
    %1261 = arith.extui %1260 : vector<16x64xi1> to vector<16x64xi32>
    %1262 = arith.sitofp %1261 : vector<16x64xi32> to vector<16x64xf32>
    %cst_452 = arith.constant -2.000000e-01 : f32
    %1263 = vector.broadcast %cst_452 : f32 to vector<16x64xf32>
    %1264 = arith.cmpf oge, %834, %1263 : vector<16x64xf32>
    %cst_453 = arith.constant 2.000000e-01 : f32
    %1265 = vector.broadcast %cst_453 : f32 to vector<16x64xf32>
    %1266 = arith.cmpf olt, %834, %1265 : vector<16x64xf32>
    %1267 = arith.andi %1264, %1266 : vector<16x64xi1>
    %1268 = arith.extui %1267 : vector<16x64xi1> to vector<16x64xi32>
    %1269 = arith.sitofp %1268 : vector<16x64xi32> to vector<16x64xf32>
    %cst_454 = arith.constant 2.000000e-01 : f32
    %1270 = vector.broadcast %cst_454 : f32 to vector<16x64xf32>
    %1271 = arith.cmpf oge, %834, %1270 : vector<16x64xf32>
    %cst_455 = arith.constant 6.000000e-01 : f32
    %1272 = vector.broadcast %cst_455 : f32 to vector<16x64xf32>
    %1273 = arith.cmpf olt, %834, %1272 : vector<16x64xf32>
    %1274 = arith.andi %1271, %1273 : vector<16x64xi1>
    %1275 = arith.extui %1274 : vector<16x64xi1> to vector<16x64xi32>
    %1276 = arith.sitofp %1275 : vector<16x64xi32> to vector<16x64xf32>
    %cst_456 = arith.constant 6.000000e-01 : f32
    %1277 = vector.broadcast %cst_456 : f32 to vector<16x64xf32>
    %1278 = arith.cmpf oge, %834, %1277 : vector<16x64xf32>
    %cst_457 = arith.constant 1.000000e+00 : f32
    %1279 = vector.broadcast %cst_457 : f32 to vector<16x64xf32>
    %1280 = arith.cmpf olt, %834, %1279 : vector<16x64xf32>
    %1281 = arith.andi %1278, %1280 : vector<16x64xi1>
    %1282 = arith.extui %1281 : vector<16x64xi1> to vector<16x64xi32>
    %1283 = arith.sitofp %1282 : vector<16x64xi32> to vector<16x64xf32>
    %cst_458 = arith.constant -6.000000e-01 : f32
    %1284 = vector.broadcast %cst_458 : f32 to vector<16x64xf32>
    %1285 = arith.subf %834, %1284 : vector<16x64xf32>
    %cst_459 = arith.constant 2.49999976 : f32
    %1286 = vector.broadcast %cst_459 : f32 to vector<16x64xf32>
    %1287 = arith.mulf %1285, %1286 : vector<16x64xf32>
    %1288 = arith.mulf %1287, %1262 : vector<16x64xf32>
    %cst_460 = arith.constant 2.000000e-01 : f32
    %1289 = vector.broadcast %cst_460 : f32 to vector<16x64xf32>
    %1290 = arith.subf %1289, %834 : vector<16x64xf32>
    %cst_461 = arith.constant 2.500000e+00 : f32
    %1291 = vector.broadcast %cst_461 : f32 to vector<16x64xf32>
    %1292 = arith.mulf %1290, %1291 : vector<16x64xf32>
    %1293 = arith.mulf %1292, %1269 : vector<16x64xf32>
    %1294 = arith.addf %1288, %1293 : vector<16x64xf32>
    %cst_462 = arith.constant -2.000000e-01 : f32
    %1295 = vector.broadcast %cst_462 : f32 to vector<16x64xf32>
    %1296 = arith.subf %834, %1295 : vector<16x64xf32>
    %cst_463 = arith.constant 2.500000e+00 : f32
    %1297 = vector.broadcast %cst_463 : f32 to vector<16x64xf32>
    %1298 = arith.mulf %1296, %1297 : vector<16x64xf32>
    %1299 = arith.mulf %1298, %1269 : vector<16x64xf32>
    %cst_464 = arith.constant 6.000000e-01 : f32
    %1300 = vector.broadcast %cst_464 : f32 to vector<16x64xf32>
    %1301 = arith.subf %1300, %834 : vector<16x64xf32>
    %cst_465 = arith.constant 2.49999976 : f32
    %1302 = vector.broadcast %cst_465 : f32 to vector<16x64xf32>
    %1303 = arith.mulf %1301, %1302 : vector<16x64xf32>
    %1304 = arith.mulf %1303, %1276 : vector<16x64xf32>
    %1305 = arith.addf %1299, %1304 : vector<16x64xf32>
    %cst_466 = arith.constant 2.000000e-01 : f32
    %1306 = vector.broadcast %cst_466 : f32 to vector<16x64xf32>
    %1307 = arith.subf %834, %1306 : vector<16x64xf32>
    %cst_467 = arith.constant 2.49999976 : f32
    %1308 = vector.broadcast %cst_467 : f32 to vector<16x64xf32>
    %1309 = arith.mulf %1307, %1308 : vector<16x64xf32>
    %1310 = arith.mulf %1309, %1276 : vector<16x64xf32>
    %cst_468 = arith.constant 1.000000e+00 : f32
    %1311 = vector.broadcast %cst_468 : f32 to vector<16x64xf32>
    %1312 = arith.subf %1311, %834 : vector<16x64xf32>
    %cst_469 = arith.constant 2.50000024 : f32
    %1313 = vector.broadcast %cst_469 : f32 to vector<16x64xf32>
    %1314 = arith.mulf %1312, %1313 : vector<16x64xf32>
    %1315 = arith.mulf %1314, %1283 : vector<16x64xf32>
    %1316 = arith.addf %1310, %1315 : vector<16x64xf32>
    %cst_470 = arith.constant -6.000000e-01 : f32
    %1317 = vector.broadcast %cst_470 : f32 to vector<16x64xf32>
    %1318 = arith.subf %834, %1317 : vector<16x64xf32>
    %cst_471 = arith.constant 1.250000e+00 : f32
    %1319 = vector.broadcast %cst_471 : f32 to vector<16x64xf32>
    %1320 = arith.mulf %1318, %1319 : vector<16x64xf32>
    %1321 = arith.mulf %1320, %1294 : vector<16x64xf32>
    %cst_472 = arith.constant 6.000000e-01 : f32
    %1322 = vector.broadcast %cst_472 : f32 to vector<16x64xf32>
    %1323 = arith.subf %1322, %834 : vector<16x64xf32>
    %cst_473 = arith.constant 1.250000e+00 : f32
    %1324 = vector.broadcast %cst_473 : f32 to vector<16x64xf32>
    %1325 = arith.mulf %1323, %1324 : vector<16x64xf32>
    %1326 = arith.mulf %1325, %1305 : vector<16x64xf32>
    %1327 = arith.addf %1321, %1326 : vector<16x64xf32>
    %cst_474 = arith.constant -2.000000e-01 : f32
    %1328 = vector.broadcast %cst_474 : f32 to vector<16x64xf32>
    %1329 = arith.subf %834, %1328 : vector<16x64xf32>
    %cst_475 = arith.constant 1.250000e+00 : f32
    %1330 = vector.broadcast %cst_475 : f32 to vector<16x64xf32>
    %1331 = arith.mulf %1329, %1330 : vector<16x64xf32>
    %1332 = arith.mulf %1331, %1305 : vector<16x64xf32>
    %cst_476 = arith.constant 1.000000e+00 : f32
    %1333 = vector.broadcast %cst_476 : f32 to vector<16x64xf32>
    %1334 = arith.subf %1333, %834 : vector<16x64xf32>
    %cst_477 = arith.constant 1.250000e+00 : f32
    %1335 = vector.broadcast %cst_477 : f32 to vector<16x64xf32>
    %1336 = arith.mulf %1334, %1335 : vector<16x64xf32>
    %1337 = arith.mulf %1336, %1316 : vector<16x64xf32>
    %1338 = arith.addf %1332, %1337 : vector<16x64xf32>
    %cst_478 = arith.constant -6.000000e-01 : f32
    %1339 = vector.broadcast %cst_478 : f32 to vector<16x64xf32>
    %1340 = arith.subf %834, %1339 : vector<16x64xf32>
    %cst_479 = arith.constant 0.833333313 : f32
    %1341 = vector.broadcast %cst_479 : f32 to vector<16x64xf32>
    %1342 = arith.mulf %1340, %1341 : vector<16x64xf32>
    %1343 = arith.mulf %1342, %1327 : vector<16x64xf32>
    %cst_480 = arith.constant 1.000000e+00 : f32
    %1344 = vector.broadcast %cst_480 : f32 to vector<16x64xf32>
    %1345 = arith.subf %1344, %834 : vector<16x64xf32>
    %cst_481 = arith.constant 0.833333313 : f32
    %1346 = vector.broadcast %cst_481 : f32 to vector<16x64xf32>
    %1347 = arith.mulf %1345, %1346 : vector<16x64xf32>
    %1348 = arith.mulf %1347, %1338 : vector<16x64xf32>
    %1349 = arith.addf %1343, %1348 : vector<16x64xf32>
    %c0_482 = arith.constant 0 : index
    %c320 = arith.constant 320 : index
    %1350 = vector.load %arg10[%c0_482, %c320] : memref<16x576xf32, #tpu.memory_space<vmem>>, vector<16x64xf32>
    tpu.vector_store %arg10[%c0_482, %c320], %1349 {strides = array<i32>} : memref<16x576xf32, #tpu.memory_space<vmem>>, vector<16x64xf32>,
    %cst_483 = arith.constant -2.000000e-01 : f32
    %1351 = vector.broadcast %cst_483 : f32 to vector<16x64xf32>
    %1352 = arith.cmpf oge, %834, %1351 : vector<16x64xf32>
    %cst_484 = arith.constant 2.000000e-01 : f32
    %1353 = vector.broadcast %cst_484 : f32 to vector<16x64xf32>
    %1354 = arith.cmpf olt, %834, %1353 : vector<16x64xf32>
    %1355 = arith.andi %1352, %1354 : vector<16x64xi1>
    %1356 = arith.extui %1355 : vector<16x64xi1> to vector<16x64xi32>
    %1357 = arith.sitofp %1356 : vector<16x64xi32> to vector<16x64xf32>
    %cst_485 = arith.constant 2.000000e-01 : f32
    %1358 = vector.broadcast %cst_485 : f32 to vector<16x64xf32>
    %1359 = arith.cmpf oge, %834, %1358 : vector<16x64xf32>
    %cst_486 = arith.constant 6.000000e-01 : f32
    %1360 = vector.broadcast %cst_486 : f32 to vector<16x64xf32>
    %1361 = arith.cmpf olt, %834, %1360 : vector<16x64xf32>
    %1362 = arith.andi %1359, %1361 : vector<16x64xi1>
    %1363 = arith.extui %1362 : vector<16x64xi1> to vector<16x64xi32>
    %1364 = arith.sitofp %1363 : vector<16x64xi32> to vector<16x64xf32>
    %cst_487 = arith.constant 6.000000e-01 : f32
    %1365 = vector.broadcast %cst_487 : f32 to vector<16x64xf32>
    %1366 = arith.cmpf oge, %834, %1365 : vector<16x64xf32>
    %cst_488 = arith.constant 1.000000e+00 : f32
    %1367 = vector.broadcast %cst_488 : f32 to vector<16x64xf32>
    %1368 = arith.cmpf olt, %834, %1367 : vector<16x64xf32>
    %1369 = arith.andi %1366, %1368 : vector<16x64xi1>
    %1370 = arith.extui %1369 : vector<16x64xi1> to vector<16x64xi32>
    %1371 = arith.sitofp %1370 : vector<16x64xi32> to vector<16x64xf32>
    %cst_489 = arith.constant 1.000000e+00 : f32
    %1372 = vector.broadcast %cst_489 : f32 to vector<16x64xf32>
    %1373 = arith.cmpf oge, %834, %1372 : vector<16x64xf32>
    %cst_490 = arith.constant 1.400000e+00 : f32
    %1374 = vector.broadcast %cst_490 : f32 to vector<16x64xf32>
    %1375 = arith.cmpf olt, %834, %1374 : vector<16x64xf32>
    %1376 = arith.andi %1373, %1375 : vector<16x64xi1>
    %1377 = arith.extui %1376 : vector<16x64xi1> to vector<16x64xi32>
    %1378 = arith.sitofp %1377 : vector<16x64xi32> to vector<16x64xf32>
    %cst_491 = arith.constant -2.000000e-01 : f32
    %1379 = vector.broadcast %cst_491 : f32 to vector<16x64xf32>
    %1380 = arith.subf %834, %1379 : vector<16x64xf32>
    %cst_492 = arith.constant 2.500000e+00 : f32
    %1381 = vector.broadcast %cst_492 : f32 to vector<16x64xf32>
    %1382 = arith.mulf %1380, %1381 : vector<16x64xf32>
    %1383 = arith.mulf %1382, %1357 : vector<16x64xf32>
    %cst_493 = arith.constant 6.000000e-01 : f32
    %1384 = vector.broadcast %cst_493 : f32 to vector<16x64xf32>
    %1385 = arith.subf %1384, %834 : vector<16x64xf32>
    %cst_494 = arith.constant 2.49999976 : f32
    %1386 = vector.broadcast %cst_494 : f32 to vector<16x64xf32>
    %1387 = arith.mulf %1385, %1386 : vector<16x64xf32>
    %1388 = arith.mulf %1387, %1364 : vector<16x64xf32>
    %1389 = arith.addf %1383, %1388 : vector<16x64xf32>
    %cst_495 = arith.constant 2.000000e-01 : f32
    %1390 = vector.broadcast %cst_495 : f32 to vector<16x64xf32>
    %1391 = arith.subf %834, %1390 : vector<16x64xf32>
    %cst_496 = arith.constant 2.49999976 : f32
    %1392 = vector.broadcast %cst_496 : f32 to vector<16x64xf32>
    %1393 = arith.mulf %1391, %1392 : vector<16x64xf32>
    %1394 = arith.mulf %1393, %1364 : vector<16x64xf32>
    %cst_497 = arith.constant 1.000000e+00 : f32
    %1395 = vector.broadcast %cst_497 : f32 to vector<16x64xf32>
    %1396 = arith.subf %1395, %834 : vector<16x64xf32>
    %cst_498 = arith.constant 2.50000024 : f32
    %1397 = vector.broadcast %cst_498 : f32 to vector<16x64xf32>
    %1398 = arith.mulf %1396, %1397 : vector<16x64xf32>
    %1399 = arith.mulf %1398, %1371 : vector<16x64xf32>
    %1400 = arith.addf %1394, %1399 : vector<16x64xf32>
    %cst_499 = arith.constant 6.000000e-01 : f32
    %1401 = vector.broadcast %cst_499 : f32 to vector<16x64xf32>
    %1402 = arith.subf %834, %1401 : vector<16x64xf32>
    %cst_500 = arith.constant 2.50000024 : f32
    %1403 = vector.broadcast %cst_500 : f32 to vector<16x64xf32>
    %1404 = arith.mulf %1402, %1403 : vector<16x64xf32>
    %1405 = arith.mulf %1404, %1371 : vector<16x64xf32>
    %cst_501 = arith.constant 1.400000e+00 : f32
    %1406 = vector.broadcast %cst_501 : f32 to vector<16x64xf32>
    %1407 = arith.subf %1406, %834 : vector<16x64xf32>
    %cst_502 = arith.constant 2.50000024 : f32
    %1408 = vector.broadcast %cst_502 : f32 to vector<16x64xf32>
    %1409 = arith.mulf %1407, %1408 : vector<16x64xf32>
    %1410 = arith.mulf %1409, %1378 : vector<16x64xf32>
    %1411 = arith.addf %1405, %1410 : vector<16x64xf32>
    %cst_503 = arith.constant -2.000000e-01 : f32
    %1412 = vector.broadcast %cst_503 : f32 to vector<16x64xf32>
    %1413 = arith.subf %834, %1412 : vector<16x64xf32>
    %cst_504 = arith.constant 1.250000e+00 : f32
    %1414 = vector.broadcast %cst_504 : f32 to vector<16x64xf32>
    %1415 = arith.mulf %1413, %1414 : vector<16x64xf32>
    %1416 = arith.mulf %1415, %1389 : vector<16x64xf32>
    %cst_505 = arith.constant 1.000000e+00 : f32
    %1417 = vector.broadcast %cst_505 : f32 to vector<16x64xf32>
    %1418 = arith.subf %1417, %834 : vector<16x64xf32>
    %cst_506 = arith.constant 1.250000e+00 : f32
    %1419 = vector.broadcast %cst_506 : f32 to vector<16x64xf32>
    %1420 = arith.mulf %1418, %1419 : vector<16x64xf32>
    %1421 = arith.mulf %1420, %1400 : vector<16x64xf32>
    %1422 = arith.addf %1416, %1421 : vector<16x64xf32>
    %cst_507 = arith.constant 2.000000e-01 : f32
    %1423 = vector.broadcast %cst_507 : f32 to vector<16x64xf32>
    %1424 = arith.subf %834, %1423 : vector<16x64xf32>
    %cst_508 = arith.constant 1.250000e+00 : f32
    %1425 = vector.broadcast %cst_508 : f32 to vector<16x64xf32>
    %1426 = arith.mulf %1424, %1425 : vector<16x64xf32>
    %1427 = arith.mulf %1426, %1400 : vector<16x64xf32>
    %cst_509 = arith.constant 1.400000e+00 : f32
    %1428 = vector.broadcast %cst_509 : f32 to vector<16x64xf32>
    %1429 = arith.subf %1428, %834 : vector<16x64xf32>
    %cst_510 = arith.constant 1.25000012 : f32
    %1430 = vector.broadcast %cst_510 : f32 to vector<16x64xf32>
    %1431 = arith.mulf %1429, %1430 : vector<16x64xf32>
    %1432 = arith.mulf %1431, %1411 : vector<16x64xf32>
    %1433 = arith.addf %1427, %1432 : vector<16x64xf32>
    %cst_511 = arith.constant -2.000000e-01 : f32
    %1434 = vector.broadcast %cst_511 : f32 to vector<16x64xf32>
    %1435 = arith.subf %834, %1434 : vector<16x64xf32>
    %cst_512 = arith.constant 0.833333313 : f32
    %1436 = vector.broadcast %cst_512 : f32 to vector<16x64xf32>
    %1437 = arith.mulf %1435, %1436 : vector<16x64xf32>
    %1438 = arith.mulf %1437, %1422 : vector<16x64xf32>
    %cst_513 = arith.constant 1.400000e+00 : f32
    %1439 = vector.broadcast %cst_513 : f32 to vector<16x64xf32>
    %1440 = arith.subf %1439, %834 : vector<16x64xf32>
    %cst_514 = arith.constant 0.833333373 : f32
    %1441 = vector.broadcast %cst_514 : f32 to vector<16x64xf32>
    %1442 = arith.mulf %1440, %1441 : vector<16x64xf32>
    %1443 = arith.mulf %1442, %1433 : vector<16x64xf32>
    %1444 = arith.addf %1438, %1443 : vector<16x64xf32>
    %c0_515 = arith.constant 0 : index
    %c384 = arith.constant 384 : index
    %1445 = vector.load %arg10[%c0_515, %c384] : memref<16x576xf32, #tpu.memory_space<vmem>>, vector<16x64xf32>
    tpu.vector_store %arg10[%c0_515, %c384], %1444 {strides = array<i32>} : memref<16x576xf32, #tpu.memory_space<vmem>>, vector<16x64xf32>,
    %cst_516 = arith.constant 2.000000e-01 : f32
    %1446 = vector.broadcast %cst_516 : f32 to vector<16x64xf32>
    %1447 = arith.cmpf oge, %834, %1446 : vector<16x64xf32>
    %cst_517 = arith.constant 6.000000e-01 : f32
    %1448 = vector.broadcast %cst_517 : f32 to vector<16x64xf32>
    %1449 = arith.cmpf olt, %834, %1448 : vector<16x64xf32>
    %1450 = arith.andi %1447, %1449 : vector<16x64xi1>
    %1451 = arith.extui %1450 : vector<16x64xi1> to vector<16x64xi32>
    %1452 = arith.sitofp %1451 : vector<16x64xi32> to vector<16x64xf32>
    %cst_518 = arith.constant 6.000000e-01 : f32
    %1453 = vector.broadcast %cst_518 : f32 to vector<16x64xf32>
    %1454 = arith.cmpf oge, %834, %1453 : vector<16x64xf32>
    %cst_519 = arith.constant 1.000000e+00 : f32
    %1455 = vector.broadcast %cst_519 : f32 to vector<16x64xf32>
    %1456 = arith.cmpf olt, %834, %1455 : vector<16x64xf32>
    %1457 = arith.andi %1454, %1456 : vector<16x64xi1>
    %1458 = arith.extui %1457 : vector<16x64xi1> to vector<16x64xi32>
    %1459 = arith.sitofp %1458 : vector<16x64xi32> to vector<16x64xf32>
    %cst_520 = arith.constant 1.000000e+00 : f32
    %1460 = vector.broadcast %cst_520 : f32 to vector<16x64xf32>
    %1461 = arith.cmpf oge, %834, %1460 : vector<16x64xf32>
    %cst_521 = arith.constant 1.400000e+00 : f32
    %1462 = vector.broadcast %cst_521 : f32 to vector<16x64xf32>
    %1463 = arith.cmpf olt, %834, %1462 : vector<16x64xf32>
    %1464 = arith.andi %1461, %1463 : vector<16x64xi1>
    %1465 = arith.extui %1464 : vector<16x64xi1> to vector<16x64xi32>
    %1466 = arith.sitofp %1465 : vector<16x64xi32> to vector<16x64xf32>
    %cst_522 = arith.constant 1.400000e+00 : f32
    %1467 = vector.broadcast %cst_522 : f32 to vector<16x64xf32>
    %1468 = arith.cmpf oge, %834, %1467 : vector<16x64xf32>
    %cst_523 = arith.constant 1.800000e+00 : f32
    %1469 = vector.broadcast %cst_523 : f32 to vector<16x64xf32>
    %1470 = arith.cmpf olt, %834, %1469 : vector<16x64xf32>
    %1471 = arith.andi %1468, %1470 : vector<16x64xi1>
    %1472 = arith.extui %1471 : vector<16x64xi1> to vector<16x64xi32>
    %1473 = arith.sitofp %1472 : vector<16x64xi32> to vector<16x64xf32>
    %cst_524 = arith.constant 2.000000e-01 : f32
    %1474 = vector.broadcast %cst_524 : f32 to vector<16x64xf32>
    %1475 = arith.subf %834, %1474 : vector<16x64xf32>
    %cst_525 = arith.constant 2.49999976 : f32
    %1476 = vector.broadcast %cst_525 : f32 to vector<16x64xf32>
    %1477 = arith.mulf %1475, %1476 : vector<16x64xf32>
    %1478 = arith.mulf %1477, %1452 : vector<16x64xf32>
    %cst_526 = arith.constant 1.000000e+00 : f32
    %1479 = vector.broadcast %cst_526 : f32 to vector<16x64xf32>
    %1480 = arith.subf %1479, %834 : vector<16x64xf32>
    %cst_527 = arith.constant 2.50000024 : f32
    %1481 = vector.broadcast %cst_527 : f32 to vector<16x64xf32>
    %1482 = arith.mulf %1480, %1481 : vector<16x64xf32>
    %1483 = arith.mulf %1482, %1459 : vector<16x64xf32>
    %1484 = arith.addf %1478, %1483 : vector<16x64xf32>
    %cst_528 = arith.constant 6.000000e-01 : f32
    %1485 = vector.broadcast %cst_528 : f32 to vector<16x64xf32>
    %1486 = arith.subf %834, %1485 : vector<16x64xf32>
    %cst_529 = arith.constant 2.50000024 : f32
    %1487 = vector.broadcast %cst_529 : f32 to vector<16x64xf32>
    %1488 = arith.mulf %1486, %1487 : vector<16x64xf32>
    %1489 = arith.mulf %1488, %1459 : vector<16x64xf32>
    %cst_530 = arith.constant 1.400000e+00 : f32
    %1490 = vector.broadcast %cst_530 : f32 to vector<16x64xf32>
    %1491 = arith.subf %1490, %834 : vector<16x64xf32>
    %cst_531 = arith.constant 2.50000024 : f32
    %1492 = vector.broadcast %cst_531 : f32 to vector<16x64xf32>
    %1493 = arith.mulf %1491, %1492 : vector<16x64xf32>
    %1494 = arith.mulf %1493, %1466 : vector<16x64xf32>
    %1495 = arith.addf %1489, %1494 : vector<16x64xf32>
    %cst_532 = arith.constant 1.000000e+00 : f32
    %1496 = vector.broadcast %cst_532 : f32 to vector<16x64xf32>
    %1497 = arith.subf %834, %1496 : vector<16x64xf32>
    %cst_533 = arith.constant 2.50000024 : f32
    %1498 = vector.broadcast %cst_533 : f32 to vector<16x64xf32>
    %1499 = arith.mulf %1497, %1498 : vector<16x64xf32>
    %1500 = arith.mulf %1499, %1466 : vector<16x64xf32>
    %cst_534 = arith.constant 1.800000e+00 : f32
    %1501 = vector.broadcast %cst_534 : f32 to vector<16x64xf32>
    %1502 = arith.subf %1501, %834 : vector<16x64xf32>
    %cst_535 = arith.constant 2.50000024 : f32
    %1503 = vector.broadcast %cst_535 : f32 to vector<16x64xf32>
    %1504 = arith.mulf %1502, %1503 : vector<16x64xf32>
    %1505 = arith.mulf %1504, %1473 : vector<16x64xf32>
    %1506 = arith.addf %1500, %1505 : vector<16x64xf32>
    %cst_536 = arith.constant 2.000000e-01 : f32
    %1507 = vector.broadcast %cst_536 : f32 to vector<16x64xf32>
    %1508 = arith.subf %834, %1507 : vector<16x64xf32>
    %cst_537 = arith.constant 1.250000e+00 : f32
    %1509 = vector.broadcast %cst_537 : f32 to vector<16x64xf32>
    %1510 = arith.mulf %1508, %1509 : vector<16x64xf32>
    %1511 = arith.mulf %1510, %1484 : vector<16x64xf32>
    %cst_538 = arith.constant 1.400000e+00 : f32
    %1512 = vector.broadcast %cst_538 : f32 to vector<16x64xf32>
    %1513 = arith.subf %1512, %834 : vector<16x64xf32>
    %cst_539 = arith.constant 1.25000012 : f32
    %1514 = vector.broadcast %cst_539 : f32 to vector<16x64xf32>
    %1515 = arith.mulf %1513, %1514 : vector<16x64xf32>
    %1516 = arith.mulf %1515, %1495 : vector<16x64xf32>
    %1517 = arith.addf %1511, %1516 : vector<16x64xf32>
    %cst_540 = arith.constant 6.000000e-01 : f32
    %1518 = vector.broadcast %cst_540 : f32 to vector<16x64xf32>
    %1519 = arith.subf %834, %1518 : vector<16x64xf32>
    %cst_541 = arith.constant 1.25000012 : f32
    %1520 = vector.broadcast %cst_541 : f32 to vector<16x64xf32>
    %1521 = arith.mulf %1519, %1520 : vector<16x64xf32>
    %1522 = arith.mulf %1521, %1495 : vector<16x64xf32>
    %cst_542 = arith.constant 1.800000e+00 : f32
    %1523 = vector.broadcast %cst_542 : f32 to vector<16x64xf32>
    %1524 = arith.subf %1523, %834 : vector<16x64xf32>
    %cst_543 = arith.constant 1.25000012 : f32
    %1525 = vector.broadcast %cst_543 : f32 to vector<16x64xf32>
    %1526 = arith.mulf %1524, %1525 : vector<16x64xf32>
    %1527 = arith.mulf %1526, %1506 : vector<16x64xf32>
    %1528 = arith.addf %1522, %1527 : vector<16x64xf32>
    %cst_544 = arith.constant 2.000000e-01 : f32
    %1529 = vector.broadcast %cst_544 : f32 to vector<16x64xf32>
    %1530 = arith.subf %834, %1529 : vector<16x64xf32>
    %cst_545 = arith.constant 0.833333373 : f32
    %1531 = vector.broadcast %cst_545 : f32 to vector<16x64xf32>
    %1532 = arith.mulf %1530, %1531 : vector<16x64xf32>
    %1533 = arith.mulf %1532, %1517 : vector<16x64xf32>
    %cst_546 = arith.constant 1.800000e+00 : f32
    %1534 = vector.broadcast %cst_546 : f32 to vector<16x64xf32>
    %1535 = arith.subf %1534, %834 : vector<16x64xf32>
    %cst_547 = arith.constant 0.833333373 : f32
    %1536 = vector.broadcast %cst_547 : f32 to vector<16x64xf32>
    %1537 = arith.mulf %1535, %1536 : vector<16x64xf32>
    %1538 = arith.mulf %1537, %1528 : vector<16x64xf32>
    %1539 = arith.addf %1533, %1538 : vector<16x64xf32>
    %c0_548 = arith.constant 0 : index
    %c448 = arith.constant 448 : index
    %1540 = vector.load %arg10[%c0_548, %c448] : memref<16x576xf32, #tpu.memory_space<vmem>>, vector<16x64xf32>
    tpu.vector_store %arg10[%c0_548, %c448], %1539 {strides = array<i32>} : memref<16x576xf32, #tpu.memory_space<vmem>>, vector<16x64xf32>,
    %cst_549 = arith.constant 6.000000e-01 : f32
    %1541 = vector.broadcast %cst_549 : f32 to vector<16x64xf32>
    %1542 = arith.cmpf oge, %834, %1541 : vector<16x64xf32>
    %cst_550 = arith.constant 1.000000e+00 : f32
    %1543 = vector.broadcast %cst_550 : f32 to vector<16x64xf32>
    %1544 = arith.cmpf olt, %834, %1543 : vector<16x64xf32>
    %1545 = arith.andi %1542, %1544 : vector<16x64xi1>
    %1546 = arith.extui %1545 : vector<16x64xi1> to vector<16x64xi32>
    %1547 = arith.sitofp %1546 : vector<16x64xi32> to vector<16x64xf32>
    %cst_551 = arith.constant 1.000000e+00 : f32
    %1548 = vector.broadcast %cst_551 : f32 to vector<16x64xf32>
    %1549 = arith.cmpf oge, %834, %1548 : vector<16x64xf32>
    %cst_552 = arith.constant 1.400000e+00 : f32
    %1550 = vector.broadcast %cst_552 : f32 to vector<16x64xf32>
    %1551 = arith.cmpf olt, %834, %1550 : vector<16x64xf32>
    %1552 = arith.andi %1549, %1551 : vector<16x64xi1>
    %1553 = arith.extui %1552 : vector<16x64xi1> to vector<16x64xi32>
    %1554 = arith.sitofp %1553 : vector<16x64xi32> to vector<16x64xf32>
    %cst_553 = arith.constant 1.400000e+00 : f32
    %1555 = vector.broadcast %cst_553 : f32 to vector<16x64xf32>
    %1556 = arith.cmpf oge, %834, %1555 : vector<16x64xf32>
    %cst_554 = arith.constant 1.800000e+00 : f32
    %1557 = vector.broadcast %cst_554 : f32 to vector<16x64xf32>
    %1558 = arith.cmpf olt, %834, %1557 : vector<16x64xf32>
    %1559 = arith.andi %1556, %1558 : vector<16x64xi1>
    %1560 = arith.extui %1559 : vector<16x64xi1> to vector<16x64xi32>
    %1561 = arith.sitofp %1560 : vector<16x64xi32> to vector<16x64xf32>
    %cst_555 = arith.constant 1.800000e+00 : f32
    %1562 = vector.broadcast %cst_555 : f32 to vector<16x64xf32>
    %1563 = arith.cmpf oge, %834, %1562 : vector<16x64xf32>
    %cst_556 = arith.constant 2.200000e+00 : f32
    %1564 = vector.broadcast %cst_556 : f32 to vector<16x64xf32>
    %1565 = arith.cmpf olt, %834, %1564 : vector<16x64xf32>
    %1566 = arith.andi %1563, %1565 : vector<16x64xi1>
    %1567 = arith.extui %1566 : vector<16x64xi1> to vector<16x64xi32>
    %1568 = arith.sitofp %1567 : vector<16x64xi32> to vector<16x64xf32>
    %cst_557 = arith.constant 6.000000e-01 : f32
    %1569 = vector.broadcast %cst_557 : f32 to vector<16x64xf32>
    %1570 = arith.subf %834, %1569 : vector<16x64xf32>
    %cst_558 = arith.constant 2.50000024 : f32
    %1571 = vector.broadcast %cst_558 : f32 to vector<16x64xf32>
    %1572 = arith.mulf %1570, %1571 : vector<16x64xf32>
    %1573 = arith.mulf %1572, %1547 : vector<16x64xf32>
    %cst_559 = arith.constant 1.400000e+00 : f32
    %1574 = vector.broadcast %cst_559 : f32 to vector<16x64xf32>
    %1575 = arith.subf %1574, %834 : vector<16x64xf32>
    %cst_560 = arith.constant 2.50000024 : f32
    %1576 = vector.broadcast %cst_560 : f32 to vector<16x64xf32>
    %1577 = arith.mulf %1575, %1576 : vector<16x64xf32>
    %1578 = arith.mulf %1577, %1554 : vector<16x64xf32>
    %1579 = arith.addf %1573, %1578 : vector<16x64xf32>
    %cst_561 = arith.constant 1.000000e+00 : f32
    %1580 = vector.broadcast %cst_561 : f32 to vector<16x64xf32>
    %1581 = arith.subf %834, %1580 : vector<16x64xf32>
    %cst_562 = arith.constant 2.50000024 : f32
    %1582 = vector.broadcast %cst_562 : f32 to vector<16x64xf32>
    %1583 = arith.mulf %1581, %1582 : vector<16x64xf32>
    %1584 = arith.mulf %1583, %1554 : vector<16x64xf32>
    %cst_563 = arith.constant 1.800000e+00 : f32
    %1585 = vector.broadcast %cst_563 : f32 to vector<16x64xf32>
    %1586 = arith.subf %1585, %834 : vector<16x64xf32>
    %cst_564 = arith.constant 2.50000024 : f32
    %1587 = vector.broadcast %cst_564 : f32 to vector<16x64xf32>
    %1588 = arith.mulf %1586, %1587 : vector<16x64xf32>
    %1589 = arith.mulf %1588, %1561 : vector<16x64xf32>
    %1590 = arith.addf %1584, %1589 : vector<16x64xf32>
    %cst_565 = arith.constant 1.400000e+00 : f32
    %1591 = vector.broadcast %cst_565 : f32 to vector<16x64xf32>
    %1592 = arith.subf %834, %1591 : vector<16x64xf32>
    %cst_566 = arith.constant 2.50000024 : f32
    %1593 = vector.broadcast %cst_566 : f32 to vector<16x64xf32>
    %1594 = arith.mulf %1592, %1593 : vector<16x64xf32>
    %1595 = arith.mulf %1594, %1561 : vector<16x64xf32>
    %cst_567 = arith.constant 2.200000e+00 : f32
    %1596 = vector.broadcast %cst_567 : f32 to vector<16x64xf32>
    %1597 = arith.subf %1596, %834 : vector<16x64xf32>
    %cst_568 = arith.constant 2.49999952 : f32
    %1598 = vector.broadcast %cst_568 : f32 to vector<16x64xf32>
    %1599 = arith.mulf %1597, %1598 : vector<16x64xf32>
    %1600 = arith.mulf %1599, %1568 : vector<16x64xf32>
    %1601 = arith.addf %1595, %1600 : vector<16x64xf32>
    %cst_569 = arith.constant 6.000000e-01 : f32
    %1602 = vector.broadcast %cst_569 : f32 to vector<16x64xf32>
    %1603 = arith.subf %834, %1602 : vector<16x64xf32>
    %cst_570 = arith.constant 1.25000012 : f32
    %1604 = vector.broadcast %cst_570 : f32 to vector<16x64xf32>
    %1605 = arith.mulf %1603, %1604 : vector<16x64xf32>
    %1606 = arith.mulf %1605, %1579 : vector<16x64xf32>
    %cst_571 = arith.constant 1.800000e+00 : f32
    %1607 = vector.broadcast %cst_571 : f32 to vector<16x64xf32>
    %1608 = arith.subf %1607, %834 : vector<16x64xf32>
    %cst_572 = arith.constant 1.25000012 : f32
    %1609 = vector.broadcast %cst_572 : f32 to vector<16x64xf32>
    %1610 = arith.mulf %1608, %1609 : vector<16x64xf32>
    %1611 = arith.mulf %1610, %1590 : vector<16x64xf32>
    %1612 = arith.addf %1606, %1611 : vector<16x64xf32>
    %cst_573 = arith.constant 1.000000e+00 : f32
    %1613 = vector.broadcast %cst_573 : f32 to vector<16x64xf32>
    %1614 = arith.subf %834, %1613 : vector<16x64xf32>
    %cst_574 = arith.constant 1.25000012 : f32
    %1615 = vector.broadcast %cst_574 : f32 to vector<16x64xf32>
    %1616 = arith.mulf %1614, %1615 : vector<16x64xf32>
    %1617 = arith.mulf %1616, %1590 : vector<16x64xf32>
    %cst_575 = arith.constant 2.200000e+00 : f32
    %1618 = vector.broadcast %cst_575 : f32 to vector<16x64xf32>
    %1619 = arith.subf %1618, %834 : vector<16x64xf32>
    %cst_576 = arith.constant 1.24999988 : f32
    %1620 = vector.broadcast %cst_576 : f32 to vector<16x64xf32>
    %1621 = arith.mulf %1619, %1620 : vector<16x64xf32>
    %1622 = arith.mulf %1621, %1601 : vector<16x64xf32>
    %1623 = arith.addf %1617, %1622 : vector<16x64xf32>
    %cst_577 = arith.constant 6.000000e-01 : f32
    %1624 = vector.broadcast %cst_577 : f32 to vector<16x64xf32>
    %1625 = arith.subf %834, %1624 : vector<16x64xf32>
    %cst_578 = arith.constant 0.833333373 : f32
    %1626 = vector.broadcast %cst_578 : f32 to vector<16x64xf32>
    %1627 = arith.mulf %1625, %1626 : vector<16x64xf32>
    %1628 = arith.mulf %1627, %1612 : vector<16x64xf32>
    %cst_579 = arith.constant 2.200000e+00 : f32
    %1629 = vector.broadcast %cst_579 : f32 to vector<16x64xf32>
    %1630 = arith.subf %1629, %834 : vector<16x64xf32>
    %cst_580 = arith.constant 0.833333313 : f32
    %1631 = vector.broadcast %cst_580 : f32 to vector<16x64xf32>
    %1632 = arith.mulf %1630, %1631 : vector<16x64xf32>
    %1633 = arith.mulf %1632, %1623 : vector<16x64xf32>
    %1634 = arith.addf %1628, %1633 : vector<16x64xf32>
    %c0_581 = arith.constant 0 : index
    %c512 = arith.constant 512 : index
    %1635 = vector.load %arg10[%c0_581, %c512] : memref<16x576xf32, #tpu.memory_space<vmem>>, vector<16x64xf32>
    tpu.vector_store %arg10[%c0_581, %c512], %1634 {strides = array<i32>} : memref<16x576xf32, #tpu.memory_space<vmem>>, vector<16x64xf32>,
    %c0_582 = arith.constant 0 : index
    %c0_583 = arith.constant 0 : index
    %1636 = vector.load %arg10[%c0_582, %c0_583] : memref<16x576xf32, #tpu.memory_space<vmem>>, vector<16x576xf32>
    %c0_584 = arith.constant 0 : index
    %c0_585 = arith.constant 0 : index
    %1637 = vector.load %arg5[%c0_584, %c0_585] : memref<576x16xf32, #tpu.memory_space<vmem>>, vector<576x16xf32>
    %cst_586 = arith.constant dense<0.000000e+00> : vector<16x16xf32>
    %1638 = tpu.matmul %1636, %1637, %cst_586 {dimension_numbers = #tpu.dot_dimension_numbers<[1], [0], [0], [1], [0, 0, 1, 1], [], []>} : vector<16x576xf32>, vector<576x16xf32>, vector<16x16xf32> -> vector<16x16xf32>
    %cst_587 = arith.constant dense<0.000000e+00> : vector<16xf32>
    %1639 = vector.multi_reduction <add>, %1638, %cst_587 [1] : vector<16x16xf32> to vector<16xf32>
    %1640 = vector.shape_cast %1639 : vector<16xf32> to vector<16x1xf32>
    %cst_588 = arith.constant 1.600000e+01 : f32
    %1641 = vector.broadcast %cst_588 : f32 to vector<16x1xf32>
    %1642 = arith.divf %1640, %1641 : vector<16x1xf32>
    %1643 = vector.broadcast %1642 : vector<16x1xf32> to vector<16x16xf32>
    %1644 = arith.subf %1638, %1643 : vector<16x16xf32>
    %1645 = arith.mulf %1644, %1644 : vector<16x16xf32>
    %cst_589 = arith.constant dense<0.000000e+00> : vector<16xf32>
    %1646 = vector.multi_reduction <add>, %1645, %cst_589 [1] : vector<16x16xf32> to vector<16xf32>
    %1647 = vector.shape_cast %1646 : vector<16xf32> to vector<16x1xf32>
    %cst_590 = arith.constant 1.600000e+01 : f32
    %1648 = vector.broadcast %cst_590 : f32 to vector<16x1xf32>
    %1649 = arith.divf %1647, %1648 : vector<16x1xf32>
    %1650 = vector.broadcast %1642 : vector<16x1xf32> to vector<16x16xf32>
    %1651 = arith.subf %1638, %1650 : vector<16x16xf32>
    %cst_591 = arith.constant 9.99999974E-6 : f32
    %1652 = vector.broadcast %cst_591 : f32 to vector<16x1xf32>
    %1653 = arith.addf %1649, %1652 : vector<16x1xf32>
    %1654 = math.rsqrt %1653 : vector<16x1xf32>
    %1655 = vector.broadcast %1654 : vector<16x1xf32> to vector<16x16xf32>
    %1656 = arith.mulf %1651, %1655 : vector<16x16xf32>
    %c0_592 = arith.constant 0 : index
    %c0_593 = arith.constant 0 : index
    %1657 = vector.load %arg6[%c0_592, %c0_593] : memref<1x16xf32, #tpu.memory_space<vmem>>, vector<1x16xf32>
    %1658 = vector.broadcast %1657 : vector<1x16xf32> to vector<16x16xf32>
    %1659 = arith.mulf %1656, %1658 : vector<16x16xf32>
    %c0_594 = arith.constant 0 : index
    %c0_595 = arith.constant 0 : index
    %1660 = vector.load %arg7[%c0_594, %c0_595] : memref<1x16xf32, #tpu.memory_space<vmem>>, vector<1x16xf32>
    %1661 = vector.broadcast %1660 : vector<1x16xf32> to vector<16x16xf32>
    %1662 = arith.addf %1659, %1661 : vector<16x16xf32>
    %c1 = arith.constant 1 : index
    %1663 = memref.load %arg8[%c1] : memref<2xf32, #tpu.memory_space<smem>>
    %cst_596 = arith.constant 0.000000e+00 : f32
    %1664 = vector.broadcast %cst_596 : f32 to vector<16x16xf32>
    %1665 = arith.cmpf oge, %1662, %1664 : vector<16x16xf32>
    %1666 = vector.broadcast %1663 : f32 to vector<16x16xf32>
    %1667 = arith.mulf %1666, %1662 : vector<16x16xf32>
    %1668 = arith.select %1665, %1662, %1667 : vector<16x16xi1>, vector<16x16xf32>
    %c0_597 = arith.constant 0 : index
    %c0_598 = arith.constant 0 : index
    %1669 = vector.load %arg9[%c0_597, %c0_598] : memref<16x16xf32, #tpu.memory_space<vmem>>, vector<16x16xf32>
    tpu.vector_store %arg9[%c0_597, %c0_598], %1668 {strides = array<i32>} : memref<16x16xf32, #tpu.memory_space<vmem>>, vector<16x16xf32>,
    return
  }
  func.func @transform_0(%arg0: i32) -> (i32, i32) {
    %c0_i32 = arith.constant 0 : i32
    %c0_i32_0 = arith.constant 0 : i32
    return %arg0, %c0_i32 : i32, i32
  }
  func.func @transform_1(%arg0: i32) -> (i32, i32) {
    %c0_i32 = arith.constant 0 : i32
    %c0_i32_0 = arith.constant 0 : i32
    %c0_i32_1 = arith.constant 0 : i32
    return %c0_i32, %c0_i32_0 : i32, i32
  }
  func.func @transform_2(%arg0: i32) -> (i32, i32) {
    %c0_i32 = arith.constant 0 : i32
    %c0_i32_0 = arith.constant 0 : i32
    %c0_i32_1 = arith.constant 0 : i32
    return %c0_i32, %c0_i32_0 : i32, i32
  }
  func.func @transform_3(%arg0: i32) -> (i32, i32) {
    %c0_i32 = arith.constant 0 : i32
    %c0_i32_0 = arith.constant 0 : i32
    %c0_i32_1 = arith.constant 0 : i32
    return %c0_i32, %c0_i32_0 : i32, i32
  }
  func.func @transform_4(%arg0: i32) -> (i32, i32) {
    %c0_i32 = arith.constant 0 : i32
    %c0_i32_0 = arith.constant 0 : i32
    %c0_i32_1 = arith.constant 0 : i32
    return %c0_i32, %c0_i32_0 : i32, i32
  }
  func.func @transform_5(%arg0: i32) -> (i32, i32) {
    %c0_i32 = arith.constant 0 : i32
    %c0_i32_0 = arith.constant 0 : i32
    %c0_i32_1 = arith.constant 0 : i32
    return %c0_i32, %c0_i32_0 : i32, i32
  }
  func.func @transform_6(%arg0: i32) -> (i32, i32) {
    %c0_i32 = arith.constant 0 : i32
    %c0_i32_0 = arith.constant 0 : i32
    %c0_i32_1 = arith.constant 0 : i32
    return %c0_i32, %c0_i32_0 : i32, i32
  }
  func.func @transform_7(%arg0: i32) -> i32 {
    %c0_i32 = arith.constant 0 : i32
    %c0_i32_0 = arith.constant 0 : i32
    return %c0_i32 : i32
  }
  func.func @transform_8(%arg0: i32) -> (i32, i32) {
    %c0_i32 = arith.constant 0 : i32
    %c0_i32_0 = arith.constant 0 : i32
    return %arg0, %c0_i32 : i32, i32
  }
}

</mosaic_0001>

<llo_original>
// kernel: tpu_custom_call.1
$region0: #{tpu_custom_call.1}
  #allocation0 [shape = 'u32[]', space=smem, size = 0x4, offset = 0x4, fixed_abs, tag = 'smem constant byte address 0x4 - core index']
  #allocation1 [shape = 'u32[144,128]{1,0:T(1,128)}', space=vmem, size = 0x12000, scoped, tag = 'internal scratch']
  #allocation2 [shape = 'f32[16,576]{1,0:T(8,128)}', space=vmem, size = 0xa000, scoped, tag = 'scratch operand']
  %s0 = inlined_call_operand.vmem [shape: f32[64,32], index: 0, kind: input, shape index: {}]
  %s1 = inlined_call_operand.vmem [shape: f32[288,64], index: 1, kind: input, shape index: {}]
  %s2 = inlined_call_operand.vmem [shape: f32[1,64], index: 2, kind: input, shape index: {}]
  %s3 = inlined_call_operand.vmem [shape: f32[1,64], index: 3, kind: input, shape index: {}]
  %s4 = inlined_call_operand.vmem [shape: f32[576,16], index: 4, kind: input, shape index: {}]
  %s5 = inlined_call_operand.vmem [shape: f32[1,16], index: 5, kind: input, shape index: {}]
  %s6 = inlined_call_operand.vmem [shape: f32[1,16], index: 6, kind: input, shape index: {}]
  %s7 = inlined_call_operand.vmem [shape: f32[2], index: 7, kind: input, shape index: {}]
  %s8 = inlined_call_operand.vmem [shape: f32[64,16], index: 8, kind: output, shape index: {}]
  %s9 = sld [smem:[#allocation0]]
  $region69: #{tpu_custom_call.1} parent=0
    _
  %s11 = ssub.s32 1, %s9
  %s12 = scalar_select 0, %s11, %s9
  $region1: #{tpu_custom_call.1} parent=0
    #allocation3 [shape = 'u8[512]{0}', space=smem, size = 0x200, scoped, tag = 'input window, operand 7, single buffered']
    #allocation4 [shape = 's32[2]{0}', space=sflag, size = 0x8, scoped, tag = 'scoped memory for tpu_custom_call.1']
    %13 = vsyncpa [#allocation4], 0
    loop: start=0, step=1, limit=6
    $region2: #{tpu_custom_call.1} parent=1 // loop_pre_header
      _
    $region3: #{tpu_custom_call.1} parent=1 // loop_header
      %s15 = sphi 0, %s19
      %p16 = scmp.ge.s32.totalorder %s15, 6
      %s25 = sphi 0, %s27
      %s28 = sphi 0, %s25
      %s29 = sphi 0, %s28
      %s45 = sphi 0, %s29
      %s49 = sphi 0, %s49
      %s51 = sphi 0, %s49
      %s52 = sphi 0, %s51
      %s66 = sphi 0, %s52
      %s70 = sphi 0, %s70
      %s72 = sphi 0, %s70
      %s73 = sphi 0, %s72
      %s87 = sphi 0, %s73
      %s91 = sphi 0, %s91
      %s93 = sphi 0, %s91
      %s94 = sphi 0, %s93
      %s108 = sphi 0, %s94
      %s112 = sphi 0, %s112
      %s114 = sphi 0, %s112
      %s115 = sphi 0, %s114
      %s129 = sphi 0, %s115
      %s133 = sphi 0, %s133
      %s135 = sphi 0, %s133
      %s136 = sphi 0, %s135
      %s150 = sphi 0, %s136
      %s154 = sphi 0, %s154
      %s156 = sphi 0, %s154
      %s157 = sphi 0, %s156
      %s171 = sphi 0, %s157
      %s175 = sphi 0, %s175
      %s177 = sphi 0, %s175
      %s178 = sphi 0, %s177
      %s192 = sphi 0, %s178
      %s198 = sphi 0, %s200
      %s201 = sphi 0, %s198
      %s202 = sphi 0, %s201
      %s218 = sphi 0, %s202
    $region4: #{tpu_custom_call.1} parent=1 // loop_header_branch
      %18 = sbr.rel (%p16) target = $region8
    $region5: #{tpu_custom_call.1} parent=1 // loop_body
      %s20 = ssub.s32 %s15, 1
      %s21 = ssub.s32 %s15, 2
      %s22 = sadd.s32 %s15, 1
      %s23 = ssub.s32 %s15, %s22
      %p24 = scmp.eq.s32.totalorder %s23, 0
      %s26 = sadd.s32 %s25, 1
      %s27 = scalar_select %p24, %s25, %s26
      %p30 = pneg %p24
      %p31 = scmp.eq.s32.totalorder %s15, 3
      %p32 = por %p30, %p31
      %p33 = scmp.ne.s32.totalorder %s25, %s28
      %p34 = scmp.eq.s32.totalorder %s15, 0
      %p35 = por %p33, %p34
      %p36 = scmp.ne.s32.totalorder %s25, %s28
      %p37 = scmp.eq.s32.totalorder %s20, 3
      %p38 = por %p36, %p37
      %p39 = scmp.ne.s32.totalorder %s28, %s29
      %p40 = scmp.eq.s32.totalorder %s20, 0
      %p41 = por %p39, %p40
      %p42 = scmp.ne.s32.totalorder %s28, %s29
      %p43 = scmp.eq.s32.totalorder %s21, 3
      %p44 = por %p42, %p43
      %p46 = scmp.ne.s32.totalorder %s29, %s45
      %p47 = scmp.eq.s32.totalorder %s21, 0
      %p48 = por %p46, %p47
      %s50 = sadd.s32 %s49, 1
      %p53 = scmp.eq.s32.totalorder %s15, 3
      %p54 = scmp.ne.s32.totalorder %s49, %s51
      %p55 = scmp.eq.s32.totalorder %s15, 0
      %p56 = por %p54, %p55
      %p57 = scmp.ne.s32.totalorder %s49, %s51
      %p58 = scmp.eq.s32.totalorder %s20, 3
      %p59 = por %p57, %p58
      %p60 = scmp.ne.s32.totalorder %s51, %s52
      %p61 = scmp.eq.s32.totalorder %s20, 0
      %p62 = por %p60, %p61
      %p63 = scmp.ne.s32.totalorder %s51, %s52
      %p64 = scmp.eq.s32.totalorder %s21, 3
      %p65 = por %p63, %p64
      %p67 = scmp.ne.s32.totalorder %s52, %s66
      %p68 = scmp.eq.s32.totalorder %s21, 0
      %p69 = por %p67, %p68
      %s71 = sadd.s32 %s70, 1
      %p74 = scmp.eq.s32.totalorder %s15, 3
      %p75 = scmp.ne.s32.totalorder %s70, %s72
      %p76 = scmp.eq.s32.totalorder %s15, 0
      %p77 = por %p75, %p76
      %p78 = scmp.ne.s32.totalorder %s70, %s72
      %p79 = scmp.eq.s32.totalorder %s20, 3
      %p80 = por %p78, %p79
      %p81 = scmp.ne.s32.totalorder %s72, %s73
      %p82 = scmp.eq.s32.totalorder %s20, 0
      %p83 = por %p81, %p82
      %p84 = scmp.ne.s32.totalorder %s72, %s73
      %p85 = scmp.eq.s32.totalorder %s21, 3
      %p86 = por %p84, %p85
      %p88 = scmp.ne.s32.totalorder %s73, %s87
      %p89 = scmp.eq.s32.totalorder %s21, 0
      %p90 = por %p88, %p89
      %s92 = sadd.s32 %s91, 1
      %p95 = scmp.eq.s32.totalorder %s15, 3
      %p96 = scmp.ne.s32.totalorder %s91, %s93
      %p97 = scmp.eq.s32.totalorder %s15, 0
      %p98 = por %p96, %p97
      %p99 = scmp.ne.s32.totalorder %s91, %s93
      %p100 = scmp.eq.s32.totalorder %s20, 3
      %p101 = por %p99, %p100
      %p102 = scmp.ne.s32.totalorder %s93, %s94
      %p103 = scmp.eq.s32.totalorder %s20, 0
      %p104 = por %p102, %p103
      %p105 = scmp.ne.s32.totalorder %s93, %s94
      %p106 = scmp.eq.s32.totalorder %s21, 3
      %p107 = por %p105, %p106
      %p109 = scmp.ne.s32.totalorder %s94, %s108
      %p110 = scmp.eq.s32.totalorder %s21, 0
      %p111 = por %p109, %p110
      %s113 = sadd.s32 %s112, 1
      %p116 = scmp.eq.s32.totalorder %s15, 3
      %p117 = scmp.ne.s32.totalorder %s112, %s114
      %p118 = scmp.eq.s32.totalorder %s15, 0
      %p119 = por %p117, %p118
      %p120 = scmp.ne.s32.totalorder %s112, %s114
      %p121 = scmp.eq.s32.totalorder %s20, 3
      %p122 = por %p120, %p121
      %p123 = scmp.ne.s32.totalorder %s114, %s115
      %p124 = scmp.eq.s32.totalorder %s20, 0
      %p125 = por %p123, %p124
      %p126 = scmp.ne.s32.totalorder %s114, %s115
      %p127 = scmp.eq.s32.totalorder %s21, 3
      %p128 = por %p126, %p127
      %p130 = scmp.ne.s32.totalorder %s115, %s129
      %p131 = scmp.eq.s32.totalorder %s21, 0
      %p132 = por %p130, %p131
      %s134 = sadd.s32 %s133, 1
      %p137 = scmp.eq.s32.totalorder %s15, 3
      %p138 = scmp.ne.s32.totalorder %s133, %s135
      %p139 = scmp.eq.s32.totalorder %s15, 0
      %p140 = por %p138, %p139
      %p141 = scmp.ne.s32.totalorder %s133, %s135
      %p142 = scmp.eq.s32.totalorder %s20, 3
      %p143 = por %p141, %p142
      %p144 = scmp.ne.s32.totalorder %s135, %s136
      %p145 = scmp.eq.s32.totalorder %s20, 0
      %p146 = por %p144, %p145
      %p147 = scmp.ne.s32.totalorder %s135, %s136
      %p148 = scmp.eq.s32.totalorder %s21, 3
      %p149 = por %p147, %p148
      %p151 = scmp.ne.s32.totalorder %s136, %s150
      %p152 = scmp.eq.s32.totalorder %s21, 0
      %p153 = por %p151, %p152
      %s155 = sadd.s32 %s154, 1
      %p158 = scmp.eq.s32.totalorder %s15, 3
      %p159 = scmp.ne.s32.totalorder %s154, %s156
      %p160 = scmp.eq.s32.totalorder %s15, 0
      %p161 = por %p159, %p160
      %p162 = scmp.ne.s32.totalorder %s154, %s156
      %p163 = scmp.eq.s32.totalorder %s20, 3
      %p164 = por %p162, %p163
      %p165 = scmp.ne.s32.totalorder %s156, %s157
      %p166 = scmp.eq.s32.totalorder %s20, 0
      %p167 = por %p165, %p166
      %p168 = scmp.ne.s32.totalorder %s156, %s157
      %p169 = scmp.eq.s32.totalorder %s21, 3
      %p170 = por %p168, %p169
      %p172 = scmp.ne.s32.totalorder %s157, %s171
      %p173 = scmp.eq.s32.totalorder %s21, 0
      %p174 = por %p172, %p173
      %s176 = sadd.s32 %s175, 1
      %p179 = scmp.eq.s32.totalorder %s15, 3
      %p180 = scmp.ne.s32.totalorder %s175, %s177
      %p181 = scmp.eq.s32.totalorder %s15, 0
      %p182 = por %p180, %p181
      %p183 = scmp.ne.s32.totalorder %s175, %s177
      %p184 = scmp.eq.s32.totalorder %s20, 3
      %p185 = por %p183, %p184
      %p186 = scmp.ne.s32.totalorder %s177, %s178
      %p187 = scmp.eq.s32.totalorder %s20, 0
      %p188 = por %p186, %p187
      %p189 = scmp.ne.s32.totalorder %s177, %s178
      %p190 = scmp.eq.s32.totalorder %s21, 3
      %p191 = por %p189, %p190
      %p193 = scmp.ne.s32.totalorder %s178, %s192
      %p194 = scmp.eq.s32.totalorder %s21, 0
      %p195 = por %p193, %p194
      %s196 = ssub.s32 %s15, %s22
      %p197 = scmp.eq.s32.totalorder %s196, 0
      %s199 = sadd.s32 %s198, 1
      %s200 = scalar_select %p197, %s198, %s199
      %p203 = pneg %p197
      %p204 = scmp.eq.s32.totalorder %s15, 3
      %p205 = por %p203, %p204
      %p206 = scmp.ne.s32.totalorder %s198, %s201
      %p207 = scmp.eq.s32.totalorder %s15, 0
      %p208 = por %p206, %p207
      %p209 = scmp.ne.s32.totalorder %s198, %s201
      %p210 = scmp.eq.s32.totalorder %s20, 3
      %p211 = por %p209, %p210
      %p212 = scmp.ne.s32.totalorder %s201, %s202
      %p213 = scmp.eq.s32.totalorder %s20, 0
      %p214 = por %p212, %p213
      %p215 = scmp.ne.s32.totalorder %s201, %s202
      %p216 = scmp.eq.s32.totalorder %s21, 3
      %p217 = por %p215, %p216
      %p219 = scmp.ne.s32.totalorder %s202, %s218
      %p220 = scmp.eq.s32.totalorder %s21, 0
      %p221 = por %p219, %p220
      %p222 = scmp.le.s32.totalorder 1, %s15
      %p223 = scmp.lt.s32.totalorder %s15, 5
      %p224 = pnand %p222, %p223
      %p225 = pneg %p224
      // Predicated region
      $region9: #{tpu_custom_call.1} parent=5 // pred_check
        _
      $region10: #{tpu_custom_call.1} parent=5 // pred_check_branch
        %227 = sbr.rel (%p224) target = $region12
      $region11: #{tpu_custom_call.1} parent=5 // pred_region
        %s228 = ssub.s32 %s15, 1
        // Predicated region
        $region13: #{tpu_custom_call.1} parent=11 // pred_check
          %p229 = pneg %p62
        $region14: #{tpu_custom_call.1} parent=11 // pred_check_branch
          %231 = sbr.rel (%p229) target = $region16
        $region15: #{tpu_custom_call.1} parent=11 // pred_region
          _
        $region16: #{tpu_custom_call.1} parent=11 // pred_fallthru
          _
        // Predicated region
        $region17: #{tpu_custom_call.1} parent=11 // pred_check
          %p232 = pneg %p83
        $region18: #{tpu_custom_call.1} parent=11 // pred_check_branch
          %234 = sbr.rel (%p232) target = $region20
        $region19: #{tpu_custom_call.1} parent=11 // pred_region
          _
        $region20: #{tpu_custom_call.1} parent=11 // pred_fallthru
          _
        // Predicated region
        $region21: #{tpu_custom_call.1} parent=11 // pred_check
          %p235 = pneg %p104
        $region22: #{tpu_custom_call.1} parent=11 // pred_check_branch
          %237 = sbr.rel (%p235) target = $region24
        $region23: #{tpu_custom_call.1} parent=11 // pred_region
          _
        $region24: #{tpu_custom_call.1} parent=11 // pred_fallthru
          _
        // Predicated region
        $region25: #{tpu_custom_call.1} parent=11 // pred_check
          %p238 = pneg %p125
        $region26: #{tpu_custom_call.1} parent=11 // pred_check_branch
          %240 = sbr.rel (%p238) target = $region28
        $region27: #{tpu_custom_call.1} parent=11 // pred_region
          _
        $region28: #{tpu_custom_call.1} parent=11 // pred_fallthru
          _
        // Predicated region
        $region29: #{tpu_custom_call.1} parent=11 // pred_check
          %p241 = pneg %p146
        $region30: #{tpu_custom_call.1} parent=11 // pred_check_branch
          %243 = sbr.rel (%p241) target = $region32
        $region31: #{tpu_custom_call.1} parent=11 // pred_region
          _
        $region32: #{tpu_custom_call.1} parent=11 // pred_fallthru
          _
        // Predicated region
        $region33: #{tpu_custom_call.1} parent=11 // pred_check
          %p244 = pneg %p167
        $region34: #{tpu_custom_call.1} parent=11 // pred_check_branch
          %246 = sbr.rel (%p244) target = $region36
        $region35: #{tpu_custom_call.1} parent=11 // pred_region
          _
        $region36: #{tpu_custom_call.1} parent=11 // pred_fallthru
          _
        // Predicated region
        $region37: #{tpu_custom_call.1} parent=11 // pred_check
          %p247 = pneg %p188
        $region38: #{tpu_custom_call.1} parent=11 // pred_check_branch
          %249 = sbr.rel (%p247) target = $region40
        $region39: #{tpu_custom_call.1} parent=11 // pred_region
          %s251 = ssub.s32 16, 16
          %252 = vsyncadd [#allocation4], %s251
          %s254 = sshll.u32 %s7, 4
          %s255 = int_to_ptr.vmem [resolvable:$true] %s254
          %257 = dma.vmem_to_smem %s255, 16, [#allocation3], [#allocation4]
        $region40: #{tpu_custom_call.1} parent=11 // pred_fallthru
          _
      $region12: #{tpu_custom_call.1} parent=5 // pred_fallthru
        _
      %p258 = scmp.lt.s32.totalorder %s15, 4
      // Predicated region
      $region41: #{tpu_custom_call.1} parent=5 // pred_check
        %p259 = pneg %p258
      $region42: #{tpu_custom_call.1} parent=5 // pred_check_branch
        %261 = sbr.rel (%p259) target = $region44
      $region43: #{tpu_custom_call.1} parent=5 // pred_region
        // Predicated region
        $region45: #{tpu_custom_call.1} parent=43 // pred_check
          %p262 = pneg %p35
        $region46: #{tpu_custom_call.1} parent=43 // pred_check_branch
          %264 = sbr.rel (%p262) target = $region48
        $region47: #{tpu_custom_call.1} parent=43 // pred_region
          %s265 = smul.u32 2, %s15
          %p266 = scmp.lt.s32.totalorder %s265, 7
          %s267 = scalar_select %p266, %s265, 7
          %s268 = smul.addr %s267, 8
          %s269 = scalar_lea.vmem %s0, %s268
          %s270 = smul.u32 2, %s15
        $region48: #{tpu_custom_call.1} parent=43 // pred_fallthru
          _
      $region44: #{tpu_custom_call.1} parent=5 // pred_fallthru
        _
      %p271 = scmp.le.s32.totalorder 1, %s15
      %p272 = scmp.lt.s32.totalorder %s15, 5
      %p273 = pnand %p271, %p272
      %p274 = pneg %p273
      // Predicated region
      $region49: #{tpu_custom_call.1} parent=5 // pred_check
        _
      $region50: #{tpu_custom_call.1} parent=5 // pred_check_branch
        %276 = sbr.rel (%p273) target = $region52
      $region51: #{tpu_custom_call.1} parent=5 // pred_region
        %s277 = ssub.s32 %s15, 1
        // Predicated region
        $region53: #{tpu_custom_call.1} parent=51 // pred_check
          %p278 = pneg %p188
        $region54: #{tpu_custom_call.1} parent=51 // pred_check_branch
          %280 = sbr.rel (%p278) target = $region56
        $region55: #{tpu_custom_call.1} parent=51 // pred_region
          %281 = dma.done [#allocation4], 16
        $region56: #{tpu_custom_call.1} parent=51 // pred_fallthru
          _
        %282 = sfence
        %s283 = smul.u32 2, %s20
        %p284 = scmp.lt.s32.totalorder %s283, 7
        %s285 = scalar_select %p284, %s283, 7
        %s286 = smul.addr %s285, 8
        %s287 = scalar_lea.vmem %s0, %s286
        %p288 = pneg %p41
        %p289 = pneg %p38
        %p290 = pneg %p62
        %p291 = pneg %p59
        %p292 = pneg %p83
        %p293 = pneg %p80
        %p294 = pneg %p104
        %p295 = pneg %p101
        %p296 = pneg %p125
        %p297 = pneg %p122
        %p298 = pneg %p146
        %p299 = pneg %p143
        %p300 = pneg %p167
        %p301 = pneg %p164
        %p302 = pneg %p188
        %p303 = pneg %p185
        %p304 = pneg %p214
        %p305 = pneg %p211
        %s306 = smul.u32 2, %s20
        %p307 = scmp.lt.s32.totalorder %s306, 7
        %s308 = scalar_select %p307, %s306, 7
        %s309 = smul.addr %s308, 8
        %s310 = scalar_lea.vmem %s8, %s309
        %s311 = smul.u32 2, %s20
        %p312 = scmp.lt.s32.totalorder %s311, 7
        %s313 = scalar_select %p312, %s311, 7
        %s314 = smul.addr %s313, 8
        %s315 = scalar_lea.vmem %s0, %s314
        %s316 = smul.u32 2, %s20
        %s317 = smul.u32 2, %s20
        %p318 = scmp.lt.s32.totalorder %s317, 7
        %s319 = scalar_select %p318, %s317, 7
        %s320 = smul.addr %s319, 8
        %s321 = scalar_lea.vmem %s8, %s320
        %s322 = smul.u32 2, %s20
        %v323 = vld [vmem:[%s315] sm:$0xff]
        %v324 = vld [vmem:[%s315 + $0x8] sm:$0xff]
        %v325 = vmul.f32 %v323, 0.5
        %v326 = vmul.f32 %v324, 0.5
        %v327 = vmul.f32 %v323, 0.70710677
        %v328 = vmul.f32 %v324, 0.70710677
        %v329 = vand.u32 2147483647, %v327
        %v330 = vand.u32 2147483647, %v328
        %v331 = vmul.f32 %v329, 0.3275911
        %v332 = vmul.f32 %v330, 0.3275911
        %v333 = vadd.f32 %v331, 1.0
        %v334 = vadd.f32 %v332, 1.0
        %v335 = vrcp.pop %v333
        %v336 = vmul.f32 1.0, %v335
        %v337 = vrcp.pop %v334
        %v338 = vmul.f32 1.0, %v337
        %v339 = vmul.f32 %v336, 1.0614054
        %v340 = vmul.f32 %v338, 1.0614054
        %v341 = vadd.f32 %v339, -1.4531521
        %v342 = vadd.f32 %v340, -1.4531521
        %v343 = vmul.f32 %v341, %v336
        %v344 = vmul.f32 %v342, %v338
        %v345 = vadd.f32 %v343, 1.4214138
        %v346 = vadd.f32 %v344, 1.4214138
        %v347 = vmul.f32 %v345, %v336
        %v348 = vmul.f32 %v346, %v338
        %v349 = vadd.f32 %v347, -0.28449672
        %v350 = vadd.f32 %v348, -0.28449672
        %v351 = vmul.f32 %v349, %v336
        %v352 = vmul.f32 %v350, %v338
        %v353 = vadd.f32 %v351, 0.2548296
        %v354 = vadd.f32 %v352, 0.2548296
        %v355 = vmul.f32 %v353, %v336
        %v356 = vmul.f32 %v354, %v338
        %v357 = vsub.f32 0.0, %v329
        %v358 = vsub.f32 0.0, %v330
        %v359 = vmul.f32 %v357, %v329
        %v360 = vmul.f32 %v358, %v330
        %v361 = vmul.f32 %v359, 1.442695
        %v362 = vpow.pop %v361
        %v363 = vmul.f32 %v360, 1.442695
        %v364 = vpow.pop %v363
        %v365 = vmul.f32 %v355, %v362
        %v366 = vmul.f32 %v356, %v364
        %v367 = vsub.f32 1.0, %v365
        %v368 = vsub.f32 1.0, %v366
        %vm369 = vcmp.ge.f32.partialorder %v327, 0.0
        %vm370 = vcmp.ge.f32.partialorder %v328, 0.0
        %v371 = vsub.f32 0.0, %v367
        %v372 = vsub.f32 0.0, %v368
        %v373 = vsel %vm369, %v367, %v371
        %v374 = vsel %vm370, %v368, %v372
        %v375 = vadd.f32 %v373, 1.0
        %v376 = vadd.f32 %v374, 1.0
        %v377 = vmul.f32 %v325, %v375
        %v378 = vmul.f32 %v326, %v376
        %vm379 = vcmask 261120
        %380 = vst.msk [vmem:[#allocation2] sm:$0xff] %vm379, %v377
        %381 = vst.msk [vmem:[#allocation2 + $0x28] sm:$0xff] %vm379, %v378
        %vm382 = vcmp.ge.f32.partialorder %v323, -2.2
        %vm383 = vcmp.ge.f32.partialorder %v324, -2.2
        %vm384 = vcmp.lt.f32.partialorder %v323, -1.8
        %vm385 = vcmp.lt.f32.partialorder %v324, -1.8
        %vm386 = vmand %vm382, %vm384
        %vm387 = vmand %vm383, %vm385
        %v388 = vsel %vm386, 1, 0
        %v389 = vsel %vm387, 1, 0
        %v390 = vcvt.s32.f32 %v388
        %v391 = vcvt.s32.f32 %v389
        %vm392 = vcmp.ge.f32.partialorder %v323, -1.8
        %vm393 = vcmp.ge.f32.partialorder %v324, -1.8
        %vm394 = vcmp.lt.f32.partialorder %v323, -1.4
        %vm395 = vcmp.lt.f32.partialorder %v324, -1.4
        %vm396 = vmand %vm392, %vm394
        %vm397 = vmand %vm393, %vm395
        %v398 = vsel %vm396, 1, 0
        %v399 = vsel %vm397, 1, 0
        %v400 = vcvt.s32.f32 %v398
        %v401 = vcvt.s32.f32 %v399
        %vm402 = vcmp.ge.f32.partialorder %v323, -1.4
        %vm403 = vcmp.ge.f32.partialorder %v324, -1.4
        %vm404 = vcmp.lt.f32.partialorder %v323, -1.0
        %vm405 = vcmp.lt.f32.partialorder %v324, -1.0
        %vm406 = vmand %vm402, %vm404
        %vm407 = vmand %vm403, %vm405
        %v408 = vsel %vm406, 1, 0
        %v409 = vsel %vm407, 1, 0
        %v410 = vcvt.s32.f32 %v408
        %v411 = vcvt.s32.f32 %v409
        %vm412 = vcmp.ge.f32.partialorder %v323, -1.0
        %vm413 = vcmp.ge.f32.partialorder %v324, -1.0
        %vm414 = vcmp.lt.f32.partialorder %v323, -0.6
        %vm415 = vcmp.lt.f32.partialorder %v324, -0.6
        %vm416 = vmand %vm412, %vm414
        %vm417 = vmand %vm413, %vm415
        %v418 = vsel %vm416, 1, 0
        %v419 = vsel %vm417, 1, 0
        %v420 = vcvt.s32.f32 %v418
        %v421 = vcvt.s32.f32 %v419
        %v422 = vsub.f32 %v323, -2.2
        %v423 = vsub.f32 %v324, -2.2
        %v424 = vmul.f32 %v422, 2.4999995
        %v425 = vmul.f32 %v423, 2.4999995
        %v426 = vmul.f32 %v424, %v390
        %v427 = vmul.f32 %v425, %v391
        %v428 = vsub.f32 -1.4, %v323
        %v429 = vsub.f32 -1.4, %v324
        %v430 = vmul.f32 %v428, 2.5000002
        %v431 = vmul.f32 %v429, 2.5000002
        %v432 = vmul.f32 %v430, %v400
        %v433 = vmul.f32 %v431, %v401
        %v434 = vadd.f32 %v426, %v432
        %v435 = vadd.f32 %v427, %v433
        %v436 = vsub.f32 %v323, -1.8
        %v437 = vsub.f32 %v324, -1.8
        %v438 = vmul.f32 %v436, 2.5000002
        %v439 = vmul.f32 %v437, 2.5000002
        %v440 = vmul.f32 %v438, %v400
        %v441 = vmul.f32 %v439, %v401
        %v442 = vsub.f32 -1.0, %v323
        %v443 = vsub.f32 -1.0, %v324
        %v444 = vmul.f32 %v442, 2.5000002
        %v445 = vmul.f32 %v443, 2.5000002
        %v446 = vmul.f32 %v444, %v410
        %v447 = vmul.f32 %v445, %v411
        %v448 = vadd.f32 %v440, %v446
        %v449 = vadd.f32 %v441, %v447
        %v450 = vsub.f32 %v323, -1.4
        %v451 = vsub.f32 %v324, -1.4
        %v452 = vmul.f32 %v450, 2.5000002
        %v453 = vmul.f32 %v451, 2.5000002
        %v454 = vmul.f32 %v452, %v410
        %v455 = vmul.f32 %v453, %v411
        %v456 = vsub.f32 -0.6, %v323
        %v457 = vsub.f32 -0.6, %v324
        %v458 = vmul.f32 %v456, 2.5000002
        %v459 = vmul.f32 %v457, 2.5000002
        %v460 = vmul.f32 %v458, %v420
        %v461 = vmul.f32 %v459, %v421
        %v462 = vadd.f32 %v454, %v460
        %v463 = vadd.f32 %v455, %v461
        %v464 = vmul.f32 %v422, 1.2499999
        %v465 = vmul.f32 %v423, 1.2499999
        %v466 = vmul.f32 %v464, %v434
        %v467 = vmul.f32 %v465, %v435
        %v468 = vmul.f32 %v442, 1.2500001
        %v469 = vmul.f32 %v443, 1.2500001
        %v470 = vmul.f32 %v468, %v448
        %v471 = vmul.f32 %v469, %v449
        %v472 = vadd.f32 %v466, %v470
        %v473 = vadd.f32 %v467, %v471
        %v474 = vmul.f32 %v436, 1.2500001
        %v475 = vmul.f32 %v437, 1.2500001
        %v476 = vmul.f32 %v474, %v448
        %v477 = vmul.f32 %v475, %v449
        %v478 = vmul.f32 %v456, 1.2500001
        %v479 = vmul.f32 %v457, 1.2500001
        %v480 = vmul.f32 %v478, %v462
        %v481 = vmul.f32 %v479, %v463
        %v482 = vadd.f32 %v476, %v480
        %v483 = vadd.f32 %v477, %v481
        %v484 = vmul.f32 %v422, 0.8333333
        %v485 = vmul.f32 %v423, 0.8333333
        %v486 = vmul.f32 %v484, %v472
        %v487 = vmul.f32 %v485, %v473
        %v488 = vmul.f32 %v456, 0.8333334
        %v489 = vmul.f32 %v457, 0.8333334
        %v490 = vmul.f32 %v488, %v482
        %v491 = vmul.f32 %v489, %v483
        %v492 = vadd.f32 %v486, %v490
        %v493 = vadd.f32 %v487, %v491
        %496 = vrot.lane.b32.xlu0 %v492, 32
        %v497 = vpop.permute.xlu0 %496
        %498 = vrot.lane.b32.xlu0 %v493, 32
        %v499 = vpop.permute.xlu0 %498
        %vm502 = vcmask 523520
        %503 = vst.msk [vmem:[#allocation2] sm:$0xff] %vm502, %v497
        %504 = vst.msk [vmem:[#allocation2 + $0x28] sm:$0xff] %vm502, %v499
        %vm505 = vcmp.ge.f32.partialorder %v323, -0.6
        %vm506 = vcmp.ge.f32.partialorder %v324, -0.6
        %vm507 = vcmp.lt.f32.partialorder %v323, -0.2
        %vm508 = vcmp.lt.f32.partialorder %v324, -0.2
        %vm509 = vmand %vm505, %vm507
        %vm510 = vmand %vm506, %vm508
        %v511 = vsel %vm509, 1, 0
        %v512 = vsel %vm510, 1, 0
        %v513 = vcvt.s32.f32 %v511
        %v514 = vcvt.s32.f32 %v512
        %v515 = vsub.f32 %v323, -1.0
        %v516 = vsub.f32 %v324, -1.0
        %v517 = vmul.f32 %v515, 2.5000002
        %v518 = vmul.f32 %v516, 2.5000002
        %v519 = vmul.f32 %v517, %v420
        %v520 = vmul.f32 %v518, %v421
        %v521 = vsub.f32 -0.2, %v323
        %v522 = vsub.f32 -0.2, %v324
        %v523 = vmul.f32 %v521, 2.4999998
        %v524 = vmul.f32 %v522, 2.4999998
        %v525 = vmul.f32 %v523, %v513
        %v526 = vmul.f32 %v524, %v514
        %v527 = vadd.f32 %v519, %v525
        %v528 = vadd.f32 %v520, %v526
        %v529 = vmul.f32 %v450, 1.2500001
        %v530 = vmul.f32 %v451, 1.2500001
        %v531 = vmul.f32 %v529, %v462
        %v532 = vmul.f32 %v530, %v463
        %v533 = vmul.f32 %v521, 1.25
        %v534 = vmul.f32 %v522, 1.25
        %v535 = vmul.f32 %v533, %v527
        %v536 = vmul.f32 %v534, %v528
        %v537 = vadd.f32 %v531, %v535
        %v538 = vadd.f32 %v532, %v536
        %v539 = vmul.f32 %v436, 0.8333334
        %v540 = vmul.f32 %v437, 0.8333334
        %v541 = vmul.f32 %v539, %v482
        %v542 = vmul.f32 %v540, %v483
        %v543 = vmul.f32 %v521, 0.8333334
        %v544 = vmul.f32 %v522, 0.8333334
        %v545 = vmul.f32 %v543, %v537
        %v546 = vmul.f32 %v544, %v538
        %v547 = vadd.f32 %v541, %v545
        %v548 = vadd.f32 %v542, %v546
        %551 = vrot.lane.b32.xlu0 %v547, 64
        %v552 = vpop.permute.xlu0 %551
        %553 = vrot.lane.b32.xlu0 %v548, 64
        %v554 = vpop.permute.xlu0 %553
        %vm557 = vcmask 785920
        %558 = vst.msk [vmem:[#allocation2] sm:$0xff] %vm557, %v552
        %559 = vst.msk [vmem:[#allocation2 + $0x28] sm:$0xff] %vm557, %v554
        %vm560 = vcmp.ge.f32.partialorder %v323, -0.2
        %vm561 = vcmp.ge.f32.partialorder %v324, -0.2
        %vm562 = vcmp.lt.f32.partialorder %v323, 0.2
        %vm563 = vcmp.lt.f32.partialorder %v324, 0.2
        %vm564 = vmand %vm560, %vm562
        %vm565 = vmand %vm561, %vm563
        %v566 = vsel %vm564, 1, 0
        %v567 = vsel %vm565, 1, 0
        %v568 = vcvt.s32.f32 %v566
        %v569 = vcvt.s32.f32 %v567
        %v570 = vsub.f32 %v323, -0.6
        %v571 = vsub.f32 %v324, -0.6
        %v572 = vmul.f32 %v570, 2.4999998
        %v573 = vmul.f32 %v571, 2.4999998
        %v574 = vmul.f32 %v572, %v513
        %v575 = vmul.f32 %v573, %v514
        %v576 = vsub.f32 0.2, %v323
        %v577 = vsub.f32 0.2, %v324
        %v578 = vmul.f32 %v576, 2.5
        %v579 = vmul.f32 %v577, 2.5
        %v580 = vmul.f32 %v578, %v568
        %v581 = vmul.f32 %v579, %v569
        %v582 = vadd.f32 %v574, %v580
        %v583 = vadd.f32 %v575, %v581
        %v584 = vmul.f32 %v515, 1.25
        %v585 = vmul.f32 %v516, 1.25
        %v586 = vmul.f32 %v584, %v527
        %v587 = vmul.f32 %v585, %v528
        %v588 = vmul.f32 %v576, 1.25
        %v589 = vmul.f32 %v577, 1.25
        %v590 = vmul.f32 %v588, %v582
        %v591 = vmul.f32 %v589, %v583
        %v592 = vadd.f32 %v586, %v590
        %v593 = vadd.f32 %v587, %v591
        %v594 = vmul.f32 %v450, 0.8333334
        %v595 = vmul.f32 %v451, 0.8333334
        %v596 = vmul.f32 %v594, %v537
        %v597 = vmul.f32 %v595, %v538
        %v598 = vmul.f32 %v576, 0.8333333
        %v599 = vmul.f32 %v577, 0.8333333
        %v600 = vmul.f32 %v598, %v592
        %v601 = vmul.f32 %v599, %v593
        %v602 = vadd.f32 %v596, %v600
        %v603 = vadd.f32 %v597, %v601
        %606 = vrot.lane.b32.xlu0 %v602, 96
        %v607 = vpop.permute.xlu0 %606
        %608 = vrot.lane.b32.xlu0 %v603, 96
        %v609 = vpop.permute.xlu0 %608
        %vm612 = vcmask 1048320
        %613 = vst.msk [vmem:[#allocation2] sm:$0xff] %vm612, %v607
        %614 = vst.msk [vmem:[#allocation2 + $0x28] sm:$0xff] %vm612, %v609
        %vm615 = vcmp.ge.f32.partialorder %v323, 0.2
        %vm616 = vcmp.ge.f32.partialorder %v324, 0.2
        %vm617 = vcmp.lt.f32.partialorder %v323, 0.6
        %vm618 = vcmp.lt.f32.partialorder %v324, 0.6
        %vm619 = vmand %vm615, %vm617
        %vm620 = vmand %vm616, %vm618
        %v621 = vsel %vm619, 1, 0
        %v622 = vsel %vm620, 1, 0
        %v623 = vcvt.s32.f32 %v621
        %v624 = vcvt.s32.f32 %v622
        %v625 = vsub.f32 %v323, -0.2
        %v626 = vsub.f32 %v324, -0.2
        %v627 = vmul.f32 %v625, 2.5
        %v628 = vmul.f32 %v626, 2.5
        %v629 = vmul.f32 %v627, %v568
        %v630 = vmul.f32 %v628, %v569
        %v631 = vsub.f32 0.6, %v323
        %v632 = vsub.f32 0.6, %v324
        %v633 = vmul.f32 %v631, 2.4999998
        %v634 = vmul.f32 %v632, 2.4999998
        %v635 = vmul.f32 %v633, %v623
        %v636 = vmul.f32 %v634, %v624
        %v637 = vadd.f32 %v629, %v635
        %v638 = vadd.f32 %v630, %v636
        %v639 = vmul.f32 %v570, 1.25
        %v640 = vmul.f32 %v571, 1.25
        %v641 = vmul.f32 %v639, %v582
        %v642 = vmul.f32 %v640, %v583
        %v643 = vmul.f32 %v631, 1.25
        %v644 = vmul.f32 %v632, 1.25
        %v645 = vmul.f32 %v643, %v637
        %v646 = vmul.f32 %v644, %v638
        %v647 = vadd.f32 %v641, %v645
        %v648 = vadd.f32 %v642, %v646
        %v649 = vmul.f32 %v515, 0.8333333
        %v650 = vmul.f32 %v516, 0.8333333
        %v651 = vmul.f32 %v649, %v592
        %v652 = vmul.f32 %v650, %v593
        %v653 = vmul.f32 %v631, 0.8333333
        %v654 = vmul.f32 %v632, 0.8333333
        %v655 = vmul.f32 %v653, %v647
        %v656 = vmul.f32 %v654, %v648
        %v657 = vadd.f32 %v651, %v655
        %v658 = vadd.f32 %v652, %v656
        %659 = vst.msk [vmem:[#allocation2 + $0x8] sm:$0xff] %vm379, %v657
        %660 = vst.msk [vmem:[#allocation2 + $0x30] sm:$0xff] %vm379, %v658
        %vm661 = vcmp.ge.f32.partialorder %v323, 0.6
        %vm662 = vcmp.ge.f32.partialorder %v324, 0.6
        %vm663 = vcmp.lt.f32.partialorder %v323, 1.0
        %vm664 = vcmp.lt.f32.partialorder %v324, 1.0
        %vm665 = vmand %vm661, %vm663
        %vm666 = vmand %vm662, %vm664
        %v667 = vsel %vm665, 1, 0
        %v668 = vsel %vm666, 1, 0
        %v669 = vcvt.s32.f32 %v667
        %v670 = vcvt.s32.f32 %v668
        %v671 = vsub.f32 %v323, 0.2
        %v672 = vsub.f32 %v324, 0.2
        %v673 = vmul.f32 %v671, 2.4999998
        %v674 = vmul.f32 %v672, 2.4999998
        %v675 = vmul.f32 %v673, %v623
        %v676 = vmul.f32 %v674, %v624
        %v677 = vsub.f32 1.0, %v323
        %v678 = vsub.f32 1.0, %v324
        %v679 = vmul.f32 %v677, 2.5000002
        %v680 = vmul.f32 %v678, 2.5000002
        %v681 = vmul.f32 %v679, %v669
        %v682 = vmul.f32 %v680, %v670
        %v683 = vadd.f32 %v675, %v681
        %v684 = vadd.f32 %v676, %v682
        %v685 = vmul.f32 %v625, 1.25
        %v686 = vmul.f32 %v626, 1.25
        %v687 = vmul.f32 %v685, %v637
        %v688 = vmul.f32 %v686, %v638
        %v689 = vmul.f32 %v677, 1.25
        %v690 = vmul.f32 %v678, 1.25
        %v691 = vmul.f32 %v689, %v683
        %v692 = vmul.f32 %v690, %v684
        %v693 = vadd.f32 %v687, %v691
        %v694 = vadd.f32 %v688, %v692
        %v695 = vmul.f32 %v570, 0.8333333
        %v696 = vmul.f32 %v571, 0.8333333
        %v697 = vmul.f32 %v695, %v647
        %v698 = vmul.f32 %v696, %v648
        %v699 = vmul.f32 %v677, 0.8333333
        %v700 = vmul.f32 %v678, 0.8333333
        %v701 = vmul.f32 %v699, %v693
        %v702 = vmul.f32 %v700, %v694
        %v703 = vadd.f32 %v697, %v701
        %v704 = vadd.f32 %v698, %v702
        %707 = vrot.lane.b32.xlu0 %v703, 32
        %v708 = vpop.permute.xlu0 %707
        %709 = vrot.lane.b32.xlu0 %v704, 32
        %v710 = vpop.permute.xlu0 %709
        %713 = vst.msk [vmem:[#allocation2 + $0x8] sm:$0xff] %vm502, %v708
        %714 = vst.msk [vmem:[#allocation2 + $0x30] sm:$0xff] %vm502, %v710
        %vm715 = vcmp.ge.f32.partialorder %v323, 1.0
        %vm716 = vcmp.ge.f32.partialorder %v324, 1.0
        %vm717 = vcmp.lt.f32.partialorder %v323, 1.4
        %vm718 = vcmp.lt.f32.partialorder %v324, 1.4
        %vm719 = vmand %vm715, %vm717
        %vm720 = vmand %vm716, %vm718
        %v721 = vsel %vm719, 1, 0
        %v722 = vsel %vm720, 1, 0
        %v723 = vcvt.s32.f32 %v721
        %v724 = vcvt.s32.f32 %v722
        %v725 = vsub.f32 %v323, 0.6
        %v726 = vsub.f32 %v324, 0.6
        %v727 = vmul.f32 %v725, 2.5000002
        %v728 = vmul.f32 %v726, 2.5000002
        %v729 = vmul.f32 %v727, %v669
        %v730 = vmul.f32 %v728, %v670
        %v731 = vsub.f32 1.4, %v323
        %v732 = vsub.f32 1.4, %v324
        %v733 = vmul.f32 %v731, 2.5000002
        %v734 = vmul.f32 %v732, 2.5000002
        %v735 = vmul.f32 %v733, %v723
        %v736 = vmul.f32 %v734, %v724
        %v737 = vadd.f32 %v729, %v735
        %v738 = vadd.f32 %v730, %v736
        %v739 = vmul.f32 %v671, 1.25
        %v740 = vmul.f32 %v672, 1.25
        %v741 = vmul.f32 %v739, %v683
        %v742 = vmul.f32 %v740, %v684
        %v743 = vmul.f32 %v731, 1.2500001
        %v744 = vmul.f32 %v732, 1.2500001
        %v745 = vmul.f32 %v743, %v737
        %v746 = vmul.f32 %v744, %v738
        %v747 = vadd.f32 %v741, %v745
        %v748 = vadd.f32 %v742, %v746
        %v749 = vmul.f32 %v625, 0.8333333
        %v750 = vmul.f32 %v626, 0.8333333
        %v751 = vmul.f32 %v749, %v693
        %v752 = vmul.f32 %v750, %v694
        %v753 = vmul.f32 %v731, 0.8333334
        %v754 = vmul.f32 %v732, 0.8333334
        %v755 = vmul.f32 %v753, %v747
        %v756 = vmul.f32 %v754, %v748
        %v757 = vadd.f32 %v751, %v755
        %v758 = vadd.f32 %v752, %v756
        %761 = vrot.lane.b32.xlu0 %v757, 64
        %v762 = vpop.permute.xlu0 %761
        %763 = vrot.lane.b32.xlu0 %v758, 64
        %v764 = vpop.permute.xlu0 %763
        %767 = vst.msk [vmem:[#allocation2 + $0x8] sm:$0xff] %vm557, %v762
        %768 = vst.msk [vmem:[#allocation2 + $0x30] sm:$0xff] %vm557, %v764
        %vm769 = vcmp.ge.f32.partialorder %v323, 1.4
        %vm770 = vcmp.ge.f32.partialorder %v324, 1.4
        %vm771 = vcmp.lt.f32.partialorder %v323, 1.8
        %vm772 = vcmp.lt.f32.partialorder %v324, 1.8
        %vm773 = vmand %vm769, %vm771
        %vm774 = vmand %vm770, %vm772
        %v775 = vsel %vm773, 1, 0
        %v776 = vsel %vm774, 1, 0
        %v777 = vcvt.s32.f32 %v775
        %v778 = vcvt.s32.f32 %v776
        %v779 = vsub.f32 %v323, 1.0
        %v780 = vsub.f32 %v324, 1.0
        %v781 = vmul.f32 %v779, 2.5000002
        %v782 = vmul.f32 %v780, 2.5000002
        %v783 = vmul.f32 %v781, %v723
        %v784 = vmul.f32 %v782, %v724
        %v785 = vsub.f32 1.8, %v323
        %v786 = vsub.f32 1.8, %v324
        %v787 = vmul.f32 %v785, 2.5000002
        %v788 = vmul.f32 %v786, 2.5000002
        %v789 = vmul.f32 %v787, %v777
        %v790 = vmul.f32 %v788, %v778
        %v791 = vadd.f32 %v783, %v789
        %v792 = vadd.f32 %v784, %v790
        %v793 = vmul.f32 %v725, 1.2500001
        %v794 = vmul.f32 %v726, 1.2500001
        %v795 = vmul.f32 %v793, %v737
        %v796 = vmul.f32 %v794, %v738
        %v797 = vmul.f32 %v785, 1.2500001
        %v798 = vmul.f32 %v786, 1.2500001
        %v799 = vmul.f32 %v797, %v791
        %v800 = vmul.f32 %v798, %v792
        %v801 = vadd.f32 %v795, %v799
        %v802 = vadd.f32 %v796, %v800
        %v803 = vmul.f32 %v671, 0.8333334
        %v804 = vmul.f32 %v672, 0.8333334
        %v805 = vmul.f32 %v803, %v747
        %v806 = vmul.f32 %v804, %v748
        %v807 = vmul.f32 %v785, 0.8333334
        %v808 = vmul.f32 %v786, 0.8333334
        %v809 = vmul.f32 %v807, %v801
        %v810 = vmul.f32 %v808, %v802
        %v811 = vadd.f32 %v805, %v809
        %v812 = vadd.f32 %v806, %v810
        %815 = vrot.lane.b32.xlu0 %v811, 96
        %v816 = vpop.permute.xlu0 %815
        %817 = vrot.lane.b32.xlu0 %v812, 96
        %v818 = vpop.permute.xlu0 %817
        %821 = vst.msk [vmem:[#allocation2 + $0x8] sm:$0xff] %vm612, %v816
        %822 = vst.msk [vmem:[#allocation2 + $0x30] sm:$0xff] %vm612, %v818
        %vm823 = vcmp.ge.f32.partialorder %v323, 1.8
        %vm824 = vcmp.ge.f32.partialorder %v324, 1.8
        %vm825 = vcmp.lt.f32.partialorder %v323, 2.2
        %vm826 = vcmp.lt.f32.partialorder %v324, 2.2
        %vm827 = vmand %vm823, %vm825
        %vm828 = vmand %vm824, %vm826
        %v829 = vsel %vm827, 1, 0
        %v830 = vsel %vm828, 1, 0
        %v831 = vcvt.s32.f32 %v829
        %v832 = vcvt.s32.f32 %v830
        %v833 = vsub.f32 %v323, 1.4
        %v834 = vsub.f32 %v324, 1.4
        %v835 = vmul.f32 %v833, 2.5000002
        %v836 = vmul.f32 %v834, 2.5000002
        %v837 = vmul.f32 %v835, %v777
        %v838 = vmul.f32 %v836, %v778
        %v839 = vsub.f32 2.2, %v323
        %v840 = vsub.f32 2.2, %v324
        %v841 = vmul.f32 %v839, 2.4999995
        %v842 = vmul.f32 %v840, 2.4999995
        %v843 = vmul.f32 %v841, %v831
        %v844 = vmul.f32 %v842, %v832
        %v845 = vadd.f32 %v837, %v843
        %v846 = vadd.f32 %v838, %v844
        %v847 = vmul.f32 %v779, 1.2500001
        %v848 = vmul.f32 %v780, 1.2500001
        %v849 = vmul.f32 %v847, %v791
        %v850 = vmul.f32 %v848, %v792
        %v851 = vmul.f32 %v839, 1.2499999
        %v852 = vmul.f32 %v840, 1.2499999
        %v853 = vmul.f32 %v851, %v845
        %v854 = vmul.f32 %v852, %v846
        %v855 = vadd.f32 %v849, %v853
        %v856 = vadd.f32 %v850, %v854
        %v857 = vmul.f32 %v725, 0.8333334
        %v858 = vmul.f32 %v726, 0.8333334
        %v859 = vmul.f32 %v857, %v801
        %v860 = vmul.f32 %v858, %v802
        %v861 = vmul.f32 %v839, 0.8333333
        %v862 = vmul.f32 %v840, 0.8333333
        %v863 = vmul.f32 %v861, %v855
        %v864 = vmul.f32 %v862, %v856
        %v865 = vadd.f32 %v859, %v863
        %v866 = vadd.f32 %v860, %v864
        %867 = vst.msk [vmem:[#allocation2 + $0x10] sm:$0xff] %vm379, %v865
        %868 = vst.msk [vmem:[#allocation2 + $0x38] sm:$0xff] %vm379, %v866
        %v869 = vld [vmem:[#allocation2] sm:$0xff]
        %v870 = vld [vmem:[#allocation2 + $0x8] sm:$0xff]
        %v871 = vld [vmem:[#allocation2 + $0x10] sm:$0xff]
        %v872 = vld [vmem:[#allocation2 + $0x28] sm:$0xff]
        %v873 = vld [vmem:[#allocation2 + $0x30] sm:$0xff]
        %v874 = vld [vmem:[#allocation2 + $0x38] sm:$0xff]
        %v875 = vld [vmem:[%s1] sm:$0xff]
        %v876 = vld [vmem:[%s1 + $0x8] sm:$0xff]
        %v877 = vld [vmem:[%s1 + $0x10] sm:$0xff]
        %v878 = vld [vmem:[%s1 + $0x18] sm:$0xff]
        %v879 = vld [vmem:[%s1 + $0x20] sm:$0xff]
        %v880 = vld [vmem:[%s1 + $0x28] sm:$0xff]
        %v881 = vld [vmem:[%s1 + $0x30] sm:$0xff]
        %v882 = vld [vmem:[%s1 + $0x38] sm:$0xff]
        %v883 = vld [vmem:[%s1 + $0x40] sm:$0xff]
        %v884 = vld [vmem:[%s1 + $0x48] sm:$0xff]
        %v885 = vld [vmem:[%s1 + $0x50] sm:$0xff]
        %v886 = vld [vmem:[%s1 + $0x58] sm:$0xff]
        %v887 = vld [vmem:[%s1 + $0x60] sm:$0xff]
        %v888 = vld [vmem:[%s1 + $0x68] sm:$0xff]
        %v889 = vld [vmem:[%s1 + $0x70] sm:$0xff]
        %v890 = vld [vmem:[%s1 + $0x78] sm:$0xff]
        %v891 = vld [vmem:[%s1 + $0x80] sm:$0xff]
        %v892 = vld [vmem:[%s1 + $0x88] sm:$0xff]
        %v893 = vld [vmem:[%s1 + $0x90] sm:$0xff]
        %v894 = vld [vmem:[%s1 + $0x98] sm:$0xff]
        %v895 = vld [vmem:[%s1 + $0xa0] sm:$0xff]
        %v896 = vld [vmem:[%s1 + $0xa8] sm:$0xff]
        %v897 = vld [vmem:[%s1 + $0xb0] sm:$0xff]
        %v898 = vld [vmem:[%s1 + $0xb8] sm:$0xff]
        %v899 = vld [vmem:[%s1 + $0xc0] sm:$0xff]
        %v900 = vld [vmem:[%s1 + $0xc8] sm:$0xff]
        %v901 = vld [vmem:[%s1 + $0xd0] sm:$0xff]
        %v902 = vld [vmem:[%s1 + $0xd8] sm:$0xff]
        %v903 = vld [vmem:[%s1 + $0xe0] sm:$0xff]
        %v904 = vld [vmem:[%s1 + $0xe8] sm:$0xff]
        %v905 = vld [vmem:[%s1 + $0xf0] sm:$0xff]
        %v906 = vld [vmem:[%s1 + $0xf8] sm:$0xff]
        %v907 = vld [vmem:[%s1 + $0x100] sm:$0xff]
        %v908 = vld [vmem:[%s1 + $0x108] sm:$0xff]
        %v909 = vld [vmem:[%s1 + $0x110] sm:$0xff]
        %v910 = vld [vmem:[%s1 + $0x118] sm:$0xff]
        %v912 = vsel %vm379, %v871, 0
        %v915 = vsel %vm379, %v874, 0
        %917 = vmatprep.subr.mxu0 0.0
        %918 = vmatpush1.msra.mxu0 %v875
        %919 = vmatprep.subr.mxu0 0.0
        %920 = vmatpush1.msra.mxu0 %v876
        %921 = vmatprep.subr.mxu0 0.0
        %922 = vmatpush1.msra.mxu0 %v877
        %923 = vmatprep.subr.mxu0 0.0
        %924 = vmatpush1.msra.mxu0 %v878
        %925 = vmatprep.subr.mxu0 0.0
        %926 = vmatpush1.msra.mxu0 %v879
        %927 = vmatprep.subr.mxu0 0.0
        %928 = vmatpush1.msra.mxu0 %v880
        %929 = vmatprep.subr.mxu0 0.0
        %930 = vmatpush1.msra.mxu0 %v881
        %931 = vmatprep.subr.mxu0 0.0
        %932 = vmatpush1.msra.mxu0 %v882
        %933 = vmatprep.subr.mxu0 0.0
        %934 = vmatpush1.msra.mxu0 %v883
        %935 = vmatprep.subr.mxu0 0.0
        %936 = vmatpush1.msra.mxu0 %v884
        %937 = vmatprep.subr.mxu0 0.0
        %938 = vmatpush1.msra.mxu0 %v885
        %939 = vmatprep.subr.mxu0 0.0
        %940 = vmatpush1.msra.mxu0 %v886
        %941 = vmatprep.subr.mxu0 0.0
        %942 = vmatpush1.msra.mxu0 %v887
        %943 = vmatprep.subr.mxu0 0.0
        %944 = vmatpush1.msra.mxu0 %v888
        %945 = vmatprep.subr.mxu0 0.0
        %946 = vmatpush1.msra.mxu0 %v889
        %947 = vmatprep.subr.mxu0 0.0
        %948 = vmatpush1.msra.mxu0 %v890
        %949 = vmatprep.subr.mxu0 0.0
        %950 = vmatpush1.msra.mxu0 %v891
        %951 = vmatprep.subr.mxu0 0.0
        %952 = vmatpush1.msra.mxu0 %v892
        %953 = vmatprep.subr.mxu0 0.0
        %954 = vmatpush1.msra.mxu0 %v893
        %955 = vmatprep.subr.mxu0 0.0
        %956 = vmatpush1.msra.mxu0 %v894
        %957 = vmatprep.subr.mxu0 0.0
        %958 = vmatpush1.msra.mxu0 %v895
        %959 = vmatprep.subr.mxu0 0.0
        %960 = vmatpush1.msra.mxu0 %v896
        %961 = vmatprep.subr.mxu0 0.0
        %962 = vmatpush1.msra.mxu0 %v897
        %963 = vmatprep.subr.mxu0 0.0
        %964 = vmatpush1.msra.mxu0 %v898
        %965 = vmatprep.subr.mxu0 0.0
        %966 = vmatpush1.msra.mxu0 %v899
        %967 = vmatprep.subr.mxu0 0.0
        %968 = vmatpush1.msra.mxu0 %v900
        %969 = vmatprep.subr.mxu0 0.0
        %970 = vmatpush1.msra.mxu0 %v901
        %971 = vmatprep.subr.mxu0 0.0
        %972 = vmatpush1.msra.mxu0 %v902
        %973 = vmatprep.subr.mxu0 0.0
        %974 = vmatpush1.msra.mxu0 %v903
        %975 = vmatprep.subr.mxu0 0.0
        %976 = vmatpush1.msra.mxu0 %v904
        %977 = vmatprep.subr.mxu0 0.0
        %978 = vmatpush1.msra.mxu0 %v905
        %979 = vmatprep.subr.mxu0 0.0
        %980 = vmatpush1.msra.mxu0 %v906
        %981 = vmatprep.mubr.f32.mxu0 %v870
        %982 = vmatmul.mubr.f32.gmra.mrb[0].mxu0 %v869
        %v983 = vpop.f32.mrb[0].mxu0
        %v984 = vadd.f32 0.0, %v983
        %v985 = vpop.f32.mrb[0].mxu0
        %986 = vmatprep.mubr.f32.mxu0 %v873
        %987 = vmatmul.mubr.f32.gmra.mrb[0].mxu0 %v872
        %v988 = vpop.f32.mrb[0].mxu0
        %v989 = vadd.f32 0.0, %v988
        %v990 = vpop.f32.mrb[0].mxu0
        %991 = vdwg.mxu0
        %992 = vmatprep.subr.mxu0 0.0
        %993 = vmatpush1.msra.mxu0 %v907
        %994 = vmatprep.subr.mxu0 0.0
        %995 = vmatpush1.msra.mxu0 %v908
        %996 = vmatprep.subr.mxu0 0.0
        %997 = vmatpush1.msra.mxu0 %v909
        %998 = vmatprep.subr.mxu0 0.0
        %999 = vmatpush1.msra.mxu0 %v910
        %1000 = vmatprep.subr.mxu0 0.0
        %1001 = vmatpush1.msra.mxu0 0.0
        %1002 = vmatprep.subr.mxu0 0.0
        %1003 = vmatpush1.msra.mxu0 0.0
        %1004 = vmatprep.subr.mxu0 0.0
        %1005 = vmatpush1.msra.mxu0 0.0
        %1006 = vmatprep.subr.mxu0 0.0
        %1007 = vmatpush1.msra.mxu0 0.0
        %1008 = vmatprep.subr.mxu0 0.0
        %1009 = vmatpush1.msra.mxu0 0.0
        %1010 = vmatprep.subr.mxu0 0.0
        %1011 = vmatpush1.msra.mxu0 0.0
        %1012 = vmatprep.subr.mxu0 0.0
        %1013 = vmatpush1.msra.mxu0 0.0
        %1014 = vmatprep.subr.mxu0 0.0
        %1015 = vmatpush1.msra.mxu0 0.0
        %1016 = vmatprep.subr.mxu0 0.0
        %1017 = vmatpush1.msra.mxu0 0.0
        %1018 = vmatprep.subr.mxu0 0.0
        %1019 = vmatpush1.msra.mxu0 0.0
        %1020 = vmatprep.subr.mxu0 0.0
        %1021 = vmatpush1.msra.mxu0 0.0
        %1022 = vmatprep.subr.mxu0 0.0
        %1023 = vmatpush1.msra.mxu0 0.0
        %1024 = vmatprep.subr.mxu0 0.0
        %1025 = vmatpush1.msra.mxu0 0.0
        %1026 = vmatprep.subr.mxu0 0.0
        %1027 = vmatpush1.msra.mxu0 0.0
        %1028 = vmatprep.subr.mxu0 0.0
        %1029 = vmatpush1.msra.mxu0 0.0
        %1030 = vmatprep.subr.mxu0 0.0
        %1031 = vmatpush1.msra.mxu0 0.0
        %1032 = vmatprep.subr.mxu0 0.0
        %1033 = vmatpush1.msra.mxu0 0.0
        %1034 = vmatprep.subr.mxu0 0.0
        %1035 = vmatpush1.msra.mxu0 0.0
        %1036 = vmatprep.subr.mxu0 0.0
        %1037 = vmatpush1.msra.mxu0 0.0
        %1038 = vmatprep.subr.mxu0 0.0
        %1039 = vmatpush1.msra.mxu0 0.0
        %1040 = vmatprep.subr.mxu0 0.0
        %1041 = vmatpush1.msra.mxu0 0.0
        %1042 = vmatprep.subr.mxu0 0.0
        %1043 = vmatpush1.msra.mxu0 0.0
        %1044 = vmatprep.subr.mxu0 0.0
        %1045 = vmatpush1.msra.mxu0 0.0
        %1046 = vmatprep.subr.mxu0 0.0
        %1047 = vmatpush1.msra.mxu0 0.0
        %1048 = vmatprep.subr.mxu0 0.0
        %1049 = vmatpush1.msra.mxu0 0.0
        %1050 = vmatprep.subr.mxu0 0.0
        %1051 = vmatpush1.msra.mxu0 0.0
        %1052 = vmatprep.subr.mxu0 0.0
        %1053 = vmatpush1.msra.mxu0 0.0
        %1054 = vmatprep.subr.mxu0 0.0
        %1055 = vmatpush1.msra.mxu0 0.0
        %1056 = vmatprep.mubr.f32.mxu0 0.0
        %1057 = vmatmul.mubr.f32.gmra.mrb[0].mxu0 %v912
        %v1058 = vpop.f32.mrb[0].mxu0
        %v1059 = vadd.f32 %v984, %v1058
        %v1060 = vpop.f32.mrb[0].mxu0
        %1061 = vmatprep.mubr.f32.mxu0 0.0
        %1062 = vmatmul.mubr.f32.gmra.mrb[0].mxu0 %v915
        %v1063 = vpop.f32.mrb[0].mxu0
        %v1064 = vadd.f32 %v989, %v1063
        %v1065 = vpop.f32.mrb[0].mxu0
        %1066 = vdwg.mxu0
        %vm1067 = vcmask 523264
        %v1068 = vsel %vm1067, %v1059, 0.0
        %1069 = vadd.xlane.f32.xlu0 %v1068
        %v1070 = vpop.xlane.xlu0 %1069
        %v1071 = vsel %vm1067, %v1064, 0.0
        %1072 = vadd.xlane.f32.xlu0 %v1071
        %v1073 = vpop.xlane.xlu0 %1072
        %v1074 = vrcp.pop 64.0
        %v1075 = vmul.f32 %v1070, %v1074
        %v1076 = vmul.f32 %v1073, %v1074
        %v1077 = vsub.f32 %v1059, %v1075
        %v1078 = vsub.f32 %v1064, %v1076
        %v1079 = vmul.f32 %v1077, %v1077
        %v1080 = vmul.f32 %v1078, %v1078
        %v1081 = vsel %vm1067, %v1079, 0.0
        %1082 = vadd.xlane.f32.xlu0 %v1081
        %v1083 = vpop.xlane.xlu0 %1082
        %v1084 = vsel %vm1067, %v1080, 0.0
        %1085 = vadd.xlane.f32.xlu0 %v1084
        %v1086 = vpop.xlane.xlu0 %1085
        %v1087 = vmul.f32 %v1083, %v1074
        %v1088 = vmul.f32 %v1086, %v1074
        %v1089 = vadd.f32 %v1087, 1e-05
        %v1090 = vadd.f32 %v1088, 1e-05
        %v1091 = vrsqrt.pop %v1089
        %v1092 = vrsqrt.pop %v1090
        %v1093 = vmul.f32 %v1077, %v1091
        %v1094 = vmul.f32 %v1078, %v1092
        %v1095 = vld [vmem:[%s2] sm:$0x1]
        %v1097 = vlaneseq
        %v1098 = vshrl.u32 %v1097, 7
        %v1099 = vsub.s32 0, %v1098
        %v1100 = vrot.slane %v1095, %v1099
        %v1102 = vmul.f32 %v1093, %v1100
        %v1103 = vmul.f32 %v1094, %v1100
        %v1104 = vld [vmem:[%s3] sm:$0x1]
        %v1106 = vlaneseq
        %v1107 = vshrl.u32 %v1106, 7
        %v1108 = vsub.s32 0, %v1107
        %v1109 = vrot.slane %v1104, %v1108
        %v1111 = vadd.f32 %v1102, %v1109
        %v1112 = vadd.f32 %v1103, %v1109
        %s1113 = sld [smem:[#allocation3]]
        %vm1114 = vcmp.ge.f32.partialorder %v1111, 0.0
        %vm1115 = vcmp.ge.f32.partialorder %v1112, 0.0
        %v1116 = vstv %s1113
        %v1117 = vmul.f32 %v1116, %v1111
        %v1118 = vmul.f32 %v1116, %v1112
        %v1119 = vsel %vm1114, %v1111, %v1117
        %v1120 = vsel %vm1115, %v1112, %v1118
        %v1121 = vmul.f32 %v1119, 0.5
        %v1122 = vmul.f32 %v1120, 0.5
        %v1123 = vmul.f32 %v1119, 0.70710677
        %v1124 = vmul.f32 %v1120, 0.70710677
        %v1125 = vand.u32 2147483647, %v1123
        %v1126 = vand.u32 2147483647, %v1124
        %v1127 = vmul.f32 %v1125, 0.3275911
        %v1128 = vmul.f32 %v1126, 0.3275911
        %v1129 = vadd.f32 %v1127, 1.0
        %v1130 = vadd.f32 %v1128, 1.0
        %v1131 = vrcp.pop %v1129
        %v1132 = vmul.f32 1.0, %v1131
        %v1133 = vrcp.pop %v1130
        %v1134 = vmul.f32 1.0, %v1133
        %v1135 = vmul.f32 %v1132, 1.0614054
        %v1136 = vmul.f32 %v1134, 1.0614054
        %v1137 = vadd.f32 %v1135, -1.4531521
        %v1138 = vadd.f32 %v1136, -1.4531521
        %v1139 = vmul.f32 %v1137, %v1132
        %v1140 = vmul.f32 %v1138, %v1134
        %v1141 = vadd.f32 %v1139, 1.4214138
        %v1142 = vadd.f32 %v1140, 1.4214138
        %v1143 = vmul.f32 %v1141, %v1132
        %v1144 = vmul.f32 %v1142, %v1134
        %v1145 = vadd.f32 %v1143, -0.28449672
        %v1146 = vadd.f32 %v1144, -0.28449672
        %v1147 = vmul.f32 %v1145, %v1132
        %v1148 = vmul.f32 %v1146, %v1134
        %v1149 = vadd.f32 %v1147, 0.2548296
        %v1150 = vadd.f32 %v1148, 0.2548296
        %v1151 = vmul.f32 %v1149, %v1132
        %v1152 = vmul.f32 %v1150, %v1134
        %v1153 = vsub.f32 0.0, %v1125
        %v1154 = vsub.f32 0.0, %v1126
        %v1155 = vmul.f32 %v1153, %v1125
        %v1156 = vmul.f32 %v1154, %v1126
        %v1157 = vmul.f32 %v1155, 1.442695
        %v1158 = vpow.pop %v1157
        %v1159 = vmul.f32 %v1156, 1.442695
        %v1160 = vpow.pop %v1159
        %v1161 = vmul.f32 %v1151, %v1158
        %v1162 = vmul.f32 %v1152, %v1160
        %v1163 = vsub.f32 1.0, %v1161
        %v1164 = vsub.f32 1.0, %v1162
        %vm1165 = vcmp.ge.f32.partialorder %v1123, 0.0
        %vm1166 = vcmp.ge.f32.partialorder %v1124, 0.0
        %v1167 = vsub.f32 0.0, %v1163
        %v1168 = vsub.f32 0.0, %v1164
        %v1169 = vsel %vm1165, %v1163, %v1167
        %v1170 = vsel %vm1166, %v1164, %v1168
        %v1171 = vadd.f32 %v1169, 1.0
        %v1172 = vadd.f32 %v1170, 1.0
        %v1173 = vmul.f32 %v1121, %v1171
        %v1174 = vmul.f32 %v1122, %v1172
        %1175 = vst.msk [vmem:[#allocation2] sm:$0xff] %vm1067, %v1173
        %1176 = vst.msk [vmem:[#allocation2 + $0x28] sm:$0xff] %vm1067, %v1174
        %vm1177 = vcmp.ge.f32.partialorder %v1119, -2.2
        %vm1178 = vcmp.ge.f32.partialorder %v1120, -2.2
        %vm1179 = vcmp.lt.f32.partialorder %v1119, -1.8
        %vm1180 = vcmp.lt.f32.partialorder %v1120, -1.8
        %vm1181 = vmand %vm1177, %vm1179
        %vm1182 = vmand %vm1178, %vm1180
        %v1183 = vsel %vm1181, 1, 0
        %v1184 = vsel %vm1182, 1, 0
        %v1185 = vcvt.s32.f32 %v1183
        %v1186 = vcvt.s32.f32 %v1184
        %vm1187 = vcmp.ge.f32.partialorder %v1119, -1.8
        %vm1188 = vcmp.ge.f32.partialorder %v1120, -1.8
        %vm1189 = vcmp.lt.f32.partialorder %v1119, -1.4
        %vm1190 = vcmp.lt.f32.partialorder %v1120, -1.4
        %vm1191 = vmand %vm1187, %vm1189
        %vm1192 = vmand %vm1188, %vm1190
        %v1193 = vsel %vm1191, 1, 0
        %v1194 = vsel %vm1192, 1, 0
        %v1195 = vcvt.s32.f32 %v1193
        %v1196 = vcvt.s32.f32 %v1194
        %vm1197 = vcmp.ge.f32.partialorder %v1119, -1.4
        %vm1198 = vcmp.ge.f32.partialorder %v1120, -1.4
        %vm1199 = vcmp.lt.f32.partialorder %v1119, -1.0
        %vm1200 = vcmp.lt.f32.partialorder %v1120, -1.0
        %vm1201 = vmand %vm1197, %vm1199
        %vm1202 = vmand %vm1198, %vm1200
        %v1203 = vsel %vm1201, 1, 0
        %v1204 = vsel %vm1202, 1, 0
        %v1205 = vcvt.s32.f32 %v1203
        %v1206 = vcvt.s32.f32 %v1204
        %vm1207 = vcmp.ge.f32.partialorder %v1119, -1.0
        %vm1208 = vcmp.ge.f32.partialorder %v1120, -1.0
        %vm1209 = vcmp.lt.f32.partialorder %v1119, -0.6
        %vm1210 = vcmp.lt.f32.partialorder %v1120, -0.6
        %vm1211 = vmand %vm1207, %vm1209
        %vm1212 = vmand %vm1208, %vm1210
        %v1213 = vsel %vm1211, 1, 0
        %v1214 = vsel %vm1212, 1, 0
        %v1215 = vcvt.s32.f32 %v1213
        %v1216 = vcvt.s32.f32 %v1214
        %v1217 = vsub.f32 %v1119, -2.2
        %v1218 = vsub.f32 %v1120, -2.2
        %v1219 = vmul.f32 %v1217, 2.4999995
        %v1220 = vmul.f32 %v1218, 2.4999995
        %v1221 = vmul.f32 %v1219, %v1185
        %v1222 = vmul.f32 %v1220, %v1186
        %v1223 = vsub.f32 -1.4, %v1119
        %v1224 = vsub.f32 -1.4, %v1120
        %v1225 = vmul.f32 %v1223, 2.5000002
        %v1226 = vmul.f32 %v1224, 2.5000002
        %v1227 = vmul.f32 %v1225, %v1195
        %v1228 = vmul.f32 %v1226, %v1196
        %v1229 = vadd.f32 %v1221, %v1227
        %v1230 = vadd.f32 %v1222, %v1228
        %v1231 = vsub.f32 %v1119, -1.8
        %v1232 = vsub.f32 %v1120, -1.8
        %v1233 = vmul.f32 %v1231, 2.5000002
        %v1234 = vmul.f32 %v1232, 2.5000002
        %v1235 = vmul.f32 %v1233, %v1195
        %v1236 = vmul.f32 %v1234, %v1196
        %v1237 = vsub.f32 -1.0, %v1119
        %v1238 = vsub.f32 -1.0, %v1120
        %v1239 = vmul.f32 %v1237, 2.5000002
        %v1240 = vmul.f32 %v1238, 2.5000002
        %v1241 = vmul.f32 %v1239, %v1205
        %v1242 = vmul.f32 %v1240, %v1206
        %v1243 = vadd.f32 %v1235, %v1241
        %v1244 = vadd.f32 %v1236, %v1242
        %v1245 = vsub.f32 %v1119, -1.4
        %v1246 = vsub.f32 %v1120, -1.4
        %v1247 = vmul.f32 %v1245, 2.5000002
        %v1248 = vmul.f32 %v1246, 2.5000002
        %v1249 = vmul.f32 %v1247, %v1205
        %v1250 = vmul.f32 %v1248, %v1206
        %v1251 = vsub.f32 -0.6, %v1119
        %v1252 = vsub.f32 -0.6, %v1120
        %v1253 = vmul.f32 %v1251, 2.5000002
        %v1254 = vmul.f32 %v1252, 2.5000002
        %v1255 = vmul.f32 %v1253, %v1215
        %v1256 = vmul.f32 %v1254, %v1216
        %v1257 = vadd.f32 %v1249, %v1255
        %v1258 = vadd.f32 %v1250, %v1256
        %v1259 = vmul.f32 %v1217, 1.2499999
        %v1260 = vmul.f32 %v1218, 1.2499999
        %v1261 = vmul.f32 %v1259, %v1229
        %v1262 = vmul.f32 %v1260, %v1230
        %v1263 = vmul.f32 %v1237, 1.2500001
        %v1264 = vmul.f32 %v1238, 1.2500001
        %v1265 = vmul.f32 %v1263, %v1243
        %v1266 = vmul.f32 %v1264, %v1244
        %v1267 = vadd.f32 %v1261, %v1265
        %v1268 = vadd.f32 %v1262, %v1266
        %v1269 = vmul.f32 %v1231, 1.2500001
        %v1270 = vmul.f32 %v1232, 1.2500001
        %v1271 = vmul.f32 %v1269, %v1243
        %v1272 = vmul.f32 %v1270, %v1244
        %v1273 = vmul.f32 %v1251, 1.2500001
        %v1274 = vmul.f32 %v1252, 1.2500001
        %v1275 = vmul.f32 %v1273, %v1257
        %v1276 = vmul.f32 %v1274, %v1258
        %v1277 = vadd.f32 %v1271, %v1275
        %v1278 = vadd.f32 %v1272, %v1276
        %v1279 = vmul.f32 %v1217, 0.8333333
        %v1280 = vmul.f32 %v1218, 0.8333333
        %v1281 = vmul.f32 %v1279, %v1267
        %v1282 = vmul.f32 %v1280, %v1268
        %v1283 = vmul.f32 %v1251, 0.8333334
        %v1284 = vmul.f32 %v1252, 0.8333334
        %v1285 = vmul.f32 %v1283, %v1277
        %v1286 = vmul.f32 %v1284, %v1278
        %v1287 = vadd.f32 %v1281, %v1285
        %v1288 = vadd.f32 %v1282, %v1286
        %1291 = vrot.lane.b32.xlu0 %v1287, 64
        %v1292 = vpop.permute.xlu0 %1291
        %1293 = vrot.lane.b32.xlu0 %v1288, 64
        %v1294 = vpop.permute.xlu0 %1293
        %vm1297 = vcmask 1048064
        %1298 = vst.msk [vmem:[#allocation2] sm:$0xff] %vm1297, %v1292
        %1299 = vst.msk [vmem:[#allocation2 + $0x28] sm:$0xff] %vm1297, %v1294
        %vm1300 = vcmp.ge.f32.partialorder %v1119, -0.6
        %vm1301 = vcmp.ge.f32.partialorder %v1120, -0.6
        %vm1302 = vcmp.lt.f32.partialorder %v1119, -0.2
        %vm1303 = vcmp.lt.f32.partialorder %v1120, -0.2
        %vm1304 = vmand %vm1300, %vm1302
        %vm1305 = vmand %vm1301, %vm1303
        %v1306 = vsel %vm1304, 1, 0
        %v1307 = vsel %vm1305, 1, 0
        %v1308 = vcvt.s32.f32 %v1306
        %v1309 = vcvt.s32.f32 %v1307
        %v1310 = vsub.f32 %v1119, -1.0
        %v1311 = vsub.f32 %v1120, -1.0
        %v1312 = vmul.f32 %v1310, 2.5000002
        %v1313 = vmul.f32 %v1311, 2.5000002
        %v1314 = vmul.f32 %v1312, %v1215
        %v1315 = vmul.f32 %v1313, %v1216
        %v1316 = vsub.f32 -0.2, %v1119
        %v1317 = vsub.f32 -0.2, %v1120
        %v1318 = vmul.f32 %v1316, 2.4999998
        %v1319 = vmul.f32 %v1317, 2.4999998
        %v1320 = vmul.f32 %v1318, %v1308
        %v1321 = vmul.f32 %v1319, %v1309
        %v1322 = vadd.f32 %v1314, %v1320
        %v1323 = vadd.f32 %v1315, %v1321
        %v1324 = vmul.f32 %v1245, 1.2500001
        %v1325 = vmul.f32 %v1246, 1.2500001
        %v1326 = vmul.f32 %v1324, %v1257
        %v1327 = vmul.f32 %v1325, %v1258
        %v1328 = vmul.f32 %v1316, 1.25
        %v1329 = vmul.f32 %v1317, 1.25
        %v1330 = vmul.f32 %v1328, %v1322
        %v1331 = vmul.f32 %v1329, %v1323
        %v1332 = vadd.f32 %v1326, %v1330
        %v1333 = vadd.f32 %v1327, %v1331
        %v1334 = vmul.f32 %v1231, 0.8333334
        %v1335 = vmul.f32 %v1232, 0.8333334
        %v1336 = vmul.f32 %v1334, %v1277
        %v1337 = vmul.f32 %v1335, %v1278
        %v1338 = vmul.f32 %v1316, 0.8333334
        %v1339 = vmul.f32 %v1317, 0.8333334
        %v1340 = vmul.f32 %v1338, %v1332
        %v1341 = vmul.f32 %v1339, %v1333
        %v1342 = vadd.f32 %v1336, %v1340
        %v1343 = vadd.f32 %v1337, %v1341
        %1344 = vst.msk [vmem:[#allocation2 + $0x8] sm:$0xff] %vm1067, %v1342
        %1345 = vst.msk [vmem:[#allocation2 + $0x30] sm:$0xff] %vm1067, %v1343
        %vm1346 = vcmp.ge.f32.partialorder %v1119, -0.2
        %vm1347 = vcmp.ge.f32.partialorder %v1120, -0.2
        %vm1348 = vcmp.lt.f32.partialorder %v1119, 0.2
        %vm1349 = vcmp.lt.f32.partialorder %v1120, 0.2
        %vm1350 = vmand %vm1346, %vm1348
        %vm1351 = vmand %vm1347, %vm1349
        %v1352 = vsel %vm1350, 1, 0
        %v1353 = vsel %vm1351, 1, 0
        %v1354 = vcvt.s32.f32 %v1352
        %v1355 = vcvt.s32.f32 %v1353
        %v1356 = vsub.f32 %v1119, -0.6
        %v1357 = vsub.f32 %v1120, -0.6
        %v1358 = vmul.f32 %v1356, 2.4999998
        %v1359 = vmul.f32 %v1357, 2.4999998
        %v1360 = vmul.f32 %v1358, %v1308
        %v1361 = vmul.f32 %v1359, %v1309
        %v1362 = vsub.f32 0.2, %v1119
        %v1363 = vsub.f32 0.2, %v1120
        %v1364 = vmul.f32 %v1362, 2.5
        %v1365 = vmul.f32 %v1363, 2.5
        %v1366 = vmul.f32 %v1364, %v1354
        %v1367 = vmul.f32 %v1365, %v1355
        %v1368 = vadd.f32 %v1360, %v1366
        %v1369 = vadd.f32 %v1361, %v1367
        %v1370 = vmul.f32 %v1310, 1.25
        %v1371 = vmul.f32 %v1311, 1.25
        %v1372 = vmul.f32 %v1370, %v1322
        %v1373 = vmul.f32 %v1371, %v1323
        %v1374 = vmul.f32 %v1362, 1.25
        %v1375 = vmul.f32 %v1363, 1.25
        %v1376 = vmul.f32 %v1374, %v1368
        %v1377 = vmul.f32 %v1375, %v1369
        %v1378 = vadd.f32 %v1372, %v1376
        %v1379 = vadd.f32 %v1373, %v1377
        %v1380 = vmul.f32 %v1245, 0.8333334
        %v1381 = vmul.f32 %v1246, 0.8333334
        %v1382 = vmul.f32 %v1380, %v1332
        %v1383 = vmul.f32 %v1381, %v1333
        %v1384 = vmul.f32 %v1362, 0.8333333
        %v1385 = vmul.f32 %v1363, 0.8333333
        %v1386 = vmul.f32 %v1384, %v1378
        %v1387 = vmul.f32 %v1385, %v1379
        %v1388 = vadd.f32 %v1382, %v1386
        %v1389 = vadd.f32 %v1383, %v1387
        %1392 = vrot.lane.b32.xlu0 %v1388, 64
        %v1393 = vpop.permute.xlu0 %1392
        %1394 = vrot.lane.b32.xlu0 %v1389, 64
        %v1395 = vpop.permute.xlu0 %1394
        %1398 = vst.msk [vmem:[#allocation2 + $0x8] sm:$0xff] %vm1297, %v1393
        %1399 = vst.msk [vmem:[#allocation2 + $0x30] sm:$0xff] %vm1297, %v1395
        %vm1400 = vcmp.ge.f32.partialorder %v1119, 0.2
        %vm1401 = vcmp.ge.f32.partialorder %v1120, 0.2
        %vm1402 = vcmp.lt.f32.partialorder %v1119, 0.6
        %vm1403 = vcmp.lt.f32.partialorder %v1120, 0.6
        %vm1404 = vmand %vm1400, %vm1402
        %vm1405 = vmand %vm1401, %vm1403
        %v1406 = vsel %vm1404, 1, 0
        %v1407 = vsel %vm1405, 1, 0
        %v1408 = vcvt.s32.f32 %v1406
        %v1409 = vcvt.s32.f32 %v1407
        %v1410 = vsub.f32 %v1119, -0.2
        %v1411 = vsub.f32 %v1120, -0.2
        %v1412 = vmul.f32 %v1410, 2.5
        %v1413 = vmul.f32 %v1411, 2.5
        %v1414 = vmul.f32 %v1412, %v1354
        %v1415 = vmul.f32 %v1413, %v1355
        %v1416 = vsub.f32 0.6, %v1119
        %v1417 = vsub.f32 0.6, %v1120
        %v1418 = vmul.f32 %v1416, 2.4999998
        %v1419 = vmul.f32 %v1417, 2.4999998
        %v1420 = vmul.f32 %v1418, %v1408
        %v1421 = vmul.f32 %v1419, %v1409
        %v1422 = vadd.f32 %v1414, %v1420
        %v1423 = vadd.f32 %v1415, %v1421
        %v1424 = vmul.f32 %v1356, 1.25
        %v1425 = vmul.f32 %v1357, 1.25
        %v1426 = vmul.f32 %v1424, %v1368
        %v1427 = vmul.f32 %v1425, %v1369
        %v1428 = vmul.f32 %v1416, 1.25
        %v1429 = vmul.f32 %v1417, 1.25
        %v1430 = vmul.f32 %v1428, %v1422
        %v1431 = vmul.f32 %v1429, %v1423
        %v1432 = vadd.f32 %v1426, %v1430
        %v1433 = vadd.f32 %v1427, %v1431
        %v1434 = vmul.f32 %v1310, 0.8333333
        %v1435 = vmul.f32 %v1311, 0.8333333
        %v1436 = vmul.f32 %v1434, %v1378
        %v1437 = vmul.f32 %v1435, %v1379
        %v1438 = vmul.f32 %v1416, 0.8333333
        %v1439 = vmul.f32 %v1417, 0.8333333
        %v1440 = vmul.f32 %v1438, %v1432
        %v1441 = vmul.f32 %v1439, %v1433
        %v1442 = vadd.f32 %v1436, %v1440
        %v1443 = vadd.f32 %v1437, %v1441
        %1444 = vst.msk [vmem:[#allocation2 + $0x10] sm:$0xff] %vm1067, %v1442
        %1445 = vst.msk [vmem:[#allocation2 + $0x38] sm:$0xff] %vm1067, %v1443
        %vm1446 = vcmp.ge.f32.partialorder %v1119, 0.6
        %vm1447 = vcmp.ge.f32.partialorder %v1120, 0.6
        %vm1448 = vcmp.lt.f32.partialorder %v1119, 1.0
        %vm1449 = vcmp.lt.f32.partialorder %v1120, 1.0
        %vm1450 = vmand %vm1446, %vm1448
        %vm1451 = vmand %vm1447, %vm1449
        %v1452 = vsel %vm1450, 1, 0
        %v1453 = vsel %vm1451, 1, 0
        %v1454 = vcvt.s32.f32 %v1452
        %v1455 = vcvt.s32.f32 %v1453
        %v1456 = vsub.f32 %v1119, 0.2
        %v1457 = vsub.f32 %v1120, 0.2
        %v1458 = vmul.f32 %v1456, 2.4999998
        %v1459 = vmul.f32 %v1457, 2.4999998
        %v1460 = vmul.f32 %v1458, %v1408
        %v1461 = vmul.f32 %v1459, %v1409
        %v1462 = vsub.f32 1.0, %v1119
        %v1463 = vsub.f32 1.0, %v1120
        %v1464 = vmul.f32 %v1462, 2.5000002
        %v1465 = vmul.f32 %v1463, 2.5000002
        %v1466 = vmul.f32 %v1464, %v1454
        %v1467 = vmul.f32 %v1465, %v1455
        %v1468 = vadd.f32 %v1460, %v1466
        %v1469 = vadd.f32 %v1461, %v1467
        %v1470 = vmul.f32 %v1410, 1.25
        %v1471 = vmul.f32 %v1411, 1.25
        %v1472 = vmul.f32 %v1470, %v1422
        %v1473 = vmul.f32 %v1471, %v1423
        %v1474 = vmul.f32 %v1462, 1.25
        %v1475 = vmul.f32 %v1463, 1.25
        %v1476 = vmul.f32 %v1474, %v1468
        %v1477 = vmul.f32 %v1475, %v1469
        %v1478 = vadd.f32 %v1472, %v1476
        %v1479 = vadd.f32 %v1473, %v1477
        %v1480 = vmul.f32 %v1356, 0.8333333
        %v1481 = vmul.f32 %v1357, 0.8333333
        %v1482 = vmul.f32 %v1480, %v1432
        %v1483 = vmul.f32 %v1481, %v1433
        %v1484 = vmul.f32 %v1462, 0.8333333
        %v1485 = vmul.f32 %v1463, 0.8333333
        %v1486 = vmul.f32 %v1484, %v1478
        %v1487 = vmul.f32 %v1485, %v1479
        %v1488 = vadd.f32 %v1482, %v1486
        %v1489 = vadd.f32 %v1483, %v1487
        %1492 = vrot.lane.b32.xlu0 %v1488, 64
        %v1493 = vpop.permute.xlu0 %1492
        %1494 = vrot.lane.b32.xlu0 %v1489, 64
        %v1495 = vpop.permute.xlu0 %1494
        %1498 = vst.msk [vmem:[#allocation2 + $0x10] sm:$0xff] %vm1297, %v1493
        %1499 = vst.msk [vmem:[#allocation2 + $0x38] sm:$0xff] %vm1297, %v1495
        %vm1500 = vcmp.ge.f32.partialorder %v1119, 1.0
        %vm1501 = vcmp.ge.f32.partialorder %v1120, 1.0
        %vm1502 = vcmp.lt.f32.partialorder %v1119, 1.4
        %vm1503 = vcmp.lt.f32.partialorder %v1120, 1.4
        %vm1504 = vmand %vm1500, %vm1502
        %vm1505 = vmand %vm1501, %vm1503
        %v1506 = vsel %vm1504, 1, 0
        %v1507 = vsel %vm1505, 1, 0
        %v1508 = vcvt.s32.f32 %v1506
        %v1509 = vcvt.s32.f32 %v1507
        %v1510 = vsub.f32 %v1119, 0.6
        %v1511 = vsub.f32 %v1120, 0.6
        %v1512 = vmul.f32 %v1510, 2.5000002
        %v1513 = vmul.f32 %v1511, 2.5000002
        %v1514 = vmul.f32 %v1512, %v1454
        %v1515 = vmul.f32 %v1513, %v1455
        %v1516 = vsub.f32 1.4, %v1119
        %v1517 = vsub.f32 1.4, %v1120
        %v1518 = vmul.f32 %v1516, 2.5000002
        %v1519 = vmul.f32 %v1517, 2.5000002
        %v1520 = vmul.f32 %v1518, %v1508
        %v1521 = vmul.f32 %v1519, %v1509
        %v1522 = vadd.f32 %v1514, %v1520
        %v1523 = vadd.f32 %v1515, %v1521
        %v1524 = vmul.f32 %v1456, 1.25
        %v1525 = vmul.f32 %v1457, 1.25
        %v1526 = vmul.f32 %v1524, %v1468
        %v1527 = vmul.f32 %v1525, %v1469
        %v1528 = vmul.f32 %v1516, 1.2500001
        %v1529 = vmul.f32 %v1517, 1.2500001
        %v1530 = vmul.f32 %v1528, %v1522
        %v1531 = vmul.f32 %v1529, %v1523
        %v1532 = vadd.f32 %v1526, %v1530
        %v1533 = vadd.f32 %v1527, %v1531
        %v1534 = vmul.f32 %v1410, 0.8333333
        %v1535 = vmul.f32 %v1411, 0.8333333
        %v1536 = vmul.f32 %v1534, %v1478
        %v1537 = vmul.f32 %v1535, %v1479
        %v1538 = vmul.f32 %v1516, 0.8333334
        %v1539 = vmul.f32 %v1517, 0.8333334
        %v1540 = vmul.f32 %v1538, %v1532
        %v1541 = vmul.f32 %v1539, %v1533
        %v1542 = vadd.f32 %v1536, %v1540
        %v1543 = vadd.f32 %v1537, %v1541
        %1544 = vst.msk [vmem:[#allocation2 + $0x18] sm:$0xff] %vm1067, %v1542
        %1545 = vst.msk [vmem:[#allocation2 + $0x40] sm:$0xff] %vm1067, %v1543
        %vm1546 = vcmp.ge.f32.partialorder %v1119, 1.4
        %vm1547 = vcmp.ge.f32.partialorder %v1120, 1.4
        %vm1548 = vcmp.lt.f32.partialorder %v1119, 1.8
        %vm1549 = vcmp.lt.f32.partialorder %v1120, 1.8
        %vm1550 = vmand %vm1546, %vm1548
        %vm1551 = vmand %vm1547, %vm1549
        %v1552 = vsel %vm1550, 1, 0
        %v1553 = vsel %vm1551, 1, 0
        %v1554 = vcvt.s32.f32 %v1552
        %v1555 = vcvt.s32.f32 %v1553
        %v1556 = vsub.f32 %v1119, 1.0
        %v1557 = vsub.f32 %v1120, 1.0
        %v1558 = vmul.f32 %v1556, 2.5000002
        %v1559 = vmul.f32 %v1557, 2.5000002
        %v1560 = vmul.f32 %v1558, %v1508
        %v1561 = vmul.f32 %v1559, %v1509
        %v1562 = vsub.f32 1.8, %v1119
        %v1563 = vsub.f32 1.8, %v1120
        %v1564 = vmul.f32 %v1562, 2.5000002
        %v1565 = vmul.f32 %v1563, 2.5000002
        %v1566 = vmul.f32 %v1564, %v1554
        %v1567 = vmul.f32 %v1565, %v1555
        %v1568 = vadd.f32 %v1560, %v1566
        %v1569 = vadd.f32 %v1561, %v1567
        %v1570 = vmul.f32 %v1510, 1.2500001
        %v1571 = vmul.f32 %v1511, 1.2500001
        %v1572 = vmul.f32 %v1570, %v1522
        %v1573 = vmul.f32 %v1571, %v1523
        %v1574 = vmul.f32 %v1562, 1.2500001
        %v1575 = vmul.f32 %v1563, 1.2500001
        %v1576 = vmul.f32 %v1574, %v1568
        %v1577 = vmul.f32 %v1575, %v1569
        %v1578 = vadd.f32 %v1572, %v1576
        %v1579 = vadd.f32 %v1573, %v1577
        %v1580 = vmul.f32 %v1456, 0.8333334
        %v1581 = vmul.f32 %v1457, 0.8333334
        %v1582 = vmul.f32 %v1580, %v1532
        %v1583 = vmul.f32 %v1581, %v1533
        %v1584 = vmul.f32 %v1562, 0.8333334
        %v1585 = vmul.f32 %v1563, 0.8333334
        %v1586 = vmul.f32 %v1584, %v1578
        %v1587 = vmul.f32 %v1585, %v1579
        %v1588 = vadd.f32 %v1582, %v1586
        %v1589 = vadd.f32 %v1583, %v1587
        %1592 = vrot.lane.b32.xlu0 %v1588, 64
        %v1593 = vpop.permute.xlu0 %1592
        %1594 = vrot.lane.b32.xlu0 %v1589, 64
        %v1595 = vpop.permute.xlu0 %1594
        %1598 = vst.msk [vmem:[#allocation2 + $0x18] sm:$0xff] %vm1297, %v1593
        %1599 = vst.msk [vmem:[#allocation2 + $0x40] sm:$0xff] %vm1297, %v1595
        %vm1600 = vcmp.ge.f32.partialorder %v1119, 1.8
        %vm1601 = vcmp.ge.f32.partialorder %v1120, 1.8
        %vm1602 = vcmp.lt.f32.partialorder %v1119, 2.2
        %vm1603 = vcmp.lt.f32.partialorder %v1120, 2.2
        %vm1604 = vmand %vm1600, %vm1602
        %vm1605 = vmand %vm1601, %vm1603
        %v1606 = vsel %vm1604, 1, 0
        %v1607 = vsel %vm1605, 1, 0
        %v1608 = vcvt.s32.f32 %v1606
        %v1609 = vcvt.s32.f32 %v1607
        %v1610 = vsub.f32 %v1119, 1.4
        %v1611 = vsub.f32 %v1120, 1.4
        %v1612 = vmul.f32 %v1610, 2.5000002
        %v1613 = vmul.f32 %v1611, 2.5000002
        %v1614 = vmul.f32 %v1612, %v1554
        %v1615 = vmul.f32 %v1613, %v1555
        %v1616 = vsub.f32 2.2, %v1119
        %v1617 = vsub.f32 2.2, %v1120
        %v1618 = vmul.f32 %v1616, 2.4999995
        %v1619 = vmul.f32 %v1617, 2.4999995
        %v1620 = vmul.f32 %v1618, %v1608
        %v1621 = vmul.f32 %v1619, %v1609
        %v1622 = vadd.f32 %v1614, %v1620
        %v1623 = vadd.f32 %v1615, %v1621
        %v1624 = vmul.f32 %v1556, 1.2500001
        %v1625 = vmul.f32 %v1557, 1.2500001
        %v1626 = vmul.f32 %v1624, %v1568
        %v1627 = vmul.f32 %v1625, %v1569
        %v1628 = vmul.f32 %v1616, 1.2499999
        %v1629 = vmul.f32 %v1617, 1.2499999
        %v1630 = vmul.f32 %v1628, %v1622
        %v1631 = vmul.f32 %v1629, %v1623
        %v1632 = vadd.f32 %v1626, %v1630
        %v1633 = vadd.f32 %v1627, %v1631
        %v1634 = vmul.f32 %v1510, 0.8333334
        %v1635 = vmul.f32 %v1511, 0.8333334
        %v1636 = vmul.f32 %v1634, %v1578
        %v1637 = vmul.f32 %v1635, %v1579
        %v1638 = vmul.f32 %v1616, 0.8333333
        %v1639 = vmul.f32 %v1617, 0.8333333
        %v1640 = vmul.f32 %v1638, %v1632
        %v1641 = vmul.f32 %v1639, %v1633
        %v1642 = vadd.f32 %v1636, %v1640
        %v1643 = vadd.f32 %v1637, %v1641
        %1644 = vst.msk [vmem:[#allocation2 + $0x20] sm:$0xff] %vm1067, %v1642
        %1645 = vst.msk [vmem:[#allocation2 + $0x48] sm:$0xff] %vm1067, %v1643
        %v1646 = vld [vmem:[#allocation2] sm:$0xff]
        %v1647 = vld [vmem:[#allocation2 + $0x8] sm:$0xff]
        %v1648 = vld [vmem:[#allocation2 + $0x10] sm:$0xff]
        %v1649 = vld [vmem:[#allocation2 + $0x18] sm:$0xff]
        %v1650 = vld [vmem:[#allocation2 + $0x20] sm:$0xff]
        %v1651 = vld [vmem:[#allocation2 + $0x28] sm:$0xff]
        %v1652 = vld [vmem:[#allocation2 + $0x30] sm:$0xff]
        %v1653 = vld [vmem:[#allocation2 + $0x38] sm:$0xff]
        %v1654 = vld [vmem:[#allocation2 + $0x40] sm:$0xff]
        %v1655 = vld [vmem:[#allocation2 + $0x48] sm:$0xff]
        %v1656 = vld [vmem:[%s4] sm:$0xff]
        %v1657 = vld [vmem:[%s4 + $0x8] sm:$0xff]
        %v1658 = vld [vmem:[%s4 + $0x10] sm:$0xff]
        %v1659 = vld [vmem:[%s4 + $0x18] sm:$0xff]
        %v1660 = vld [vmem:[%s4 + $0x20] sm:$0xff]
        %v1661 = vld [vmem:[%s4 + $0x28] sm:$0xff]
        %v1662 = vld [vmem:[%s4 + $0x30] sm:$0xff]
        %v1663 = vld [vmem:[%s4 + $0x38] sm:$0xff]
        %v1664 = vld [vmem:[%s4 + $0x40] sm:$0xff]
        %v1665 = vld [vmem:[%s4 + $0x48] sm:$0xff]
        %v1666 = vld [vmem:[%s4 + $0x50] sm:$0xff]
        %v1667 = vld [vmem:[%s4 + $0x58] sm:$0xff]
        %v1668 = vld [vmem:[%s4 + $0x60] sm:$0xff]
        %v1669 = vld [vmem:[%s4 + $0x68] sm:$0xff]
        %v1670 = vld [vmem:[%s4 + $0x70] sm:$0xff]
        %v1671 = vld [vmem:[%s4 + $0x78] sm:$0xff]
        %v1672 = vld [vmem:[%s4 + $0x80] sm:$0xff]
        %v1673 = vld [vmem:[%s4 + $0x88] sm:$0xff]
        %v1674 = vld [vmem:[%s4 + $0x90] sm:$0xff]
        %v1675 = vld [vmem:[%s4 + $0x98] sm:$0xff]
        %v1676 = vld [vmem:[%s4 + $0xa0] sm:$0xff]
        %v1677 = vld [vmem:[%s4 + $0xa8] sm:$0xff]
        %v1678 = vld [vmem:[%s4 + $0xb0] sm:$0xff]
        %v1679 = vld [vmem:[%s4 + $0xb8] sm:$0xff]
        %v1680 = vld [vmem:[%s4 + $0xc0] sm:$0xff]
        %v1681 = vld [vmem:[%s4 + $0xc8] sm:$0xff]
        %v1682 = vld [vmem:[%s4 + $0xd0] sm:$0xff]
        %v1683 = vld [vmem:[%s4 + $0xd8] sm:$0xff]
        %v1684 = vld [vmem:[%s4 + $0xe0] sm:$0xff]
        %v1685 = vld [vmem:[%s4 + $0xe8] sm:$0xff]
        %v1686 = vld [vmem:[%s4 + $0xf0] sm:$0xff]
        %v1687 = vld [vmem:[%s4 + $0xf8] sm:$0xff]
        %v1688 = vld [vmem:[%s4 + $0x100] sm:$0xff]
        %v1689 = vld [vmem:[%s4 + $0x108] sm:$0xff]
        %v1690 = vld [vmem:[%s4 + $0x110] sm:$0xff]
        %v1691 = vld [vmem:[%s4 + $0x118] sm:$0xff]
        %v1692 = vld [vmem:[%s4 + $0x120] sm:$0xff]
        %v1693 = vld [vmem:[%s4 + $0x128] sm:$0xff]
        %v1694 = vld [vmem:[%s4 + $0x130] sm:$0xff]
        %v1695 = vld [vmem:[%s4 + $0x138] sm:$0xff]
        %v1696 = vld [vmem:[%s4 + $0x140] sm:$0xff]
        %v1697 = vld [vmem:[%s4 + $0x148] sm:$0xff]
        %v1698 = vld [vmem:[%s4 + $0x150] sm:$0xff]
        %v1699 = vld [vmem:[%s4 + $0x158] sm:$0xff]
        %v1700 = vld [vmem:[%s4 + $0x160] sm:$0xff]
        %v1701 = vld [vmem:[%s4 + $0x168] sm:$0xff]
        %v1702 = vld [vmem:[%s4 + $0x170] sm:$0xff]
        %v1703 = vld [vmem:[%s4 + $0x178] sm:$0xff]
        %v1704 = vld [vmem:[%s4 + $0x180] sm:$0xff]
        %v1705 = vld [vmem:[%s4 + $0x188] sm:$0xff]
        %v1706 = vld [vmem:[%s4 + $0x190] sm:$0xff]
        %v1707 = vld [vmem:[%s4 + $0x198] sm:$0xff]
        %v1708 = vld [vmem:[%s4 + $0x1a0] sm:$0xff]
        %v1709 = vld [vmem:[%s4 + $0x1a8] sm:$0xff]
        %v1710 = vld [vmem:[%s4 + $0x1b0] sm:$0xff]
        %v1711 = vld [vmem:[%s4 + $0x1b8] sm:$0xff]
        %v1712 = vld [vmem:[%s4 + $0x1c0] sm:$0xff]
        %v1713 = vld [vmem:[%s4 + $0x1c8] sm:$0xff]
        %v1714 = vld [vmem:[%s4 + $0x1d0] sm:$0xff]
        %v1715 = vld [vmem:[%s4 + $0x1d8] sm:$0xff]
        %v1716 = vld [vmem:[%s4 + $0x1e0] sm:$0xff]
        %v1717 = vld [vmem:[%s4 + $0x1e8] sm:$0xff]
        %v1718 = vld [vmem:[%s4 + $0x1f0] sm:$0xff]
        %v1719 = vld [vmem:[%s4 + $0x1f8] sm:$0xff]
        %v1720 = vld [vmem:[%s4 + $0x200] sm:$0xff]
        %v1721 = vld [vmem:[%s4 + $0x208] sm:$0xff]
        %v1722 = vld [vmem:[%s4 + $0x210] sm:$0xff]
        %v1723 = vld [vmem:[%s4 + $0x218] sm:$0xff]
        %v1724 = vld [vmem:[%s4 + $0x220] sm:$0xff]
        %v1725 = vld [vmem:[%s4 + $0x228] sm:$0xff]
        %v1726 = vld [vmem:[%s4 + $0x230] sm:$0xff]
        %v1727 = vld [vmem:[%s4 + $0x238] sm:$0xff]
        %v1729 = vsel %vm1067, %v1650, 0
        %v1732 = vsel %vm1067, %v1655, 0
        %1734 = vmatprep.subr.mxu0 0.0
        %1735 = vmatpush1.msra.mxu0 %v1656
        %1736 = vmatprep.subr.mxu0 0.0
        %1737 = vmatpush1.msra.mxu0 %v1657
        %1738 = vmatprep.subr.mxu0 0.0
        %1739 = vmatpush1.msra.mxu0 %v1658
        %1740 = vmatprep.subr.mxu0 0.0
        %1741 = vmatpush1.msra.mxu0 %v1659
        %1742 = vmatprep.subr.mxu0 0.0
        %1743 = vmatpush1.msra.mxu0 %v1660
        %1744 = vmatprep.subr.mxu0 0.0
        %1745 = vmatpush1.msra.mxu0 %v1661
        %1746 = vmatprep.subr.mxu0 0.0
        %1747 = vmatpush1.msra.mxu0 %v1662
        %1748 = vmatprep.subr.mxu0 0.0
        %1749 = vmatpush1.msra.mxu0 %v1663
        %1750 = vmatprep.subr.mxu0 0.0
        %1751 = vmatpush1.msra.mxu0 %v1664
        %1752 = vmatprep.subr.mxu0 0.0
        %1753 = vmatpush1.msra.mxu0 %v1665
        %1754 = vmatprep.subr.mxu0 0.0
        %1755 = vmatpush1.msra.mxu0 %v1666
        %1756 = vmatprep.subr.mxu0 0.0
        %1757 = vmatpush1.msra.mxu0 %v1667
        %1758 = vmatprep.subr.mxu0 0.0
        %1759 = vmatpush1.msra.mxu0 %v1668
        %1760 = vmatprep.subr.mxu0 0.0
        %1761 = vmatpush1.msra.mxu0 %v1669
        %1762 = vmatprep.subr.mxu0 0.0
        %1763 = vmatpush1.msra.mxu0 %v1670
        %1764 = vmatprep.subr.mxu0 0.0
        %1765 = vmatpush1.msra.mxu0 %v1671
        %1766 = vmatprep.subr.mxu0 0.0
        %1767 = vmatpush1.msra.mxu0 %v1672
        %1768 = vmatprep.subr.mxu0 0.0
        %1769 = vmatpush1.msra.mxu0 %v1673
        %1770 = vmatprep.subr.mxu0 0.0
        %1771 = vmatpush1.msra.mxu0 %v1674
        %1772 = vmatprep.subr.mxu0 0.0
        %1773 = vmatpush1.msra.mxu0 %v1675
        %1774 = vmatprep.subr.mxu0 0.0
        %1775 = vmatpush1.msra.mxu0 %v1676
        %1776 = vmatprep.subr.mxu0 0.0
        %1777 = vmatpush1.msra.mxu0 %v1677
        %1778 = vmatprep.subr.mxu0 0.0
        %1779 = vmatpush1.msra.mxu0 %v1678
        %1780 = vmatprep.subr.mxu0 0.0
        %1781 = vmatpush1.msra.mxu0 %v1679
        %1782 = vmatprep.subr.mxu0 0.0
        %1783 = vmatpush1.msra.mxu0 %v1680
        %1784 = vmatprep.subr.mxu0 0.0
        %1785 = vmatpush1.msra.mxu0 %v1681
        %1786 = vmatprep.subr.mxu0 0.0
        %1787 = vmatpush1.msra.mxu0 %v1682
        %1788 = vmatprep.subr.mxu0 0.0
        %1789 = vmatpush1.msra.mxu0 %v1683
        %1790 = vmatprep.subr.mxu0 0.0
        %1791 = vmatpush1.msra.mxu0 %v1684
        %1792 = vmatprep.subr.mxu0 0.0
        %1793 = vmatpush1.msra.mxu0 %v1685
        %1794 = vmatprep.subr.mxu0 0.0
        %1795 = vmatpush1.msra.mxu0 %v1686
        %1796 = vmatprep.subr.mxu0 0.0
        %1797 = vmatpush1.msra.mxu0 %v1687
        %1798 = vmatprep.mubr.f32.mxu0 %v1647
        %1799 = vmatmul.mubr.f32.gmra.mrb[0].mxu0 %v1646
        %v1800 = vpop.f32.mrb[0].mxu0
        %v1801 = vadd.f32 0.0, %v1800
        %v1802 = vpop.f32.mrb[0].mxu0
        %1803 = vmatprep.mubr.f32.mxu0 %v1652
        %1804 = vmatmul.mubr.f32.gmra.mrb[0].mxu0 %v1651
        %v1805 = vpop.f32.mrb[0].mxu0
        %v1806 = vadd.f32 0.0, %v1805
        %v1807 = vpop.f32.mrb[0].mxu0
        %1808 = vdwg.mxu0
        %1809 = vmatprep.subr.mxu0 0.0
        %1810 = vmatpush1.msra.mxu0 %v1688
        %1811 = vmatprep.subr.mxu0 0.0
        %1812 = vmatpush1.msra.mxu0 %v1689
        %1813 = vmatprep.subr.mxu0 0.0
        %1814 = vmatpush1.msra.mxu0 %v1690
        %1815 = vmatprep.subr.mxu0 0.0
        %1816 = vmatpush1.msra.mxu0 %v1691
        %1817 = vmatprep.subr.mxu0 0.0
        %1818 = vmatpush1.msra.mxu0 %v1692
        %1819 = vmatprep.subr.mxu0 0.0
        %1820 = vmatpush1.msra.mxu0 %v1693
        %1821 = vmatprep.subr.mxu0 0.0
        %1822 = vmatpush1.msra.mxu0 %v1694
        %1823 = vmatprep.subr.mxu0 0.0
        %1824 = vmatpush1.msra.mxu0 %v1695
        %1825 = vmatprep.subr.mxu0 0.0
        %1826 = vmatpush1.msra.mxu0 %v1696
        %1827 = vmatprep.subr.mxu0 0.0
        %1828 = vmatpush1.msra.mxu0 %v1697
        %1829 = vmatprep.subr.mxu0 0.0
        %1830 = vmatpush1.msra.mxu0 %v1698
        %1831 = vmatprep.subr.mxu0 0.0
        %1832 = vmatpush1.msra.mxu0 %v1699
        %1833 = vmatprep.subr.mxu0 0.0
        %1834 = vmatpush1.msra.mxu0 %v1700
        %1835 = vmatprep.subr.mxu0 0.0
        %1836 = vmatpush1.msra.mxu0 %v1701
        %1837 = vmatprep.subr.mxu0 0.0
        %1838 = vmatpush1.msra.mxu0 %v1702
        %1839 = vmatprep.subr.mxu0 0.0
        %1840 = vmatpush1.msra.mxu0 %v1703
        %1841 = vmatprep.subr.mxu0 0.0
        %1842 = vmatpush1.msra.mxu0 %v1704
        %1843 = vmatprep.subr.mxu0 0.0
        %1844 = vmatpush1.msra.mxu0 %v1705
        %1845 = vmatprep.subr.mxu0 0.0
        %1846 = vmatpush1.msra.mxu0 %v1706
        %1847 = vmatprep.subr.mxu0 0.0
        %1848 = vmatpush1.msra.mxu0 %v1707
        %1849 = vmatprep.subr.mxu0 0.0
        %1850 = vmatpush1.msra.mxu0 %v1708
        %1851 = vmatprep.subr.mxu0 0.0
        %1852 = vmatpush1.msra.mxu0 %v1709
        %1853 = vmatprep.subr.mxu0 0.0
        %1854 = vmatpush1.msra.mxu0 %v1710
        %1855 = vmatprep.subr.mxu0 0.0
        %1856 = vmatpush1.msra.mxu0 %v1711
        %1857 = vmatprep.subr.mxu0 0.0
        %1858 = vmatpush1.msra.mxu0 %v1712
        %1859 = vmatprep.subr.mxu0 0.0
        %1860 = vmatpush1.msra.mxu0 %v1713
        %1861 = vmatprep.subr.mxu0 0.0
        %1862 = vmatpush1.msra.mxu0 %v1714
        %1863 = vmatprep.subr.mxu0 0.0
        %1864 = vmatpush1.msra.mxu0 %v1715
        %1865 = vmatprep.subr.mxu0 0.0
        %1866 = vmatpush1.msra.mxu0 %v1716
        %1867 = vmatprep.subr.mxu0 0.0
        %1868 = vmatpush1.msra.mxu0 %v1717
        %1869 = vmatprep.subr.mxu0 0.0
        %1870 = vmatpush1.msra.mxu0 %v1718
        %1871 = vmatprep.subr.mxu0 0.0
        %1872 = vmatpush1.msra.mxu0 %v1719
        %1873 = vmatprep.mubr.f32.mxu0 %v1649
        %1874 = vmatmul.mubr.f32.gmra.mrb[0].mxu0 %v1648
        %v1875 = vpop.f32.mrb[0].mxu0
        %v1876 = vadd.f32 %v1801, %v1875
        %v1877 = vpop.f32.mrb[0].mxu0
        %1878 = vmatprep.mubr.f32.mxu0 %v1654
        %1879 = vmatmul.mubr.f32.gmra.mrb[0].mxu0 %v1653
        %v1880 = vpop.f32.mrb[0].mxu0
        %v1881 = vadd.f32 %v1806, %v1880
        %v1882 = vpop.f32.mrb[0].mxu0
        %1883 = vdwg.mxu0
        %1884 = vmatprep.subr.mxu0 0.0
        %1885 = vmatpush1.msra.mxu0 %v1720
        %1886 = vmatprep.subr.mxu0 0.0
        %1887 = vmatpush1.msra.mxu0 %v1721
        %1888 = vmatprep.subr.mxu0 0.0
        %1889 = vmatpush1.msra.mxu0 %v1722
        %1890 = vmatprep.subr.mxu0 0.0
        %1891 = vmatpush1.msra.mxu0 %v1723
        %1892 = vmatprep.subr.mxu0 0.0
        %1893 = vmatpush1.msra.mxu0 %v1724
        %1894 = vmatprep.subr.mxu0 0.0
        %1895 = vmatpush1.msra.mxu0 %v1725
        %1896 = vmatprep.subr.mxu0 0.0
        %1897 = vmatpush1.msra.mxu0 %v1726
        %1898 = vmatprep.subr.mxu0 0.0
        %1899 = vmatpush1.msra.mxu0 %v1727
        %1900 = vmatprep.subr.mxu0 0.0
        %1901 = vmatpush1.msra.mxu0 0.0
        %1902 = vmatprep.subr.mxu0 0.0
        %1903 = vmatpush1.msra.mxu0 0.0
        %1904 = vmatprep.subr.mxu0 0.0
        %1905 = vmatpush1.msra.mxu0 0.0
        %1906 = vmatprep.subr.mxu0 0.0
        %1907 = vmatpush1.msra.mxu0 0.0
        %1908 = vmatprep.subr.mxu0 0.0
        %1909 = vmatpush1.msra.mxu0 0.0
        %1910 = vmatprep.subr.mxu0 0.0
        %1911 = vmatpush1.msra.mxu0 0.0
        %1912 = vmatprep.subr.mxu0 0.0
        %1913 = vmatpush1.msra.mxu0 0.0
        %1914 = vmatprep.subr.mxu0 0.0
        %1915 = vmatpush1.msra.mxu0 0.0
        %1916 = vmatprep.subr.mxu0 0.0
        %1917 = vmatpush1.msra.mxu0 0.0
        %1918 = vmatprep.subr.mxu0 0.0
        %1919 = vmatpush1.msra.mxu0 0.0
        %1920 = vmatprep.subr.mxu0 0.0
        %1921 = vmatpush1.msra.mxu0 0.0
        %1922 = vmatprep.subr.mxu0 0.0
        %1923 = vmatpush1.msra.mxu0 0.0
        %1924 = vmatprep.subr.mxu0 0.0
        %1925 = vmatpush1.msra.mxu0 0.0
        %1926 = vmatprep.subr.mxu0 0.0
        %1927 = vmatpush1.msra.mxu0 0.0
        %1928 = vmatprep.subr.mxu0 0.0
        %1929 = vmatpush1.msra.mxu0 0.0
        %1930 = vmatprep.subr.mxu0 0.0
        %1931 = vmatpush1.msra.mxu0 0.0
        %1932 = vmatprep.subr.mxu0 0.0
        %1933 = vmatpush1.msra.mxu0 0.0
        %1934 = vmatprep.subr.mxu0 0.0
        %1935 = vmatpush1.msra.mxu0 0.0
        %1936 = vmatprep.subr.mxu0 0.0
        %1937 = vmatpush1.msra.mxu0 0.0
        %1938 = vmatprep.subr.mxu0 0.0
        %1939 = vmatpush1.msra.mxu0 0.0
        %1940 = vmatprep.subr.mxu0 0.0
        %1941 = vmatpush1.msra.mxu0 0.0
        %1942 = vmatprep.subr.mxu0 0.0
        %1943 = vmatpush1.msra.mxu0 0.0
        %1944 = vmatprep.subr.mxu0 0.0
        %1945 = vmatpush1.msra.mxu0 0.0
        %1946 = vmatprep.subr.mxu0 0.0
        %1947 = vmatpush1.msra.mxu0 0.0
        %1948 = vmatprep.mubr.f32.mxu0 0.0
        %1949 = vmatmul.mubr.f32.gmra.mrb[0].mxu0 %v1729
        %v1950 = vpop.f32.mrb[0].mxu0
        %v1951 = vadd.f32 %v1876, %v1950
        %v1952 = vpop.f32.mrb[0].mxu0
        %1953 = vmatprep.mubr.f32.mxu0 0.0
        %1954 = vmatmul.mubr.f32.gmra.mrb[0].mxu0 %v1732
        %v1955 = vpop.f32.mrb[0].mxu0
        %v1956 = vadd.f32 %v1881, %v1955
        %v1957 = vpop.f32.mrb[0].mxu0
        %1958 = vdwg.mxu0
        %vm1959 = vcmask 130048
        %v1960 = vsel %vm1959, %v1951, 0.0
        %1961 = vadd.xlane.f32.xlu0 %v1960
        %v1962 = vpop.xlane.xlu0 %1961
        %v1963 = vsel %vm1959, %v1956, 0.0
        %1964 = vadd.xlane.f32.xlu0 %v1963
        %v1965 = vpop.xlane.xlu0 %1964
        %v1966 = vrcp.pop 16.0
        %v1967 = vmul.f32 %v1962, %v1966
        %v1968 = vmul.f32 %v1965, %v1966
        %v1969 = vsub.f32 %v1951, %v1967
        %v1970 = vsub.f32 %v1956, %v1968
        %v1971 = vmul.f32 %v1969, %v1969
        %v1972 = vmul.f32 %v1970, %v1970
        %v1973 = vsel %vm1959, %v1971, 0.0
        %1974 = vadd.xlane.f32.xlu0 %v1973
        %v1975 = vpop.xlane.xlu0 %1974
        %v1976 = vsel %vm1959, %v1972, 0.0
        %1977 = vadd.xlane.f32.xlu0 %v1976
        %v1978 = vpop.xlane.xlu0 %1977
        %v1979 = vmul.f32 %v1975, %v1966
        %v1980 = vmul.f32 %v1978, %v1966
        %v1981 = vadd.f32 %v1979, 1e-05
        %v1982 = vadd.f32 %v1980, 1e-05
        %v1983 = vrsqrt.pop %v1981
        %v1984 = vrsqrt.pop %v1982
        %v1985 = vmul.f32 %v1969, %v1983
        %v1986 = vmul.f32 %v1970, %v1984
        %v1987 = vld [vmem:[%s5] sm:$0x1]
        %v1989 = vlaneseq
        %v1990 = vshrl.u32 %v1989, 7
        %v1991 = vsub.s32 0, %v1990
        %v1992 = vrot.slane %v1987, %v1991
        %v1994 = vmul.f32 %v1985, %v1992
        %v1995 = vmul.f32 %v1986, %v1992
        %v1996 = vld [vmem:[%s6] sm:$0x1]
        %v1998 = vlaneseq
        %v1999 = vshrl.u32 %v1998, 7
        %v2000 = vsub.s32 0, %v1999
        %v2001 = vrot.slane %v1996, %v2000
        %v2003 = vadd.f32 %v1994, %v2001
        %v2004 = vadd.f32 %v1995, %v2001
        %s2005 = sld [smem:[#allocation3 + $0x1]]
        %vm2006 = vcmp.ge.f32.partialorder %v2003, 0.0
        %vm2007 = vcmp.ge.f32.partialorder %v2004, 0.0
        %v2008 = vstv %s2005
        %v2009 = vmul.f32 %v2008, %v2003
        %v2010 = vmul.f32 %v2008, %v2004
        %v2011 = vsel %vm2006, %v2003, %v2009
        %v2012 = vsel %vm2007, %v2004, %v2010
        %2013 = vst.msk [vmem:[%s321] sm:$0xff] %vm1959, %v2011
        %2014 = vst.msk [vmem:[%s321 + $0x8] sm:$0xff] %vm1959, %v2012
        %s2015 = smul.u32 2, %s20
        %p2016 = scmp.lt.s32.totalorder %s2015, 7
        %s2017 = scalar_select %p2016, %s2015, 7
        %s2018 = smul.addr %s2017, 8
        %s2019 = scalar_lea.vmem %s8, %s2018
        // Predicated region
        $region57: #{tpu_custom_call.1} parent=51 // pred_check
          %p2020 = pneg %p211
        $region58: #{tpu_custom_call.1} parent=51 // pred_check_branch
          %2022 = sbr.rel (%p2020) target = $region60
        $region59: #{tpu_custom_call.1} parent=51 // pred_region
          %s2023 = smul.u32 2, %s20
        $region60: #{tpu_custom_call.1} parent=51 // pred_fallthru
          _
      $region52: #{tpu_custom_call.1} parent=5 // pred_fallthru
        _
      %p2024 = scmp.le.s32.totalorder 2, %s15
      // Predicated region
      $region61: #{tpu_custom_call.1} parent=5 // pred_check
        %p2025 = pneg %p2024
      $region62: #{tpu_custom_call.1} parent=5 // pred_check_branch
        %2027 = sbr.rel (%p2025) target = $region64
      $region63: #{tpu_custom_call.1} parent=5 // pred_region
        %s2028 = ssub.s32 %s15, 2
        // Predicated region
        $region65: #{tpu_custom_call.1} parent=63 // pred_check
          %p2029 = pneg %p217
        $region66: #{tpu_custom_call.1} parent=63 // pred_check_branch
          %2031 = sbr.rel (%p2029) target = $region68
        $region67: #{tpu_custom_call.1} parent=63 // pred_region
          %s2032 = smul.u32 2, %s21
          %p2033 = scmp.lt.s32.totalorder %s2032, 7
          %s2034 = scalar_select %p2033, %s2032, 7
          %s2035 = smul.addr %s2034, 8
          %s2036 = scalar_lea.vmem %s8, %s2035
        $region68: #{tpu_custom_call.1} parent=63 // pred_fallthru
          _
      $region64: #{tpu_custom_call.1} parent=5 // pred_fallthru
        _
    $region6: #{tpu_custom_call.1} parent=1 // loop_footer
      %s19 = sadd.s32 1, %s15
    $region7: #{tpu_custom_call.1} parent=1 // loop_footer_branch
      %14 = sbr.rel target = $region3
    $region8: #{tpu_custom_call.1} parent=1 // loop_exit
      _
    %2037 = vsyncpa [#allocation4], 1
    %s2038 = scalar_lea.sflag [#allocation4], 1
    %2039 = vsyncpa %s2038, 1

</llo_original>
